<compile_context>
chip_gen: v7x
topology: tpu7x:2x2x1
jax: 0.10.0
libtpu: 0.0.40
codegen_flags: <defaults>
</compile_context>

<pallas_src>
import jax
import jax.numpy as jnp
from jax import lax
from jax.experimental import pallas as pl
from jax.experimental.pallas import tpu as pltpu

# ----- model config (small, consistent with the module) ---------------------
D_MODEL = 32
N_HEADS = 4
HEAD_DIM = D_MODEL // N_HEADS
D_FFN = D_MODEL          # module default: d_ffn = d_model
BATCH = 2
S_DEC = 8                # decoder sequence length
S_ENC = 16               # encoder sequence length
LN_EPS = 1e-5
NEG_INF = -1e30


# ----------------------------- Pallas kernel --------------------------------
def _make_kernel(D, H, HD):
    """Decoder-block kernel: one program over the whole (batch-folded) block."""

    def kernel(x_ref, enc_ref, mask1_ref, mask2_ref,
               wqkv1_ref, bqkv1_ref, wo1_ref, bo1_ref, ln1_ref,
               wq2_ref, bq2_ref, wkv2_ref, bkv2_ref, wo2_ref, bo2_ref, ln2_ref,
               wf1_ref, bf1_ref, wf2_ref, bf2_ref,
               out_ref):

        x = x_ref[...]        # [B*S,  D]
        enc = enc_ref[...]    # [B*Se, D]

        def add_norm(sub, res, ln_ref):
            gamma, beta = ln_ref[0], ln_ref[1]
            y = sub + res
            # single-pass variance: the two lane reductions are independent.
            mu = jnp.mean(y, axis=-1, keepdims=True)
            ms = jnp.mean(y * y, axis=-1, keepdims=True)
            var = ms - mu * mu
            return (y - mu) * lax.rsqrt(var + LN_EPS) * gamma + beta

        def head_stack(mat, off):
            # Move the H head blocks from the lane axis to the sublane axis,
            # head-major: [rows, H*HD] lanes -> [H*rows, HD].
            return jnp.concatenate(
                [mat[:, off + h * HD: off + (h + 1) * HD] for h in range(H)],
                axis=0)

        def mha(q_mat, q_off, kv_mat, k_off, v_off, wo_ref, bo_ref, bias):
            # Block-diagonal merged attention over all (head, batch) groups.
            Mq = q_mat.shape[0]                     # rows per head slab
            qs = head_stack(q_mat, q_off)           # [H*Mq, HD] (scale folded)
            ks = head_stack(kv_mat, k_off)          # [H*Mk, HD]
            vs = head_stack(kv_mat, v_off)          # [H*Mk, HD]

            s = lax.dot_general(qs, ks, (((1,), (1,)), ((), ())),
                                preferred_element_type=jnp.float32)
            s = s + bias                             # -1e30 off-block bias
            s = s - jnp.max(s, axis=-1, keepdims=True)
            p = jnp.exp(s)                           # off-block -> exactly 0
            p = p * pl.reciprocal(jnp.sum(p, axis=-1, keepdims=True),
                                  approx=True)
            o_all = jnp.dot(p, vs, preferred_element_type=jnp.float32)  # [H*Mq, HD]

            # Accumulate each head slab through the matching Wo sublane rows.
            acc = None
            for h in range(H):                       # static, unrolled (H=4)
                part = jnp.dot(o_all[h * Mq:(h + 1) * Mq, :],
                               wo_ref[h * HD:(h + 1) * HD, :],
                               preferred_element_type=jnp.float32)
                acc = part if acc is None else acc + part
            return acc + bo_ref[...]

        # 1) self attention + add&norm  (fused QKV projection, one wide matmul)
        qkv = jnp.dot(x, wqkv1_ref[...],
                      preferred_element_type=jnp.float32) + bqkv1_ref[...]
        att = mha(qkv, 0, qkv, D, 2 * D, wo1_ref, bo1_ref, mask1_ref[...])
        x1 = add_norm(att, x, ln1_ref)

        # 2) cross attention (Q from decoder state, K/V from encoder) + add&norm
        q2 = jnp.dot(x1, wq2_ref[...],
                     preferred_element_type=jnp.float32) + bq2_ref[...]
        kv2 = jnp.dot(enc, wkv2_ref[...],
                      preferred_element_type=jnp.float32) + bkv2_ref[...]
        mixed = mha(q2, 0, kv2, 0, D, wo2_ref, bo2_ref, mask2_ref[...])
        x2 = add_norm(mixed, x1, ln2_ref)

        # 3) position-wise FFN + add&norm (module reuses res_norm_2 here)
        hdn = jnp.dot(x2, wf1_ref[...],
                      preferred_element_type=jnp.float32) + bf1_ref[...]
        hdn = jnp.maximum(hdn, 0.0)
        ff = jnp.dot(hdn, wf2_ref[...],
                     preferred_element_type=jnp.float32) + bf2_ref[...]
        out_ref[...] = add_norm(ff, x2, ln2_ref).astype(out_ref.dtype)

    return kernel


# ------------------------------ wrapper --------------------------------------
def _block_bias(H, B, sq, sk):
    """Additive -inf-style bias selecting the block-diagonal (head, batch)
    groups of the merged attention. Built once in the wrapper (constant)."""
    rq = H * B * sq
    rk = H * B * sk
    rg = jnp.arange(rq, dtype=jnp.int32) // sq
    cg = jnp.arange(rk, dtype=jnp.int32) // sk
    return jnp.where(rg[:, None] == cg[None, :], 0.0, NEG_INF).astype(jnp.float32)


def transformer_decoder_block(x, enc, packed):
    B, S, D = x.shape
    Se = enc.shape[1]
    (wqkv1, bqkv1, wo1, bo1, ln1,
     wq2, bq2, wkv2, bkv2, wo2, bo2, ln2,
     wf1, bf1, wf2, bf2) = packed

    # Batch fold outside the kernel: free XLA layout plumbing.
    x2d = x.reshape(B * S, D)
    enc2d = enc.reshape(B * Se, D)

    mask1 = _block_bias(N_HEADS, B, S, S)    # [H*B*S, H*B*S]   self-attention
    mask2 = _block_bias(N_HEADS, B, S, Se)   # [H*B*S, H*B*Se]  cross-attention

    kernel = _make_kernel(D, N_HEADS, HEAD_DIM)

    operands = (x2d, enc2d, mask1, mask2,
                wqkv1, bqkv1, wo1, bo1, ln1,
                wq2, bq2, wkv2, bkv2, wo2, bo2, ln2,
                wf1, bf1, wf2, bf2)

    def full_spec(a):
        nd = a.ndim
        return pl.BlockSpec(a.shape, lambda i, _nd=nd: (0,) * _nd)

    grid_spec = pltpu.PrefetchScalarGridSpec(
        num_scalar_prefetch=0,
        grid=(1,),
        in_specs=[full_spec(a) for a in operands],
        out_specs=pl.BlockSpec((B * S, D), lambda i: (0, 0)),
    )

    out2d = pl.pallas_call(
        kernel,
        out_shape=jax.ShapeDtypeStruct((B * S, D), jnp.float32),
        grid_spec=grid_spec,
        compiler_params=pltpu.CompilerParams(
            dimension_semantics=("arbitrary",)),
    )(*operands)
    return out2d.reshape(B, S, D)


# ------------------------- parameters (module-style) --------------------------
def init_raw_params(key):
    ks = jax.random.split(key, 8)

    def attn(k):
        kk = jax.random.split(k, 8)
        return {
            "wq": jax.random.normal(kk[0], (D_MODEL, D_MODEL), jnp.float32) * 0.05,
            "wk": jax.random.normal(kk[1], (D_MODEL, D_MODEL), jnp.float32) * 0.05,
            "wv": jax.random.normal(kk[2], (D_MODEL, D_MODEL), jnp.float32) * 0.05,
            "wo": jax.random.normal(kk[3], (D_MODEL, D_MODEL), jnp.float32) * 0.05,
            "bq": 0.01 * jax.random.normal(kk[4], (D_MODEL,), jnp.float32),
            "bk": 0.01 * jax.random.normal(kk[5], (D_MODEL,), jnp.float32),
            "bv": 0.01 * jax.random.normal(kk[6], (D_MODEL,), jnp.float32),
            "bo": 0.01 * jax.random.normal(kk[7], (D_MODEL,), jnp.float32),
        }

    def ln(k):
        g = 1.0 + 0.1 * jax.random.normal(k, (D_MODEL,), jnp.float32)
        b = 0.01 * jax.random.normal(jax.random.fold_in(k, 1), (D_MODEL,), jnp.float32)
        return {"gamma": g, "beta": b}

    return {
        "attn1": attn(ks[0]), "ln1": ln(ks[1]),
        "attn2": attn(ks[2]), "ln2": ln(ks[3]),
        "wf1": jax.random.normal(ks[4], (D_MODEL, D_FFN), jnp.float32) * 0.05,
        "bf1": 0.01 * jax.random.normal(ks[5], (D_FFN,), jnp.float32),
        "wf2": jax.random.normal(ks[6], (D_FFN, D_MODEL), jnp.float32) * 0.05,
        "bf2": 0.01 * jax.random.normal(ks[7], (D_MODEL,), jnp.float32),
    }


def pack_params(raw):
    """One-time weight transforms for the kernel: fuse Q/K/V, fold the
    1/sqrt(head_dim) score scale into wq/bq, make biases 2-D row vectors."""
    scale = 1.0 / jnp.sqrt(jnp.float32(HEAD_DIM))
    a1, a2 = raw["attn1"], raw["attn2"]

    wqkv1 = jnp.concatenate([a1["wq"] * scale, a1["wk"], a1["wv"]], axis=1)
    bqkv1 = jnp.concatenate([a1["bq"] * scale, a1["bk"], a1["bv"]])[None, :]
    wo1, bo1 = a1["wo"], a1["bo"][None, :]
    ln1 = jnp.stack([raw["ln1"]["gamma"], raw["ln1"]["beta"]])

    wq2, bq2 = a2["wq"] * scale, (a2["bq"] * scale)[None, :]
    wkv2 = jnp.concatenate([a2["wk"], a2["wv"]], axis=1)
    bkv2 = jnp.concatenate([a2["bk"], a2["bv"]])[None, :]
    wo2, bo2 = a2["wo"], a2["bo"][None, :]
    ln2 = jnp.stack([raw["ln2"]["gamma"], raw["ln2"]["beta"]])

    return (wqkv1, bqkv1, wo1, bo1, ln1,
            wq2, bq2, wkv2, bkv2, wo2, bo2, ln2,
            raw["wf1"], raw["bf1"][None, :], raw["wf2"], raw["bf2"][None, :])


# --------------------------- pure-JAX reference -------------------------------
def reference(x, enc, raw):
    def mha(q_in, kv_in, p):
        Q = q_in @ p["wq"] + p["bq"]
        K = kv_in @ p["wk"] + p["bk"]
        V = kv_in @ p["wv"] + p["bv"]
        B, Sq, D = Q.shape
        Sk = K.shape[1]
        Qh = Q.reshape(B, Sq, N_HEADS, HEAD_DIM).transpose(0, 2, 1, 3)
        Kh = K.reshape(B, Sk, N_HEADS, HEAD_DIM).transpose(0, 2, 1, 3)
        Vh = V.reshape(B, Sk, N_HEADS, HEAD_DIM).transpose(0, 2, 1, 3)
        s = jnp.einsum("bhqd,bhkd->bhqk", Qh, Kh) / jnp.sqrt(jnp.float32(HEAD_DIM))
        pr = jax.nn.softmax(s, axis=-1)
        o = jnp.einsum("bhqk,bhkd->bhqd", pr, Vh)
        o = o.transpose(0, 2, 1, 3).reshape(B, Sq, D)
        return o @ p["wo"] + p["bo"]

    def add_norm(sub, res, ln):
        y = sub + res
        mu = jnp.mean(y, axis=-1, keepdims=True)
        var = jnp.mean((y - mu) ** 2, axis=-1, keepdims=True)
        return (y - mu) * jax.lax.rsqrt(var + LN_EPS) * ln["gamma"] + ln["beta"]

    att = mha(x, x, raw["attn1"])
    x1 = add_norm(att, x, raw["ln1"])
    mixed = mha(x1, enc, raw["attn2"])
    x2 = add_norm(mixed, x1, raw["ln2"])
    h = jnp.maximum(x2 @ raw["wf1"] + raw["bf1"], 0.0)
    ff = h @ raw["wf2"] + raw["bf2"]
    return add_norm(ff, x2, raw["ln2"])   # res_norm_2 reused, as in the module


# ------------------------------------ main ------------------------------------
if __name__ == "__main__":
    key = jax.random.PRNGKey(0)
    kx, ke, kp = jax.random.split(key, 3)

    x = jax.random.normal(kx, (BATCH, S_DEC, D_MODEL), jnp.float32)
    enc = jax.random.normal(ke, (BATCH, S_ENC, D_MODEL), jnp.float32)

    raw = init_raw_params(kp)
    packed = pack_params(raw)

    out = transformer_decoder_block(x, enc, packed)
    out = jax.block_until_ready(out)

    ref = reference(x, enc, raw)
    assert out.shape == (BATCH, S_DEC, D_MODEL)
    err = float(jnp.max(jnp.abs(out - ref)))
    # approx=True softmax reciprocal (EUP vrcp) and single-pass LayerNorm
    # variance perturb results slightly; tolerance relaxed from 1e-4.
    assert err < 5e-3, f"mismatch vs pure-JAX reference: max abs err = {err}"

    print("KERNEL_OK")
</pallas_src>

<mosaic_0001>
module attributes {stable_mosaic.version = 11 : i64} {
  func.func @kernel(%arg0: i32, %arg1: memref<16x32xf32, #tpu.memory_space<vmem>>, %arg2: memref<32x32xf32, #tpu.memory_space<vmem>>, %arg3: memref<64x64xf32, #tpu.memory_space<vmem>>, %arg4: memref<64x128xf32, #tpu.memory_space<vmem>>, %arg5: memref<32x96xf32, #tpu.memory_space<vmem>>, %arg6: memref<1x96xf32, #tpu.memory_space<vmem>>, %arg7: memref<32x32xf32, #tpu.memory_space<vmem>>, %arg8: memref<1x32xf32, #tpu.memory_space<vmem>>, %arg9: memref<2x32xf32, #tpu.memory_space<vmem>>, %arg10: memref<32x32xf32, #tpu.memory_space<vmem>>, %arg11: memref<1x32xf32, #tpu.memory_space<vmem>>, %arg12: memref<32x64xf32, #tpu.memory_space<vmem>>, %arg13: memref<1x64xf32, #tpu.memory_space<vmem>>, %arg14: memref<32x32xf32, #tpu.memory_space<vmem>>, %arg15: memref<1x32xf32, #tpu.memory_space<vmem>>, %arg16: memref<2x32xf32, #tpu.memory_space<vmem>>, %arg17: memref<32x32xf32, #tpu.memory_space<vmem>>, %arg18: memref<1x32xf32, #tpu.memory_space<vmem>>, %arg19: memref<32x32xf32, #tpu.memory_space<vmem>>, %arg20: memref<1x32xf32, #tpu.memory_space<vmem>>, %arg21: memref<16x32xf32, #tpu.memory_space<vmem>>) attributes {dimension_semantics = [#tpu.dimension_semantics<arbitrary>], iteration_bounds = array<i64: 1>, scalar_prefetch = 0 : i64, scratch_operands = 0 : i64, tpu.core_type = #tpu.core_type<tc>, window_params = [{pipeline_mode = #tpu.pipeline_mode<synchronous>, transform_indices = @transform_0, window_bounds = array<i64: 16, 32>}, {pipeline_mode = #tpu.pipeline_mode<synchronous>, transform_indices = @transform_1, window_bounds = array<i64: 32, 32>}, {pipeline_mode = #tpu.pipeline_mode<synchronous>, transform_indices = @transform_2, window_bounds = array<i64: 64, 64>}, {pipeline_mode = #tpu.pipeline_mode<synchronous>, transform_indices = @transform_3, window_bounds = array<i64: 64, 128>}, {pipeline_mode = #tpu.pipeline_mode<synchronous>, transform_indices = @transform_4, window_bounds = array<i64: 32, 96>}, {pipeline_mode = #tpu.pipeline_mode<synchronous>, transform_indices = @transform_5, window_bounds = array<i64: 1, 96>}, {pipeline_mode = #tpu.pipeline_mode<synchronous>, transform_indices = @transform_6, window_bounds = array<i64: 32, 32>}, {pipeline_mode = #tpu.pipeline_mode<synchronous>, transform_indices = @transform_7, window_bounds = array<i64: 1, 32>}, {pipeline_mode = #tpu.pipeline_mode<synchronous>, transform_indices = @transform_8, window_bounds = array<i64: 2, 32>}, {pipeline_mode = #tpu.pipeline_mode<synchronous>, transform_indices = @transform_9, window_bounds = array<i64: 32, 32>}, {pipeline_mode = #tpu.pipeline_mode<synchronous>, transform_indices = @transform_10, window_bounds = array<i64: 1, 32>}, {pipeline_mode = #tpu.pipeline_mode<synchronous>, transform_indices = @transform_11, window_bounds = array<i64: 32, 64>}, {pipeline_mode = #tpu.pipeline_mode<synchronous>, transform_indices = @transform_12, window_bounds = array<i64: 1, 64>}, {pipeline_mode = #tpu.pipeline_mode<synchronous>, transform_indices = @transform_13, window_bounds = array<i64: 32, 32>}, {pipeline_mode = #tpu.pipeline_mode<synchronous>, transform_indices = @transform_14, window_bounds = array<i64: 1, 32>}, {pipeline_mode = #tpu.pipeline_mode<synchronous>, transform_indices = @transform_15, window_bounds = array<i64: 2, 32>}, {pipeline_mode = #tpu.pipeline_mode<synchronous>, transform_indices = @transform_16, window_bounds = array<i64: 32, 32>}, {pipeline_mode = #tpu.pipeline_mode<synchronous>, transform_indices = @transform_17, window_bounds = array<i64: 1, 32>}, {pipeline_mode = #tpu.pipeline_mode<synchronous>, transform_indices = @transform_18, window_bounds = array<i64: 32, 32>}, {pipeline_mode = #tpu.pipeline_mode<synchronous>, transform_indices = @transform_19, window_bounds = array<i64: 1, 32>}, {pipeline_mode = #tpu.pipeline_mode<synchronous>, transform_indices = @transform_20, window_bounds = array<i64: 16, 32>}]} {
    %c0 = arith.constant 0 : index
    %c0_0 = arith.constant 0 : index
    %0 = vector.load %arg1[%c0, %c0_0] : memref<16x32xf32, #tpu.memory_space<vmem>>, vector<16x32xf32>
    %c0_1 = arith.constant 0 : index
    %c0_2 = arith.constant 0 : index
    %1 = vector.load %arg2[%c0_1, %c0_2] : memref<32x32xf32, #tpu.memory_space<vmem>>, vector<32x32xf32>
    %c0_3 = arith.constant 0 : index
    %c0_4 = arith.constant 0 : index
    %2 = vector.load %arg5[%c0_3, %c0_4] : memref<32x96xf32, #tpu.memory_space<vmem>>, vector<32x96xf32>
    %cst = arith.constant dense<0.000000e+00> : vector<16x96xf32>
    %3 = tpu.matmul %0, %2, %cst {dimension_numbers = #tpu.dot_dimension_numbers<[1], [0], [0], [1], [0, 0, 1, 1], [], []>} : vector<16x32xf32>, vector<32x96xf32>, vector<16x96xf32> -> vector<16x96xf32>
    %c0_5 = arith.constant 0 : index
    %c0_6 = arith.constant 0 : index
    %4 = vector.load %arg6[%c0_5, %c0_6] : memref<1x96xf32, #tpu.memory_space<vmem>>, vector<1x96xf32>
    %5 = vector.broadcast %4 : vector<1x96xf32> to vector<16x96xf32>
    %6 = arith.addf %3, %5 : vector<16x96xf32>
    %c0_7 = arith.constant 0 : index
    %c0_8 = arith.constant 0 : index
    %7 = vector.load %arg3[%c0_7, %c0_8] : memref<64x64xf32, #tpu.memory_space<vmem>>, vector<64x64xf32>
    %8 = vector.extract_strided_slice %6 {offsets = [0, 0], sizes = [16, 8], strides = [1, 1]} : vector<16x96xf32> to vector<16x8xf32>
    %9 = vector.extract_strided_slice %6 {offsets = [0, 8], sizes = [16, 8], strides = [1, 1]} : vector<16x96xf32> to vector<16x8xf32>
    %10 = vector.extract_strided_slice %6 {offsets = [0, 16], sizes = [16, 8], strides = [1, 1]} : vector<16x96xf32> to vector<16x8xf32>
    %11 = vector.extract_strided_slice %6 {offsets = [0, 24], sizes = [16, 8], strides = [1, 1]} : vector<16x96xf32> to vector<16x8xf32>
    %12 = tpu.concatenate %8, %9, %10, %11 in 0 : vector<16x8xf32>, vector<16x8xf32>, vector<16x8xf32>, vector<16x8xf32> -> vector<64x8xf32>
    %13 = vector.extract_strided_slice %6 {offsets = [0, 32], sizes = [16, 8], strides = [1, 1]} : vector<16x96xf32> to vector<16x8xf32>
    %14 = vector.extract_strided_slice %6 {offsets = [0, 40], sizes = [16, 8], strides = [1, 1]} : vector<16x96xf32> to vector<16x8xf32>
    %15 = vector.extract_strided_slice %6 {offsets = [0, 48], sizes = [16, 8], strides = [1, 1]} : vector<16x96xf32> to vector<16x8xf32>
    %16 = vector.extract_strided_slice %6 {offsets = [0, 56], sizes = [16, 8], strides = [1, 1]} : vector<16x96xf32> to vector<16x8xf32>
    %17 = tpu.concatenate %13, %14, %15, %16 in 0 : vector<16x8xf32>, vector<16x8xf32>, vector<16x8xf32>, vector<16x8xf32> -> vector<64x8xf32>
    %18 = vector.extract_strided_slice %6 {offsets = [0, 64], sizes = [16, 8], strides = [1, 1]} : vector<16x96xf32> to vector<16x8xf32>
    %19 = vector.extract_strided_slice %6 {offsets = [0, 72], sizes = [16, 8], strides = [1, 1]} : vector<16x96xf32> to vector<16x8xf32>
    %20 = vector.extract_strided_slice %6 {offsets = [0, 80], sizes = [16, 8], strides = [1, 1]} : vector<16x96xf32> to vector<16x8xf32>
    %21 = vector.extract_strided_slice %6 {offsets = [0, 88], sizes = [16, 8], strides = [1, 1]} : vector<16x96xf32> to vector<16x8xf32>
    %22 = tpu.concatenate %18, %19, %20, %21 in 0 : vector<16x8xf32>, vector<16x8xf32>, vector<16x8xf32>, vector<16x8xf32> -> vector<64x8xf32>
    %cst_9 = arith.constant dense<0.000000e+00> : vector<64x64xf32>
    %23 = tpu.matmul %12, %17, %cst_9 {dimension_numbers = #tpu.dot_dimension_numbers<[1], [1], [0], [0], [0, 0, 1, 0], [], []>} : vector<64x8xf32>, vector<64x8xf32>, vector<64x64xf32> -> vector<64x64xf32>
    %24 = arith.addf %23, %7 : vector<64x64xf32>
    %cst_10 = arith.constant dense<0xFF800000> : vector<64xf32>
    %25 = vector.multi_reduction <maximumf>, %24, %cst_10 [1] : vector<64x64xf32> to vector<64xf32>
    %26 = vector.shape_cast %25 : vector<64xf32> to vector<64x1xf32>
    %27 = vector.broadcast %26 : vector<64x1xf32> to vector<64x64xf32>
    %28 = arith.subf %24, %27 : vector<64x64xf32>
    %29 = math.exp %28 : vector<64x64xf32>
    %cst_11 = arith.constant dense<0.000000e+00> : vector<64xf32>
    %30 = vector.multi_reduction <add>, %29, %cst_11 [1] : vector<64x64xf32> to vector<64xf32>
    %31 = vector.shape_cast %30 : vector<64xf32> to vector<64x1xf32>
    %32 = tpu.reciprocal %31 {approx = true} : vector<64x1xf32> -> vector<64x1xf32>
    %33 = vector.broadcast %32 : vector<64x1xf32> to vector<64x64xf32>
    %34 = arith.mulf %29, %33 : vector<64x64xf32>
    %cst_12 = arith.constant dense<0.000000e+00> : vector<64x8xf32>
    %35 = tpu.matmul %34, %22, %cst_12 {dimension_numbers = #tpu.dot_dimension_numbers<[1], [0], [0], [1], [0, 0, 1, 1], [], []>} : vector<64x64xf32>, vector<64x8xf32>, vector<64x8xf32> -> vector<64x8xf32>
    %36 = vector.extract_strided_slice %35 {offsets = [0, 0], sizes = [16, 8], strides = [1, 1]} : vector<64x8xf32> to vector<16x8xf32>
    %c0_13 = arith.constant 0 : index
    %c0_14 = arith.constant 0 : index
    %37 = vector.load %arg7[%c0_13, %c0_14] : memref<32x32xf32, #tpu.memory_space<vmem>>, vector<8x32xf32>
    %cst_15 = arith.constant dense<0.000000e+00> : vector<16x32xf32>
    %38 = tpu.matmul %36, %37, %cst_15 {dimension_numbers = #tpu.dot_dimension_numbers<[1], [0], [0], [1], [0, 0, 1, 1], [], []>} : vector<16x8xf32>, vector<8x32xf32>, vector<16x32xf32> -> vector<16x32xf32>
    %39 = vector.extract_strided_slice %35 {offsets = [16, 0], sizes = [16, 8], strides = [1, 1]} : vector<64x8xf32> to vector<16x8xf32>
    %c8 = arith.constant 8 : index
    %c0_16 = arith.constant 0 : index
    %40 = vector.load %arg7[%c8, %c0_16] : memref<32x32xf32, #tpu.memory_space<vmem>>, vector<8x32xf32>
    %cst_17 = arith.constant dense<0.000000e+00> : vector<16x32xf32>
    %41 = tpu.matmul %39, %40, %cst_17 {dimension_numbers = #tpu.dot_dimension_numbers<[1], [0], [0], [1], [0, 0, 1, 1], [], []>} : vector<16x8xf32>, vector<8x32xf32>, vector<16x32xf32> -> vector<16x32xf32>
    %42 = arith.addf %38, %41 : vector<16x32xf32>
    %43 = vector.extract_strided_slice %35 {offsets = [32, 0], sizes = [16, 8], strides = [1, 1]} : vector<64x8xf32> to vector<16x8xf32>
    %c16 = arith.constant 16 : index
    %c0_18 = arith.constant 0 : index
    %44 = vector.load %arg7[%c16, %c0_18] : memref<32x32xf32, #tpu.memory_space<vmem>>, vector<8x32xf32>
    %cst_19 = arith.constant dense<0.000000e+00> : vector<16x32xf32>
    %45 = tpu.matmul %43, %44, %cst_19 {dimension_numbers = #tpu.dot_dimension_numbers<[1], [0], [0], [1], [0, 0, 1, 1], [], []>} : vector<16x8xf32>, vector<8x32xf32>, vector<16x32xf32> -> vector<16x32xf32>
    %46 = arith.addf %42, %45 : vector<16x32xf32>
    %47 = vector.extract_strided_slice %35 {offsets = [48, 0], sizes = [16, 8], strides = [1, 1]} : vector<64x8xf32> to vector<16x8xf32>
    %c24 = arith.constant 24 : index
    %c0_20 = arith.constant 0 : index
    %48 = vector.load %arg7[%c24, %c0_20] : memref<32x32xf32, #tpu.memory_space<vmem>>, vector<8x32xf32>
    %cst_21 = arith.constant dense<0.000000e+00> : vector<16x32xf32>
    %49 = tpu.matmul %47, %48, %cst_21 {dimension_numbers = #tpu.dot_dimension_numbers<[1], [0], [0], [1], [0, 0, 1, 1], [], []>} : vector<16x8xf32>, vector<8x32xf32>, vector<16x32xf32> -> vector<16x32xf32>
    %50 = arith.addf %46, %49 : vector<16x32xf32>
    %c0_22 = arith.constant 0 : index
    %c0_23 = arith.constant 0 : index
    %51 = vector.load %arg8[%c0_22, %c0_23] : memref<1x32xf32, #tpu.memory_space<vmem>>, vector<1x32xf32>
    %52 = vector.broadcast %51 : vector<1x32xf32> to vector<16x32xf32>
    %53 = arith.addf %50, %52 : vector<16x32xf32>
    %c0_24 = arith.constant 0 : index
    %c0_25 = arith.constant 0 : index
    %54 = vector.load %arg9[%c0_24, %c0_25] : memref<2x32xf32, #tpu.memory_space<vmem>>, vector<1x32xf32>
    %55 = vector.shape_cast %54 : vector<1x32xf32> to vector<32xf32>
    %c1 = arith.constant 1 : index
    %c0_26 = arith.constant 0 : index
    %56 = vector.load %arg9[%c1, %c0_26] : memref<2x32xf32, #tpu.memory_space<vmem>>, vector<1x32xf32>
    %57 = vector.shape_cast %56 : vector<1x32xf32> to vector<32xf32>
    %58 = arith.addf %53, %0 : vector<16x32xf32>
    %cst_27 = arith.constant dense<0.000000e+00> : vector<16xf32>
    %59 = vector.multi_reduction <add>, %58, %cst_27 [1] : vector<16x32xf32> to vector<16xf32>
    %60 = vector.shape_cast %59 : vector<16xf32> to vector<16x1xf32>
    %cst_28 = arith.constant 3.200000e+01 : f32
    %61 = vector.broadcast %cst_28 : f32 to vector<16x1xf32>
    %62 = arith.divf %60, %61 : vector<16x1xf32>
    %63 = arith.mulf %58, %58 : vector<16x32xf32>
    %cst_29 = arith.constant dense<0.000000e+00> : vector<16xf32>
    %64 = vector.multi_reduction <add>, %63, %cst_29 [1] : vector<16x32xf32> to vector<16xf32>
    %65 = vector.shape_cast %64 : vector<16xf32> to vector<16x1xf32>
    %cst_30 = arith.constant 3.200000e+01 : f32
    %66 = vector.broadcast %cst_30 : f32 to vector<16x1xf32>
    %67 = arith.divf %65, %66 : vector<16x1xf32>
    %68 = arith.mulf %62, %62 : vector<16x1xf32>
    %69 = arith.subf %67, %68 : vector<16x1xf32>
    %70 = vector.broadcast %62 : vector<16x1xf32> to vector<16x32xf32>
    %71 = arith.subf %58, %70 : vector<16x32xf32>
    %cst_31 = arith.constant 9.99999974E-6 : f32
    %72 = vector.broadcast %cst_31 : f32 to vector<16x1xf32>
    %73 = arith.addf %69, %72 : vector<16x1xf32>
    %74 = math.rsqrt %73 : vector<16x1xf32>
    %75 = vector.broadcast %74 : vector<16x1xf32> to vector<16x32xf32>
    %76 = arith.mulf %71, %75 : vector<16x32xf32>
    %77 = vector.shape_cast %55 : vector<32xf32> to vector<1x32xf32>
    %78 = vector.broadcast %77 : vector<1x32xf32> to vector<16x32xf32>
    %79 = arith.mulf %76, %78 : vector<16x32xf32>
    %80 = vector.shape_cast %57 : vector<32xf32> to vector<1x32xf32>
    %81 = vector.broadcast %80 : vector<1x32xf32> to vector<16x32xf32>
    %82 = arith.addf %79, %81 : vector<16x32xf32>
    %c0_32 = arith.constant 0 : index
    %c0_33 = arith.constant 0 : index
    %83 = vector.load %arg10[%c0_32, %c0_33] : memref<32x32xf32, #tpu.memory_space<vmem>>, vector<32x32xf32>
    %cst_34 = arith.constant dense<0.000000e+00> : vector<16x32xf32>
    %84 = tpu.matmul %82, %83, %cst_34 {dimension_numbers = #tpu.dot_dimension_numbers<[1], [0], [0], [1], [0, 0, 1, 1], [], []>} : vector<16x32xf32>, vector<32x32xf32>, vector<16x32xf32> -> vector<16x32xf32>
    %c0_35 = arith.constant 0 : index
    %c0_36 = arith.constant 0 : index
    %85 = vector.load %arg11[%c0_35, %c0_36] : memref<1x32xf32, #tpu.memory_space<vmem>>, vector<1x32xf32>
    %86 = vector.broadcast %85 : vector<1x32xf32> to vector<16x32xf32>
    %87 = arith.addf %84, %86 : vector<16x32xf32>
    %c0_37 = arith.constant 0 : index
    %c0_38 = arith.constant 0 : index
    %88 = vector.load %arg12[%c0_37, %c0_38] : memref<32x64xf32, #tpu.memory_space<vmem>>, vector<32x64xf32>
    %cst_39 = arith.constant dense<0.000000e+00> : vector<32x64xf32>
    %89 = tpu.matmul %1, %88, %cst_39 {dimension_numbers = #tpu.dot_dimension_numbers<[1], [0], [0], [1], [0, 0, 1, 1], [], []>} : vector<32x32xf32>, vector<32x64xf32>, vector<32x64xf32> -> vector<32x64xf32>
    %c0_40 = arith.constant 0 : index
    %c0_41 = arith.constant 0 : index
    %90 = vector.load %arg13[%c0_40, %c0_41] : memref<1x64xf32, #tpu.memory_space<vmem>>, vector<1x64xf32>
    %91 = vector.broadcast %90 : vector<1x64xf32> to vector<32x64xf32>
    %92 = arith.addf %89, %91 : vector<32x64xf32>
    %c0_42 = arith.constant 0 : index
    %c0_43 = arith.constant 0 : index
    %93 = vector.load %arg4[%c0_42, %c0_43] : memref<64x128xf32, #tpu.memory_space<vmem>>, vector<64x128xf32>
    %94 = vector.extract_strided_slice %87 {offsets = [0, 0], sizes = [16, 8], strides = [1, 1]} : vector<16x32xf32> to vector<16x8xf32>
    %95 = vector.extract_strided_slice %87 {offsets = [0, 8], sizes = [16, 8], strides = [1, 1]} : vector<16x32xf32> to vector<16x8xf32>
    %96 = vector.extract_strided_slice %87 {offsets = [0, 16], sizes = [16, 8], strides = [1, 1]} : vector<16x32xf32> to vector<16x8xf32>
    %97 = vector.extract_strided_slice %87 {offsets = [0, 24], sizes = [16, 8], strides = [1, 1]} : vector<16x32xf32> to vector<16x8xf32>
    %98 = tpu.concatenate %94, %95, %96, %97 in 0 : vector<16x8xf32>, vector<16x8xf32>, vector<16x8xf32>, vector<16x8xf32> -> vector<64x8xf32>
    %99 = vector.extract_strided_slice %92 {offsets = [0, 0], sizes = [32, 8], strides = [1, 1]} : vector<32x64xf32> to vector<32x8xf32>
    %100 = vector.extract_strided_slice %92 {offsets = [0, 8], sizes = [32, 8], strides = [1, 1]} : vector<32x64xf32> to vector<32x8xf32>
    %101 = vector.extract_strided_slice %92 {offsets = [0, 16], sizes = [32, 8], strides = [1, 1]} : vector<32x64xf32> to vector<32x8xf32>
    %102 = vector.extract_strided_slice %92 {offsets = [0, 24], sizes = [32, 8], strides = [1, 1]} : vector<32x64xf32> to vector<32x8xf32>
    %103 = tpu.concatenate %99, %100, %101, %102 in 0 : vector<32x8xf32>, vector<32x8xf32>, vector<32x8xf32>, vector<32x8xf32> -> vector<128x8xf32>
    %104 = vector.extract_strided_slice %92 {offsets = [0, 32], sizes = [32, 8], strides = [1, 1]} : vector<32x64xf32> to vector<32x8xf32>
    %105 = vector.extract_strided_slice %92 {offsets = [0, 40], sizes = [32, 8], strides = [1, 1]} : vector<32x64xf32> to vector<32x8xf32>
    %106 = vector.extract_strided_slice %92 {offsets = [0, 48], sizes = [32, 8], strides = [1, 1]} : vector<32x64xf32> to vector<32x8xf32>
    %107 = vector.extract_strided_slice %92 {offsets = [0, 56], sizes = [32, 8], strides = [1, 1]} : vector<32x64xf32> to vector<32x8xf32>
    %108 = tpu.concatenate %104, %105, %106, %107 in 0 : vector<32x8xf32>, vector<32x8xf32>, vector<32x8xf32>, vector<32x8xf32> -> vector<128x8xf32>
    %cst_44 = arith.constant dense<0.000000e+00> : vector<64x128xf32>
    %109 = tpu.matmul %98, %103, %cst_44 {dimension_numbers = #tpu.dot_dimension_numbers<[1], [1], [0], [0], [0, 0, 1, 0], [], []>} : vector<64x8xf32>, vector<128x8xf32>, vector<64x128xf32> -> vector<64x128xf32>
    %110 = arith.addf %109, %93 : vector<64x128xf32>
    %cst_45 = arith.constant dense<0xFF800000> : vector<64xf32>
    %111 = vector.multi_reduction <maximumf>, %110, %cst_45 [1] : vector<64x128xf32> to vector<64xf32>
    %112 = vector.shape_cast %111 : vector<64xf32> to vector<64x1xf32>
    %113 = vector.broadcast %112 : vector<64x1xf32> to vector<64x128xf32>
    %114 = arith.subf %110, %113 : vector<64x128xf32>
    %115 = math.exp %114 : vector<64x128xf32>
    %cst_46 = arith.constant dense<0.000000e+00> : vector<64xf32>
    %116 = vector.multi_reduction <add>, %115, %cst_46 [1] : vector<64x128xf32> to vector<64xf32>
    %117 = vector.shape_cast %116 : vector<64xf32> to vector<64x1xf32>
    %118 = tpu.reciprocal %117 {approx = true} : vector<64x1xf32> -> vector<64x1xf32>
    %119 = vector.broadcast %118 : vector<64x1xf32> to vector<64x128xf32>
    %120 = arith.mulf %115, %119 : vector<64x128xf32>
    %cst_47 = arith.constant dense<0.000000e+00> : vector<64x8xf32>
    %121 = tpu.matmul %120, %108, %cst_47 {dimension_numbers = #tpu.dot_dimension_numbers<[1], [0], [0], [1], [0, 0, 1, 1], [], []>} : vector<64x128xf32>, vector<128x8xf32>, vector<64x8xf32> -> vector<64x8xf32>
    %122 = vector.extract_strided_slice %121 {offsets = [0, 0], sizes = [16, 8], strides = [1, 1]} : vector<64x8xf32> to vector<16x8xf32>
    %c0_48 = arith.constant 0 : index
    %c0_49 = arith.constant 0 : index
    %123 = vector.load %arg14[%c0_48, %c0_49] : memref<32x32xf32, #tpu.memory_space<vmem>>, vector<8x32xf32>
    %cst_50 = arith.constant dense<0.000000e+00> : vector<16x32xf32>
    %124 = tpu.matmul %122, %123, %cst_50 {dimension_numbers = #tpu.dot_dimension_numbers<[1], [0], [0], [1], [0, 0, 1, 1], [], []>} : vector<16x8xf32>, vector<8x32xf32>, vector<16x32xf32> -> vector<16x32xf32>
    %125 = vector.extract_strided_slice %121 {offsets = [16, 0], sizes = [16, 8], strides = [1, 1]} : vector<64x8xf32> to vector<16x8xf32>
    %c8_51 = arith.constant 8 : index
    %c0_52 = arith.constant 0 : index
    %126 = vector.load %arg14[%c8_51, %c0_52] : memref<32x32xf32, #tpu.memory_space<vmem>>, vector<8x32xf32>
    %cst_53 = arith.constant dense<0.000000e+00> : vector<16x32xf32>
    %127 = tpu.matmul %125, %126, %cst_53 {dimension_numbers = #tpu.dot_dimension_numbers<[1], [0], [0], [1], [0, 0, 1, 1], [], []>} : vector<16x8xf32>, vector<8x32xf32>, vector<16x32xf32> -> vector<16x32xf32>
    %128 = arith.addf %124, %127 : vector<16x32xf32>
    %129 = vector.extract_strided_slice %121 {offsets = [32, 0], sizes = [16, 8], strides = [1, 1]} : vector<64x8xf32> to vector<16x8xf32>
    %c16_54 = arith.constant 16 : index
    %c0_55 = arith.constant 0 : index
    %130 = vector.load %arg14[%c16_54, %c0_55] : memref<32x32xf32, #tpu.memory_space<vmem>>, vector<8x32xf32>
    %cst_56 = arith.constant dense<0.000000e+00> : vector<16x32xf32>
    %131 = tpu.matmul %129, %130, %cst_56 {dimension_numbers = #tpu.dot_dimension_numbers<[1], [0], [0], [1], [0, 0, 1, 1], [], []>} : vector<16x8xf32>, vector<8x32xf32>, vector<16x32xf32> -> vector<16x32xf32>
    %132 = arith.addf %128, %131 : vector<16x32xf32>
    %133 = vector.extract_strided_slice %121 {offsets = [48, 0], sizes = [16, 8], strides = [1, 1]} : vector<64x8xf32> to vector<16x8xf32>
    %c24_57 = arith.constant 24 : index
    %c0_58 = arith.constant 0 : index
    %134 = vector.load %arg14[%c24_57, %c0_58] : memref<32x32xf32, #tpu.memory_space<vmem>>, vector<8x32xf32>
    %cst_59 = arith.constant dense<0.000000e+00> : vector<16x32xf32>
    %135 = tpu.matmul %133, %134, %cst_59 {dimension_numbers = #tpu.dot_dimension_numbers<[1], [0], [0], [1], [0, 0, 1, 1], [], []>} : vector<16x8xf32>, vector<8x32xf32>, vector<16x32xf32> -> vector<16x32xf32>
    %136 = arith.addf %132, %135 : vector<16x32xf32>
    %c0_60 = arith.constant 0 : index
    %c0_61 = arith.constant 0 : index
    %137 = vector.load %arg15[%c0_60, %c0_61] : memref<1x32xf32, #tpu.memory_space<vmem>>, vector<1x32xf32>
    %138 = vector.broadcast %137 : vector<1x32xf32> to vector<16x32xf32>
    %139 = arith.addf %136, %138 : vector<16x32xf32>
    %c0_62 = arith.constant 0 : index
    %c0_63 = arith.constant 0 : index
    %140 = vector.load %arg16[%c0_62, %c0_63] : memref<2x32xf32, #tpu.memory_space<vmem>>, vector<1x32xf32>
    %141 = vector.shape_cast %140 : vector<1x32xf32> to vector<32xf32>
    %c1_64 = arith.constant 1 : index
    %c0_65 = arith.constant 0 : index
    %142 = vector.load %arg16[%c1_64, %c0_65] : memref<2x32xf32, #tpu.memory_space<vmem>>, vector<1x32xf32>
    %143 = vector.shape_cast %142 : vector<1x32xf32> to vector<32xf32>
    %144 = arith.addf %139, %82 : vector<16x32xf32>
    %cst_66 = arith.constant dense<0.000000e+00> : vector<16xf32>
    %145 = vector.multi_reduction <add>, %144, %cst_66 [1] : vector<16x32xf32> to vector<16xf32>
    %146 = vector.shape_cast %145 : vector<16xf32> to vector<16x1xf32>
    %cst_67 = arith.constant 3.200000e+01 : f32
    %147 = vector.broadcast %cst_67 : f32 to vector<16x1xf32>
    %148 = arith.divf %146, %147 : vector<16x1xf32>
    %149 = arith.mulf %144, %144 : vector<16x32xf32>
    %cst_68 = arith.constant dense<0.000000e+00> : vector<16xf32>
    %150 = vector.multi_reduction <add>, %149, %cst_68 [1] : vector<16x32xf32> to vector<16xf32>
    %151 = vector.shape_cast %150 : vector<16xf32> to vector<16x1xf32>
    %cst_69 = arith.constant 3.200000e+01 : f32
    %152 = vector.broadcast %cst_69 : f32 to vector<16x1xf32>
    %153 = arith.divf %151, %152 : vector<16x1xf32>
    %154 = arith.mulf %148, %148 : vector<16x1xf32>
    %155 = arith.subf %153, %154 : vector<16x1xf32>
    %156 = vector.broadcast %148 : vector<16x1xf32> to vector<16x32xf32>
    %157 = arith.subf %144, %156 : vector<16x32xf32>
    %cst_70 = arith.constant 9.99999974E-6 : f32
    %158 = vector.broadcast %cst_70 : f32 to vector<16x1xf32>
    %159 = arith.addf %155, %158 : vector<16x1xf32>
    %160 = math.rsqrt %159 : vector<16x1xf32>
    %161 = vector.broadcast %160 : vector<16x1xf32> to vector<16x32xf32>
    %162 = arith.mulf %157, %161 : vector<16x32xf32>
    %163 = vector.shape_cast %141 : vector<32xf32> to vector<1x32xf32>
    %164 = vector.broadcast %163 : vector<1x32xf32> to vector<16x32xf32>
    %165 = arith.mulf %162, %164 : vector<16x32xf32>
    %166 = vector.shape_cast %143 : vector<32xf32> to vector<1x32xf32>
    %167 = vector.broadcast %166 : vector<1x32xf32> to vector<16x32xf32>
    %168 = arith.addf %165, %167 : vector<16x32xf32>
    %c0_71 = arith.constant 0 : index
    %c0_72 = arith.constant 0 : index
    %169 = vector.load %arg17[%c0_71, %c0_72] : memref<32x32xf32, #tpu.memory_space<vmem>>, vector<32x32xf32>
    %cst_73 = arith.constant dense<0.000000e+00> : vector<16x32xf32>
    %170 = tpu.matmul %168, %169, %cst_73 {dimension_numbers = #tpu.dot_dimension_numbers<[1], [0], [0], [1], [0, 0, 1, 1], [], []>} : vector<16x32xf32>, vector<32x32xf32>, vector<16x32xf32> -> vector<16x32xf32>
    %c0_74 = arith.constant 0 : index
    %c0_75 = arith.constant 0 : index
    %171 = vector.load %arg18[%c0_74, %c0_75] : memref<1x32xf32, #tpu.memory_space<vmem>>, vector<1x32xf32>
    %172 = vector.broadcast %171 : vector<1x32xf32> to vector<16x32xf32>
    %173 = arith.addf %170, %172 : vector<16x32xf32>
    %cst_76 = arith.constant 0.000000e+00 : f32
    %174 = vector.broadcast %cst_76 : f32 to vector<16x32xf32>
    %175 = arith.maximumf %173, %174 : vector<16x32xf32>
    %c0_77 = arith.constant 0 : index
    %c0_78 = arith.constant 0 : index
    %176 = vector.load %arg19[%c0_77, %c0_78] : memref<32x32xf32, #tpu.memory_space<vmem>>, vector<32x32xf32>
    %cst_79 = arith.constant dense<0.000000e+00> : vector<16x32xf32>
    %177 = tpu.matmul %175, %176, %cst_79 {dimension_numbers = #tpu.dot_dimension_numbers<[1], [0], [0], [1], [0, 0, 1, 1], [], []>} : vector<16x32xf32>, vector<32x32xf32>, vector<16x32xf32> -> vector<16x32xf32>
    %c0_80 = arith.constant 0 : index
    %c0_81 = arith.constant 0 : index
    %178 = vector.load %arg20[%c0_80, %c0_81] : memref<1x32xf32, #tpu.memory_space<vmem>>, vector<1x32xf32>
    %179 = vector.broadcast %178 : vector<1x32xf32> to vector<16x32xf32>
    %180 = arith.addf %177, %179 : vector<16x32xf32>
    %c0_82 = arith.constant 0 : index
    %c0_83 = arith.constant 0 : index
    %181 = vector.load %arg16[%c0_82, %c0_83] : memref<2x32xf32, #tpu.memory_space<vmem>>, vector<1x32xf32>
    %182 = vector.shape_cast %181 : vector<1x32xf32> to vector<32xf32>
    %c1_84 = arith.constant 1 : index
    %c0_85 = arith.constant 0 : index
    %183 = vector.load %arg16[%c1_84, %c0_85] : memref<2x32xf32, #tpu.memory_space<vmem>>, vector<1x32xf32>
    %184 = vector.shape_cast %183 : vector<1x32xf32> to vector<32xf32>
    %185 = arith.addf %180, %168 : vector<16x32xf32>
    %cst_86 = arith.constant dense<0.000000e+00> : vector<16xf32>
    %186 = vector.multi_reduction <add>, %185, %cst_86 [1] : vector<16x32xf32> to vector<16xf32>
    %187 = vector.shape_cast %186 : vector<16xf32> to vector<16x1xf32>
    %cst_87 = arith.constant 3.200000e+01 : f32
    %188 = vector.broadcast %cst_87 : f32 to vector<16x1xf32>
    %189 = arith.divf %187, %188 : vector<16x1xf32>
    %190 = arith.mulf %185, %185 : vector<16x32xf32>
    %cst_88 = arith.constant dense<0.000000e+00> : vector<16xf32>
    %191 = vector.multi_reduction <add>, %190, %cst_88 [1] : vector<16x32xf32> to vector<16xf32>
    %192 = vector.shape_cast %191 : vector<16xf32> to vector<16x1xf32>
    %cst_89 = arith.constant 3.200000e+01 : f32
    %193 = vector.broadcast %cst_89 : f32 to vector<16x1xf32>
    %194 = arith.divf %192, %193 : vector<16x1xf32>
    %195 = arith.mulf %189, %189 : vector<16x1xf32>
    %196 = arith.subf %194, %195 : vector<16x1xf32>
    %197 = vector.broadcast %189 : vector<16x1xf32> to vector<16x32xf32>
    %198 = arith.subf %185, %197 : vector<16x32xf32>
    %cst_90 = arith.constant 9.99999974E-6 : f32
    %199 = vector.broadcast %cst_90 : f32 to vector<16x1xf32>
    %200 = arith.addf %196, %199 : vector<16x1xf32>
    %201 = math.rsqrt %200 : vector<16x1xf32>
    %202 = vector.broadcast %201 : vector<16x1xf32> to vector<16x32xf32>
    %203 = arith.mulf %198, %202 : vector<16x32xf32>
    %204 = vector.shape_cast %182 : vector<32xf32> to vector<1x32xf32>
    %205 = vector.broadcast %204 : vector<1x32xf32> to vector<16x32xf32>
    %206 = arith.mulf %203, %205 : vector<16x32xf32>
    %207 = vector.shape_cast %184 : vector<32xf32> to vector<1x32xf32>
    %208 = vector.broadcast %207 : vector<1x32xf32> to vector<16x32xf32>
    %209 = arith.addf %206, %208 : vector<16x32xf32>
    %c0_91 = arith.constant 0 : index
    %c0_92 = arith.constant 0 : index
    %210 = vector.load %arg21[%c0_91, %c0_92] : memref<16x32xf32, #tpu.memory_space<vmem>>, vector<16x32xf32>
    tpu.vector_store %arg21[%c0_91, %c0_92], %209 {strides = array<i32>} : memref<16x32xf32, #tpu.memory_space<vmem>>, vector<16x32xf32>,
    return
  }
  func.func @transform_0(%arg0: i32) -> (i32, i32) {
    %c0_i32 = arith.constant 0 : i32
    %c0_i32_0 = arith.constant 0 : i32
    %c0_i32_1 = arith.constant 0 : i32
    return %c0_i32, %c0_i32_0 : i32, i32
  }
  func.func @transform_1(%arg0: i32) -> (i32, i32) {
    %c0_i32 = arith.constant 0 : i32
    %c0_i32_0 = arith.constant 0 : i32
    %c0_i32_1 = arith.constant 0 : i32
    return %c0_i32, %c0_i32_0 : i32, i32
  }
  func.func @transform_2(%arg0: i32) -> (i32, i32) {
    %c0_i32 = arith.constant 0 : i32
    %c0_i32_0 = arith.constant 0 : i32
    %c0_i32_1 = arith.constant 0 : i32
    return %c0_i32, %c0_i32_0 : i32, i32
  }
  func.func @transform_3(%arg0: i32) -> (i32, i32) {
    %c0_i32 = arith.constant 0 : i32
    %c0_i32_0 = arith.constant 0 : i32
    %c0_i32_1 = arith.constant 0 : i32
    return %c0_i32, %c0_i32_0 : i32, i32
  }
  func.func @transform_4(%arg0: i32) -> (i32, i32) {
    %c0_i32 = arith.constant 0 : i32
    %c0_i32_0 = arith.constant 0 : i32
    %c0_i32_1 = arith.constant 0 : i32
    return %c0_i32, %c0_i32_0 : i32, i32
  }
  func.func @transform_5(%arg0: i32) -> (i32, i32) {
    %c0_i32 = arith.constant 0 : i32
    %c0_i32_0 = arith.constant 0 : i32
    %c0_i32_1 = arith.constant 0 : i32
    return %c0_i32, %c0_i32_0 : i32, i32
  }
  func.func @transform_6(%arg0: i32) -> (i32, i32) {
    %c0_i32 = arith.constant 0 : i32
    %c0_i32_0 = arith.constant 0 : i32
    %c0_i32_1 = arith.constant 0 : i32
    return %c0_i32, %c0_i32_0 : i32, i32
  }
  func.func @transform_7(%arg0: i32) -> (i32, i32) {
    %c0_i32 = arith.constant 0 : i32
    %c0_i32_0 = arith.constant 0 : i32
    %c0_i32_1 = arith.constant 0 : i32
    return %c0_i32, %c0_i32_0 : i32, i32
  }
  func.func @transform_8(%arg0: i32) -> (i32, i32) {
    %c0_i32 = arith.constant 0 : i32
    %c0_i32_0 = arith.constant 0 : i32
    %c0_i32_1 = arith.constant 0 : i32
    return %c0_i32, %c0_i32_0 : i32, i32
  }
  func.func @transform_9(%arg0: i32) -> (i32, i32) {
    %c0_i32 = arith.constant 0 : i32
    %c0_i32_0 = arith.constant 0 : i32
    %c0_i32_1 = arith.constant 0 : i32
    return %c0_i32, %c0_i32_0 : i32, i32
  }
  func.func @transform_10(%arg0: i32) -> (i32, i32) {
    %c0_i32 = arith.constant 0 : i32
    %c0_i32_0 = arith.constant 0 : i32
    %c0_i32_1 = arith.constant 0 : i32
    return %c0_i32, %c0_i32_0 : i32, i32
  }
  func.func @transform_11(%arg0: i32) -> (i32, i32) {
    %c0_i32 = arith.constant 0 : i32
    %c0_i32_0 = arith.constant 0 : i32
    %c0_i32_1 = arith.constant 0 : i32
    return %c0_i32, %c0_i32_0 : i32, i32
  }
  func.func @transform_12(%arg0: i32) -> (i32, i32) {
    %c0_i32 = arith.constant 0 : i32
    %c0_i32_0 = arith.constant 0 : i32
    %c0_i32_1 = arith.constant 0 : i32
    return %c0_i32, %c0_i32_0 : i32, i32
  }
  func.func @transform_13(%arg0: i32) -> (i32, i32) {
    %c0_i32 = arith.constant 0 : i32
    %c0_i32_0 = arith.constant 0 : i32
    %c0_i32_1 = arith.constant 0 : i32
    return %c0_i32, %c0_i32_0 : i32, i32
  }
  func.func @transform_14(%arg0: i32) -> (i32, i32) {
    %c0_i32 = arith.constant 0 : i32
    %c0_i32_0 = arith.constant 0 : i32
    %c0_i32_1 = arith.constant 0 : i32
    return %c0_i32, %c0_i32_0 : i32, i32
  }
  func.func @transform_15(%arg0: i32) -> (i32, i32) {
    %c0_i32 = arith.constant 0 : i32
    %c0_i32_0 = arith.constant 0 : i32
    %c0_i32_1 = arith.constant 0 : i32
    return %c0_i32, %c0_i32_0 : i32, i32
  }
  func.func @transform_16(%arg0: i32) -> (i32, i32) {
    %c0_i32 = arith.constant 0 : i32
    %c0_i32_0 = arith.constant 0 : i32
    %c0_i32_1 = arith.constant 0 : i32
    return %c0_i32, %c0_i32_0 : i32, i32
  }
  func.func @transform_17(%arg0: i32) -> (i32, i32) {
    %c0_i32 = arith.constant 0 : i32
    %c0_i32_0 = arith.constant 0 : i32
    %c0_i32_1 = arith.constant 0 : i32
    return %c0_i32, %c0_i32_0 : i32, i32
  }
  func.func @transform_18(%arg0: i32) -> (i32, i32) {
    %c0_i32 = arith.constant 0 : i32
    %c0_i32_0 = arith.constant 0 : i32
    %c0_i32_1 = arith.constant 0 : i32
    return %c0_i32, %c0_i32_0 : i32, i32
  }
  func.func @transform_19(%arg0: i32) -> (i32, i32) {
    %c0_i32 = arith.constant 0 : i32
    %c0_i32_0 = arith.constant 0 : i32
    %c0_i32_1 = arith.constant 0 : i32
    return %c0_i32, %c0_i32_0 : i32, i32
  }
  func.func @transform_20(%arg0: i32) -> (i32, i32) {
    %c0_i32 = arith.constant 0 : i32
    %c0_i32_0 = arith.constant 0 : i32
    %c0_i32_1 = arith.constant 0 : i32
    return %c0_i32, %c0_i32_0 : i32, i32
  }
}

</mosaic_0001>

<llo_original>
// kernel: tpu_custom_call.1
$region0: #{tpu_custom_call.1}
  #allocation0 [shape = 'u32[]', space=smem, size = 0x4, offset = 0x4, fixed_abs, tag = 'smem constant byte address 0x4 - core index']
  #allocation1 [shape = 'u32[144,128]{1,0:T(1,128)}', space=vmem, size = 0x12000, scoped, tag = 'internal scratch']
  %s0 = inlined_call_operand.hbm [shape: f32[16,32], index: 0, kind: input, shape index: {}]
  %s1 = inlined_call_operand.hbm [shape: f32[32,32], index: 1, kind: input, shape index: {}]
  %s2 = inlined_call_operand.hbm [shape: f32[64,64], index: 2, kind: input, shape index: {}]
  %s3 = inlined_call_operand.hbm [shape: f32[64,128], index: 3, kind: input, shape index: {}]
  %s4 = inlined_call_operand.hbm [shape: f32[32,96], index: 4, kind: input, shape index: {}]
  %s5 = inlined_call_operand.hbm [shape: f32[1,96], index: 5, kind: input, shape index: {}]
  %s6 = inlined_call_operand.hbm [shape: f32[32,32], index: 6, kind: input, shape index: {}]
  %s7 = inlined_call_operand.hbm [shape: f32[1,32], index: 7, kind: input, shape index: {}]
  %s8 = inlined_call_operand.hbm [shape: f32[2,32], index: 8, kind: input, shape index: {}]
  %s9 = inlined_call_operand.vmem [shape: f32[32,32], index: 9, kind: input, shape index: {}]
  %s10 = inlined_call_operand.hbm [shape: f32[1,32], index: 10, kind: input, shape index: {}]
  %s11 = inlined_call_operand.hbm [shape: f32[32,64], index: 11, kind: input, shape index: {}]
  %s12 = inlined_call_operand.hbm [shape: f32[1,64], index: 12, kind: input, shape index: {}]
  %s13 = inlined_call_operand.hbm [shape: f32[32,32], index: 13, kind: input, shape index: {}]
  %s14 = inlined_call_operand.hbm [shape: f32[1,32], index: 14, kind: input, shape index: {}]
  %s15 = inlined_call_operand.hbm [shape: f32[2,32], index: 15, kind: input, shape index: {}]
  %s16 = inlined_call_operand.hbm [shape: f32[32,32], index: 16, kind: input, shape index: {}]
  %s17 = inlined_call_operand.hbm [shape: f32[1,32], index: 17, kind: input, shape index: {}]
  %s18 = inlined_call_operand.vmem [shape: f32[32,32], index: 18, kind: input, shape index: {}]
  %s19 = inlined_call_operand.vmem [shape: f32[1,32], index: 19, kind: input, shape index: {}]
  %s20 = inlined_call_operand.hbm [shape: f32[16,32], index: 20, kind: output, shape index: {}]
  %s21 = sld [smem:[#allocation0]]
  $region158: #{tpu_custom_call.1} parent=0
    _
  %s23 = ssub.s32 1, %s21
  %s24 = scalar_select 0, %s23, %s21
  $region1: #{tpu_custom_call.1} parent=0
    #allocation2 [shape = 'u8[8192]{0}', space=vmem, size = 0x2000, scoped, tag = 'input window, operand 0, single buffered']
    #allocation3 [shape = 's32[1]{0}', space=sflag, size = 0x4, scoped, tag = 'scoped memory for tpu_custom_call.1']
    #allocation4 [shape = 's32[1]{0}', space=sflag, size = 0x4, scoped, tag = 'scoped memory for tpu_custom_call.1']
    #allocation5 [shape = 'u8[16384]{0}', space=vmem, size = 0x4000, scoped, tag = 'input window, operand 1, single buffered']
    #allocation6 [shape = 's32[1]{0}', space=sflag, size = 0x4, scoped, tag = 'scoped memory for tpu_custom_call.1']
    #allocation7 [shape = 'u8[32768]{0}', space=vmem, size = 0x8000, scoped, tag = 'input window, operand 2, single buffered']
    #allocation8 [shape = 'u8[32768]{0}', space=vmem, size = 0x8000, scoped, tag = 'input window, operand 3, single buffered']
    #allocation9 [shape = 's32[1]{0}', space=sflag, size = 0x4, scoped, tag = 'scoped memory for tpu_custom_call.1']
    #allocation10 [shape = 'u8[16384]{0}', space=vmem, size = 0x4000, scoped, tag = 'input window, operand 4, single buffered']
    #allocation11 [shape = 'u8[512]{0}', space=vmem, size = 0x400, scoped, tag = 'input window, operand 5, single buffered']
    #allocation12 [shape = 's32[1]{0}', space=sflag, size = 0x4, scoped, tag = 'scoped memory for tpu_custom_call.1']
    #allocation13 [shape = 'u8[16384]{0}', space=vmem, size = 0x4000, scoped, tag = 'input window, operand 6, single buffered']
    #allocation14 [shape = 'u8[512]{0}', space=vmem, size = 0x400, scoped, tag = 'input window, operand 7, single buffered']
    #allocation15 [shape = 's32[1]{0}', space=sflag, size = 0x4, scoped, tag = 'scoped memory for tpu_custom_call.1']
    #allocation16 [shape = 'u8[1024]{0}', space=vmem, size = 0x400, scoped, tag = 'input window, operand 8, single buffered']
    #allocation17 [shape = 'u8[512]{0}', space=vmem, size = 0x400, scoped, tag = 'input window, operand 10, single buffered']
    #allocation18 [shape = 's32[1]{0}', space=sflag, size = 0x4, scoped, tag = 'scoped memory for tpu_custom_call.1']
    #allocation19 [shape = 'u8[16384]{0}', space=vmem, size = 0x4000, scoped, tag = 'input window, operand 11, single buffered']
    #allocation20 [shape = 'u8[512]{0}', space=vmem, size = 0x400, scoped, tag = 'input window, operand 12, single buffered']
    #allocation21 [shape = 's32[1]{0}', space=sflag, size = 0x4, scoped, tag = 'scoped memory for tpu_custom_call.1']
    #allocation22 [shape = 'u8[16384]{0}', space=vmem, size = 0x4000, scoped, tag = 'input window, operand 13, single buffered']
    #allocation23 [shape = 'u8[512]{0}', space=vmem, size = 0x400, scoped, tag = 'input window, operand 14, single buffered']
    #allocation24 [shape = 's32[1]{0}', space=sflag, size = 0x4, scoped, tag = 'scoped memory for tpu_custom_call.1']
    #allocation25 [shape = 'u8[1024]{0}', space=vmem, size = 0x400, scoped, tag = 'input window, operand 15, single buffered']
    #allocation26 [shape = 'u8[16384]{0}', space=vmem, size = 0x4000, scoped, tag = 'input window, operand 16, single buffered']
    #allocation27 [shape = 's32[1]{0}', space=sflag, size = 0x4, scoped, tag = 'scoped memory for tpu_custom_call.1']
    #allocation28 [shape = 'u8[512]{0}', space=vmem, size = 0x400, scoped, tag = 'input window, operand 17, single buffered']
    #allocation29 [shape = 'u8[8192]{0}', space=vmem, size = 0x2000, scoped, tag = 'output window, operand 0, single buffered']
    %25 = vsyncpa [#allocation3], 0
    %26 = vsyncpa [#allocation6], 0
    %27 = vsyncpa [#allocation9], 0
    %28 = vsyncpa [#allocation12], 0
    %29 = vsyncpa [#allocation15], 0
    %30 = vsyncpa [#allocation18], 0
    %31 = vsyncpa [#allocation21], 0
    %32 = vsyncpa [#allocation24], 0
    %33 = vsyncpa [#allocation27], 0
    %34 = vsyncpa [#allocation4], 0
    // Predicated region
    $region2: #{tpu_custom_call.1} parent=1 // pred_check
      _
    $region3: #{tpu_custom_call.1} parent=1 // pred_check_branch
      %36 = sbr.rel (0) target = $region5
    $region4: #{tpu_custom_call.1} parent=1 // pred_region
      %s38 = ssub.s32 256, 256
      %39 = vsyncadd [#allocation3], %s38
      %s40 = sshll.u32 [#allocation2], 4
      %s41 = int_to_ptr.vmem [resolvable:$true] %s40
      %46 = dma.hbm_to_vmem [thread:$0]  %s0, 256, %s41, [#allocation3], 128, 128, 8
    $region5: #{tpu_custom_call.1} parent=1 // pred_fallthru
      _
    // Predicated region
    $region6: #{tpu_custom_call.1} parent=1 // pred_check
      _
    $region7: #{tpu_custom_call.1} parent=1 // pred_check_branch
      %48 = sbr.rel (0) target = $region9
    $region8: #{tpu_custom_call.1} parent=1 // pred_region
      %s50 = ssub.s32 512, 512
      %51 = vsyncadd [#allocation6], %s50
      %s52 = sshll.u32 [#allocation5], 4
      %s53 = int_to_ptr.vmem [resolvable:$true] %s52
      %58 = dma.hbm_to_vmem [thread:$0]  %s1, 512, %s53, [#allocation6], 128, 128, 8
    $region9: #{tpu_custom_call.1} parent=1 // pred_fallthru
      _
    // Predicated region
    $region10: #{tpu_custom_call.1} parent=1 // pred_check
      _
    $region11: #{tpu_custom_call.1} parent=1 // pred_check_branch
      %60 = sbr.rel (0) target = $region13
    $region12: #{tpu_custom_call.1} parent=1 // pred_region
      %s62 = ssub.s32 1024, 1024
      %63 = vsyncadd [#allocation6], %s62
      %s64 = sshll.u32 [#allocation7], 4
      %s65 = int_to_ptr.vmem [resolvable:$true] %s64
      %70 = dma.hbm_to_vmem [thread:$0]  %s2, 1024, %s65, [#allocation6], 128, 128, 8
    $region13: #{tpu_custom_call.1} parent=1 // pred_fallthru
      _
    // Predicated region
    $region14: #{tpu_custom_call.1} parent=1 // pred_check
      _
    $region15: #{tpu_custom_call.1} parent=1 // pred_check_branch
      %72 = sbr.rel (0) target = $region17
    $region16: #{tpu_custom_call.1} parent=1 // pred_region
      %s74 = ssub.s32 1024, 1024
      %75 = vsyncadd [#allocation9], %s74
      %s76 = sshll.u32 [#allocation8], 4
      %s77 = int_to_ptr.vmem [resolvable:$true] %s76
      %82 = dma.hbm_to_vmem [thread:$0]  %s3, 1024, %s77, [#allocation9], 128, 128, 8
    $region17: #{tpu_custom_call.1} parent=1 // pred_fallthru
      _
    // Predicated region
    $region18: #{tpu_custom_call.1} parent=1 // pred_check
      _
    $region19: #{tpu_custom_call.1} parent=1 // pred_check_branch
      %84 = sbr.rel (0) target = $region21
    $region20: #{tpu_custom_call.1} parent=1 // pred_region
      %s86 = ssub.s32 512, 512
      %87 = vsyncadd [#allocation9], %s86
      %s88 = sshll.u32 [#allocation10], 4
      %s89 = int_to_ptr.vmem [resolvable:$true] %s88
      %94 = dma.hbm_to_vmem [thread:$0]  %s4, 512, %s89, [#allocation9], 128, 128, 8
    $region21: #{tpu_custom_call.1} parent=1 // pred_fallthru
      _
    // Predicated region
    $region22: #{tpu_custom_call.1} parent=1 // pred_check
      _
    $region23: #{tpu_custom_call.1} parent=1 // pred_check_branch
      %96 = sbr.rel (0) target = $region25
    $region24: #{tpu_custom_call.1} parent=1 // pred_region
      %s98 = ssub.s32 16, 16
      %99 = vsyncadd [#allocation12], %s98
      %s101 = sshll.u32 [#allocation11], 4
      %s102 = int_to_ptr.vmem [resolvable:$true] %s101
      %104 = dma.hbm_to_vmem [thread:$0]  %s5, 16, %s102, [#allocation12]
    $region25: #{tpu_custom_call.1} parent=1 // pred_fallthru
      _
    // Predicated region
    $region26: #{tpu_custom_call.1} parent=1 // pred_check
      _
    $region27: #{tpu_custom_call.1} parent=1 // pred_check_branch
      %106 = sbr.rel (0) target = $region29
    $region28: #{tpu_custom_call.1} parent=1 // pred_region
      %s108 = ssub.s32 512, 512
      %109 = vsyncadd [#allocation12], %s108
      %s110 = sshll.u32 [#allocation13], 4
      %s111 = int_to_ptr.vmem [resolvable:$true] %s110
      %116 = dma.hbm_to_vmem [thread:$0]  %s6, 512, %s111, [#allocation12], 128, 128, 8
    $region29: #{tpu_custom_call.1} parent=1 // pred_fallthru
      _
    // Predicated region
    $region30: #{tpu_custom_call.1} parent=1 // pred_check
      _
    $region31: #{tpu_custom_call.1} parent=1 // pred_check_branch
      %118 = sbr.rel (0) target = $region33
    $region32: #{tpu_custom_call.1} parent=1 // pred_region
      %s120 = ssub.s32 16, 16
      %121 = vsyncadd [#allocation15], %s120
      %s123 = sshll.u32 [#allocation14], 4
      %s124 = int_to_ptr.vmem [resolvable:$true] %s123
      %126 = dma.hbm_to_vmem [thread:$0]  %s7, 16, %s124, [#allocation15]
    $region33: #{tpu_custom_call.1} parent=1 // pred_fallthru
      _
    // Predicated region
    $region34: #{tpu_custom_call.1} parent=1 // pred_check
      _
    $region35: #{tpu_custom_call.1} parent=1 // pred_check_branch
      %128 = sbr.rel (0) target = $region37
    $region36: #{tpu_custom_call.1} parent=1 // pred_region
      %s130 = ssub.s32 32, 32
      %131 = vsyncadd [#allocation15], %s130
      %s133 = sshll.u32 [#allocation16], 4
      %s134 = int_to_ptr.vmem [resolvable:$true] %s133
      %136 = dma.hbm_to_vmem [thread:$0]  %s8, 32, %s134, [#allocation15]
    $region37: #{tpu_custom_call.1} parent=1 // pred_fallthru
      _
    // Predicated region
    $region38: #{tpu_custom_call.1} parent=1 // pred_check
      _
    $region39: #{tpu_custom_call.1} parent=1 // pred_check_branch
      %138 = sbr.rel (0) target = $region41
    $region40: #{tpu_custom_call.1} parent=1 // pred_region
      _
    $region41: #{tpu_custom_call.1} parent=1 // pred_fallthru
      _
    // Predicated region
    $region42: #{tpu_custom_call.1} parent=1 // pred_check
      _
    $region43: #{tpu_custom_call.1} parent=1 // pred_check_branch
      %140 = sbr.rel (0) target = $region45
    $region44: #{tpu_custom_call.1} parent=1 // pred_region
      %s142 = ssub.s32 16, 16
      %143 = vsyncadd [#allocation18], %s142
      %s145 = sshll.u32 [#allocation17], 4
      %s146 = int_to_ptr.vmem [resolvable:$true] %s145
      %148 = dma.hbm_to_vmem [thread:$0]  %s10, 16, %s146, [#allocation18]
    $region45: #{tpu_custom_call.1} parent=1 // pred_fallthru
      _
    // Predicated region
    $region46: #{tpu_custom_call.1} parent=1 // pred_check
      _
    $region47: #{tpu_custom_call.1} parent=1 // pred_check_branch
      %150 = sbr.rel (0) target = $region49
    $region48: #{tpu_custom_call.1} parent=1 // pred_region
      %s152 = ssub.s32 512, 512
      %153 = vsyncadd [#allocation18], %s152
      %s154 = sshll.u32 [#allocation19], 4
      %s155 = int_to_ptr.vmem [resolvable:$true] %s154
      %160 = dma.hbm_to_vmem [thread:$0]  %s11, 512, %s155, [#allocation18], 128, 128, 8
    $region49: #{tpu_custom_call.1} parent=1 // pred_fallthru
      _
    // Predicated region
    $region50: #{tpu_custom_call.1} parent=1 // pred_check
      _
    $region51: #{tpu_custom_call.1} parent=1 // pred_check_branch
      %162 = sbr.rel (0) target = $region53
    $region52: #{tpu_custom_call.1} parent=1 // pred_region
      %s164 = ssub.s32 16, 16
      %165 = vsyncadd [#allocation21], %s164
      %s167 = sshll.u32 [#allocation20], 4
      %s168 = int_to_ptr.vmem [resolvable:$true] %s167
      %170 = dma.hbm_to_vmem [thread:$0]  %s12, 16, %s168, [#allocation21]
    $region53: #{tpu_custom_call.1} parent=1 // pred_fallthru
      _
    // Predicated region
    $region54: #{tpu_custom_call.1} parent=1 // pred_check
      _
    $region55: #{tpu_custom_call.1} parent=1 // pred_check_branch
      %172 = sbr.rel (0) target = $region57
    $region56: #{tpu_custom_call.1} parent=1 // pred_region
      %s174 = ssub.s32 512, 512
      %175 = vsyncadd [#allocation21], %s174
      %s176 = sshll.u32 [#allocation22], 4
      %s177 = int_to_ptr.vmem [resolvable:$true] %s176
      %182 = dma.hbm_to_vmem [thread:$0]  %s13, 512, %s177, [#allocation21], 128, 128, 8
    $region57: #{tpu_custom_call.1} parent=1 // pred_fallthru
      _
    // Predicated region
    $region58: #{tpu_custom_call.1} parent=1 // pred_check
      _
    $region59: #{tpu_custom_call.1} parent=1 // pred_check_branch
      %184 = sbr.rel (0) target = $region61
    $region60: #{tpu_custom_call.1} parent=1 // pred_region
      %s186 = ssub.s32 16, 16
      %187 = vsyncadd [#allocation24], %s186
      %s189 = sshll.u32 [#allocation23], 4
      %s190 = int_to_ptr.vmem [resolvable:$true] %s189
      %192 = dma.hbm_to_vmem [thread:$0]  %s14, 16, %s190, [#allocation24]
    $region61: #{tpu_custom_call.1} parent=1 // pred_fallthru
      _
    // Predicated region
    $region62: #{tpu_custom_call.1} parent=1 // pred_check
      _
    $region63: #{tpu_custom_call.1} parent=1 // pred_check_branch
      %194 = sbr.rel (0) target = $region65
    $region64: #{tpu_custom_call.1} parent=1 // pred_region
      %s196 = ssub.s32 32, 32
      %197 = vsyncadd [#allocation24], %s196
      %s199 = sshll.u32 [#allocation25], 4
      %s200 = int_to_ptr.vmem [resolvable:$true] %s199
      %202 = dma.hbm_to_vmem [thread:$0]  %s15, 32, %s200, [#allocation24]
    $region65: #{tpu_custom_call.1} parent=1 // pred_fallthru
      _
    // Predicated region
    $region66: #{tpu_custom_call.1} parent=1 // pred_check
      _
    $region67: #{tpu_custom_call.1} parent=1 // pred_check_branch
      %204 = sbr.rel (0) target = $region69
    $region68: #{tpu_custom_call.1} parent=1 // pred_region
      %s206 = ssub.s32 512, 512
      %207 = vsyncadd [#allocation27], %s206
      %s208 = sshll.u32 [#allocation26], 4
      %s209 = int_to_ptr.vmem [resolvable:$true] %s208
      %214 = dma.hbm_to_vmem [thread:$0]  %s16, 512, %s209, [#allocation27], 128, 128, 8
    $region69: #{tpu_custom_call.1} parent=1 // pred_fallthru
      _
    // Predicated region
    $region70: #{tpu_custom_call.1} parent=1 // pred_check
      _
    $region71: #{tpu_custom_call.1} parent=1 // pred_check_branch
      %216 = sbr.rel (0) target = $region73
    $region72: #{tpu_custom_call.1} parent=1 // pred_region
      %s218 = ssub.s32 16, 16
      %219 = vsyncadd [#allocation27], %s218
      %s221 = sshll.u32 [#allocation28], 4
      %s222 = int_to_ptr.vmem [resolvable:$true] %s221
      %224 = dma.hbm_to_vmem [thread:$0]  %s17, 16, %s222, [#allocation27]
    $region73: #{tpu_custom_call.1} parent=1 // pred_fallthru
      _
    // Predicated region
    $region74: #{tpu_custom_call.1} parent=1 // pred_check
      _
    $region75: #{tpu_custom_call.1} parent=1 // pred_check_branch
      %226 = sbr.rel (0) target = $region77
    $region76: #{tpu_custom_call.1} parent=1 // pred_region
      _
    $region77: #{tpu_custom_call.1} parent=1 // pred_fallthru
      _
    // Predicated region
    $region78: #{tpu_custom_call.1} parent=1 // pred_check
      _
    $region79: #{tpu_custom_call.1} parent=1 // pred_check_branch
      %228 = sbr.rel (0) target = $region81
    $region80: #{tpu_custom_call.1} parent=1 // pred_region
      _
    $region81: #{tpu_custom_call.1} parent=1 // pred_fallthru
      _
    // Predicated region
    $region82: #{tpu_custom_call.1} parent=1 // pred_check
      _
    $region83: #{tpu_custom_call.1} parent=1 // pred_check_branch
      %230 = sbr.rel (0) target = $region85
    $region84: #{tpu_custom_call.1} parent=1 // pred_region
      %231 = dma.done [#allocation3], 256
    $region85: #{tpu_custom_call.1} parent=1 // pred_fallthru
      _
    // Predicated region
    $region86: #{tpu_custom_call.1} parent=1 // pred_check
      _
    $region87: #{tpu_custom_call.1} parent=1 // pred_check_branch
      %233 = sbr.rel (0) target = $region89
    $region88: #{tpu_custom_call.1} parent=1 // pred_region
      %234 = dma.done [#allocation6], 512
    $region89: #{tpu_custom_call.1} parent=1 // pred_fallthru
      _
    // Predicated region
    $region90: #{tpu_custom_call.1} parent=1 // pred_check
      _
    $region91: #{tpu_custom_call.1} parent=1 // pred_check_branch
      %236 = sbr.rel (0) target = $region93
    $region92: #{tpu_custom_call.1} parent=1 // pred_region
      %237 = dma.done [#allocation6], 1024
    $region93: #{tpu_custom_call.1} parent=1 // pred_fallthru
      _
    // Predicated region
    $region94: #{tpu_custom_call.1} parent=1 // pred_check
      _
    $region95: #{tpu_custom_call.1} parent=1 // pred_check_branch
      %239 = sbr.rel (0) target = $region97
    $region96: #{tpu_custom_call.1} parent=1 // pred_region
      %240 = dma.done [#allocation9], 1024
    $region97: #{tpu_custom_call.1} parent=1 // pred_fallthru
      _
    // Predicated region
    $region98: #{tpu_custom_call.1} parent=1 // pred_check
      _
    $region99: #{tpu_custom_call.1} parent=1 // pred_check_branch
      %242 = sbr.rel (0) target = $region101
    $region100: #{tpu_custom_call.1} parent=1 // pred_region
      %243 = dma.done [#allocation9], 512
    $region101: #{tpu_custom_call.1} parent=1 // pred_fallthru
      _
    // Predicated region
    $region102: #{tpu_custom_call.1} parent=1 // pred_check
      _
    $region103: #{tpu_custom_call.1} parent=1 // pred_check_branch
      %245 = sbr.rel (0) target = $region105
    $region104: #{tpu_custom_call.1} parent=1 // pred_region
      %246 = dma.done [#allocation12], 16
    $region105: #{tpu_custom_call.1} parent=1 // pred_fallthru
      _
    // Predicated region
    $region106: #{tpu_custom_call.1} parent=1 // pred_check
      _
    $region107: #{tpu_custom_call.1} parent=1 // pred_check_branch
      %248 = sbr.rel (0) target = $region109
    $region108: #{tpu_custom_call.1} parent=1 // pred_region
      %249 = dma.done [#allocation12], 512
    $region109: #{tpu_custom_call.1} parent=1 // pred_fallthru
      _
    // Predicated region
    $region110: #{tpu_custom_call.1} parent=1 // pred_check
      _
    $region111: #{tpu_custom_call.1} parent=1 // pred_check_branch
      %251 = sbr.rel (0) target = $region113
    $region112: #{tpu_custom_call.1} parent=1 // pred_region
      %252 = dma.done [#allocation15], 16
    $region113: #{tpu_custom_call.1} parent=1 // pred_fallthru
      _
    // Predicated region
    $region114: #{tpu_custom_call.1} parent=1 // pred_check
      _
    $region115: #{tpu_custom_call.1} parent=1 // pred_check_branch
      %254 = sbr.rel (0) target = $region117
    $region116: #{tpu_custom_call.1} parent=1 // pred_region
      %255 = dma.done [#allocation15], 32
    $region117: #{tpu_custom_call.1} parent=1 // pred_fallthru
      _
    // Predicated region
    $region118: #{tpu_custom_call.1} parent=1 // pred_check
      _
    $region119: #{tpu_custom_call.1} parent=1 // pred_check_branch
      %257 = sbr.rel (0) target = $region121
    $region120: #{tpu_custom_call.1} parent=1 // pred_region
      %258 = dma.done [#allocation18], 16
    $region121: #{tpu_custom_call.1} parent=1 // pred_fallthru
      _
    // Predicated region
    $region122: #{tpu_custom_call.1} parent=1 // pred_check
      _
    $region123: #{tpu_custom_call.1} parent=1 // pred_check_branch
      %260 = sbr.rel (0) target = $region125
    $region124: #{tpu_custom_call.1} parent=1 // pred_region
      %261 = dma.done [#allocation18], 512
    $region125: #{tpu_custom_call.1} parent=1 // pred_fallthru
      _
    // Predicated region
    $region126: #{tpu_custom_call.1} parent=1 // pred_check
      _
    $region127: #{tpu_custom_call.1} parent=1 // pred_check_branch
      %263 = sbr.rel (0) target = $region129
    $region128: #{tpu_custom_call.1} parent=1 // pred_region
      %264 = dma.done [#allocation21], 16
    $region129: #{tpu_custom_call.1} parent=1 // pred_fallthru
      _
    // Predicated region
    $region130: #{tpu_custom_call.1} parent=1 // pred_check
      _
    $region131: #{tpu_custom_call.1} parent=1 // pred_check_branch
      %266 = sbr.rel (0) target = $region133
    $region132: #{tpu_custom_call.1} parent=1 // pred_region
      %267 = dma.done [#allocation21], 512
    $region133: #{tpu_custom_call.1} parent=1 // pred_fallthru
      _
    // Predicated region
    $region134: #{tpu_custom_call.1} parent=1 // pred_check
      _
    $region135: #{tpu_custom_call.1} parent=1 // pred_check_branch
      %269 = sbr.rel (0) target = $region137
    $region136: #{tpu_custom_call.1} parent=1 // pred_region
      %270 = dma.done [#allocation24], 16
    $region137: #{tpu_custom_call.1} parent=1 // pred_fallthru
      _
    // Predicated region
    $region138: #{tpu_custom_call.1} parent=1 // pred_check
      _
    $region139: #{tpu_custom_call.1} parent=1 // pred_check_branch
      %272 = sbr.rel (0) target = $region141
    $region140: #{tpu_custom_call.1} parent=1 // pred_region
      %273 = dma.done [#allocation24], 32
    $region141: #{tpu_custom_call.1} parent=1 // pred_fallthru
      _
    // Predicated region
    $region142: #{tpu_custom_call.1} parent=1 // pred_check
      _
    $region143: #{tpu_custom_call.1} parent=1 // pred_check_branch
      %275 = sbr.rel (0) target = $region145
    $region144: #{tpu_custom_call.1} parent=1 // pred_region
      %276 = dma.done [#allocation27], 512
    $region145: #{tpu_custom_call.1} parent=1 // pred_fallthru
      _
    // Predicated region
    $region146: #{tpu_custom_call.1} parent=1 // pred_check
      _
    $region147: #{tpu_custom_call.1} parent=1 // pred_check_branch
      %278 = sbr.rel (0) target = $region149
    $region148: #{tpu_custom_call.1} parent=1 // pred_region
      %279 = dma.done [#allocation27], 16
    $region149: #{tpu_custom_call.1} parent=1 // pred_fallthru
      _
    %v280 = vld [vmem:[#allocation2] sm:$0xff]
    %v281 = vld [vmem:[#allocation2 + $0x8] sm:$0xff]
    %v282 = vld [vmem:[#allocation5] sm:$0xff]
    %v283 = vld [vmem:[#allocation5 + $0x8] sm:$0xff]
    %v284 = vld [vmem:[#allocation5 + $0x10] sm:$0xff]
    %v285 = vld [vmem:[#allocation5 + $0x18] sm:$0xff]
    %v286 = vld [vmem:[#allocation10] sm:$0xff]
    %v287 = vld [vmem:[#allocation10 + $0x8] sm:$0xff]
    %v288 = vld [vmem:[#allocation10 + $0x10] sm:$0xff]
    %v289 = vld [vmem:[#allocation10 + $0x18] sm:$0xff]
    %v290 = vld [vmem:[#allocation11] sm:$0x1]
    %v292 = vlaneseq
    %v293 = vshrl.u32 %v292, 7
    %v294 = vsub.s32 0, %v293
    %v295 = vrot.slane %v290, %v294
    %vm297 = vcmask 261120
    %v299 = vsel %vm297, %v280, 0
    %v302 = vsel %vm297, %v281, 0
    %304 = vmatprep.subr.mxu0 0.0
    %305 = vmatpush1.msra.mxu0 %v286
    %306 = vmatprep.subr.mxu0 0.0
    %307 = vmatpush1.msra.mxu0 %v287
    %308 = vmatprep.subr.mxu0 0.0
    %309 = vmatpush1.msra.mxu0 %v288
    %310 = vmatprep.subr.mxu0 0.0
    %311 = vmatpush1.msra.mxu0 %v289
    %312 = vmatprep.subr.mxu0 0.0
    %313 = vmatpush1.msra.mxu0 0.0
    %314 = vmatprep.subr.mxu0 0.0
    %315 = vmatpush1.msra.mxu0 0.0
    %316 = vmatprep.subr.mxu0 0.0
    %317 = vmatpush1.msra.mxu0 0.0
    %318 = vmatprep.subr.mxu0 0.0
    %319 = vmatpush1.msra.mxu0 0.0
    %320 = vmatprep.subr.mxu0 0.0
    %321 = vmatpush1.msra.mxu0 0.0
    %322 = vmatprep.subr.mxu0 0.0
    %323 = vmatpush1.msra.mxu0 0.0
    %324 = vmatprep.subr.mxu0 0.0
    %325 = vmatpush1.msra.mxu0 0.0
    %326 = vmatprep.subr.mxu0 0.0
    %327 = vmatpush1.msra.mxu0 0.0
    %328 = vmatprep.subr.mxu0 0.0
    %329 = vmatpush1.msra.mxu0 0.0
    %330 = vmatprep.subr.mxu0 0.0
    %331 = vmatpush1.msra.mxu0 0.0
    %332 = vmatprep.subr.mxu0 0.0
    %333 = vmatpush1.msra.mxu0 0.0
    %334 = vmatprep.subr.mxu0 0.0
    %335 = vmatpush1.msra.mxu0 0.0
    %336 = vmatprep.subr.mxu0 0.0
    %337 = vmatpush1.msra.mxu0 0.0
    %338 = vmatprep.subr.mxu0 0.0
    %339 = vmatpush1.msra.mxu0 0.0
    %340 = vmatprep.subr.mxu0 0.0
    %341 = vmatpush1.msra.mxu0 0.0
    %342 = vmatprep.subr.mxu0 0.0
    %343 = vmatpush1.msra.mxu0 0.0
    %344 = vmatprep.subr.mxu0 0.0
    %345 = vmatpush1.msra.mxu0 0.0
    %346 = vmatprep.subr.mxu0 0.0
    %347 = vmatpush1.msra.mxu0 0.0
    %348 = vmatprep.subr.mxu0 0.0
    %349 = vmatpush1.msra.mxu0 0.0
    %350 = vmatprep.subr.mxu0 0.0
    %351 = vmatpush1.msra.mxu0 0.0
    %352 = vmatprep.subr.mxu0 0.0
    %353 = vmatpush1.msra.mxu0 0.0
    %354 = vmatprep.subr.mxu0 0.0
    %355 = vmatpush1.msra.mxu0 0.0
    %356 = vmatprep.subr.mxu0 0.0
    %357 = vmatpush1.msra.mxu0 0.0
    %358 = vmatprep.subr.mxu0 0.0
    %359 = vmatpush1.msra.mxu0 0.0
    %360 = vmatprep.subr.mxu0 0.0
    %361 = vmatpush1.msra.mxu0 0.0
    %362 = vmatprep.subr.mxu0 0.0
    %363 = vmatpush1.msra.mxu0 0.0
    %364 = vmatprep.subr.mxu0 0.0
    %365 = vmatpush1.msra.mxu0 0.0
    %366 = vmatprep.subr.mxu0 0.0
    %367 = vmatpush1.msra.mxu0 0.0
    %368 = vmatprep.mubr.f32.mxu0 0.0
    %369 = vmatmul.mubr.f32.gmra.mrb[0].mxu0 %v299
    %v370 = vpop.f32.mrb[0].mxu0
    %v371 = vadd.f32 %v295, %v370
    %v372 = vpop.f32.mrb[0].mxu0
    %373 = vmatprep.mubr.f32.mxu0 0.0
    %374 = vmatmul.mubr.f32.gmra.mrb[0].mxu0 %v302
    %v375 = vpop.f32.mrb[0].mxu0
    %v376 = vadd.f32 %v295, %v375
    %v377 = vpop.f32.mrb[0].mxu0
    %378 = vdwg.mxu0
    %v379 = vld [vmem:[#allocation7] sm:$0xff]
    %v380 = vld [vmem:[#allocation7 + $0x8] sm:$0xff]
    %v381 = vld [vmem:[#allocation7 + $0x10] sm:$0xff]
    %v382 = vld [vmem:[#allocation7 + $0x18] sm:$0xff]
    %v383 = vld [vmem:[#allocation7 + $0x20] sm:$0xff]
    %v384 = vld [vmem:[#allocation7 + $0x28] sm:$0xff]
    %v385 = vld [vmem:[#allocation7 + $0x30] sm:$0xff]
    %v386 = vld [vmem:[#allocation7 + $0x38] sm:$0xff]
    %389 = vrot.lane.b32.xlu0 %v371, 120
    %v390 = vpop.permute.xlu0 %389
    %391 = vrot.lane.b32.xlu0 %v376, 120
    %v392 = vpop.permute.xlu0 %391
    %393 = vrot.lane.b32.xlu0 %v371, 112
    %v394 = vpop.permute.xlu0 %393
    %395 = vrot.lane.b32.xlu0 %v376, 112
    %v396 = vpop.permute.xlu0 %395
    %397 = vrot.lane.b32.xlu0 %v371, 104
    %v398 = vpop.permute.xlu0 %397
    %399 = vrot.lane.b32.xlu0 %v376, 104
    %v400 = vpop.permute.xlu0 %399
    %401 = vrot.lane.b32.xlu0 %v371, 96
    %v402 = vpop.permute.xlu0 %401
    %403 = vrot.lane.b32.xlu0 %v376, 96
    %v404 = vpop.permute.xlu0 %403
    %405 = vrot.lane.b32.xlu0 %v390, 96
    %v406 = vpop.permute.xlu0 %405
    %407 = vrot.lane.b32.xlu0 %v392, 96
    %v408 = vpop.permute.xlu0 %407
    %409 = vrot.lane.b32.xlu0 %v394, 96
    %v410 = vpop.permute.xlu0 %409
    %411 = vrot.lane.b32.xlu0 %v396, 96
    %v412 = vpop.permute.xlu0 %411
    %413 = vrot.lane.b32.xlu0 %v398, 96
    %v414 = vpop.permute.xlu0 %413
    %415 = vrot.lane.b32.xlu0 %v400, 96
    %v416 = vpop.permute.xlu0 %415
    %vm417 = vcmask 64512
    %v418 = vsel %vm417, %v371, 0
    %v420 = vsel %vm417, %v376, 0
    %v422 = vsel %vm417, %v390, 0
    %v424 = vsel %vm417, %v392, 0
    %v426 = vsel %vm417, %v394, 0
    %v428 = vsel %vm417, %v396, 0
    %v430 = vsel %vm417, %v398, 0
    %v432 = vsel %vm417, %v400, 0
    %v434 = vsel %vm417, %v402, 0
    %v436 = vsel %vm417, %v404, 0
    %v438 = vsel %vm417, %v406, 0
    %v440 = vsel %vm417, %v408, 0
    %v442 = vsel %vm417, %v410, 0
    %v444 = vsel %vm417, %v412, 0
    %v446 = vsel %vm417, %v414, 0
    %v448 = vsel %vm417, %v416, 0
    %450 = vmatprep.subr.mxu0 0.0
    %451 = vmatpush1.xpose.msra.mxu0 %v434
    %452 = vmatprep.subr.mxu0 0.0
    %453 = vmatpush1.xpose.msra.mxu0 %v436
    %454 = vmatprep.subr.mxu0 0.0
    %455 = vmatpush1.xpose.msra.mxu0 %v438
    %456 = vmatprep.subr.mxu0 0.0
    %457 = vmatpush1.xpose.msra.mxu0 %v440
    %458 = vmatprep.subr.mxu0 0.0
    %459 = vmatpush1.xpose.msra.mxu0 %v442
    %460 = vmatprep.subr.mxu0 0.0
    %461 = vmatpush1.xpose.msra.mxu0 %v444
    %462 = vmatprep.subr.mxu0 0.0
    %463 = vmatpush1.xpose.msra.mxu0 %v446
    %464 = vmatprep.subr.mxu0 0.0
    %465 = vmatpush1.xpose.msra.mxu0 %v448
    %466 = vmatprep.subr.mxu0 0.0
    %467 = vmatpush1.xpose.msra.mxu0 0.0
    %468 = vmatprep.subr.mxu0 0.0
    %469 = vmatpush1.xpose.msra.mxu0 0.0
    %470 = vmatprep.subr.mxu0 0.0
    %471 = vmatpush1.xpose.msra.mxu0 0.0
    %472 = vmatprep.subr.mxu0 0.0
    %473 = vmatpush1.xpose.msra.mxu0 0.0
    %474 = vmatprep.subr.mxu0 0.0
    %475 = vmatpush1.xpose.msra.mxu0 0.0
    %476 = vmatprep.subr.mxu0 0.0
    %477 = vmatpush1.xpose.msra.mxu0 0.0
    %478 = vmatprep.subr.mxu0 0.0
    %479 = vmatpush1.xpose.msra.mxu0 0.0
    %480 = vmatprep.subr.mxu0 0.0
    %481 = vmatpush1.xpose.msra.mxu0 0.0
    %482 = vmatprep.subr.mxu0 0.0
    %483 = vmatpush1.xpose.msra.mxu0 0.0
    %484 = vmatprep.subr.mxu0 0.0
    %485 = vmatpush1.xpose.msra.mxu0 0.0
    %486 = vmatprep.subr.mxu0 0.0
    %487 = vmatpush1.xpose.msra.mxu0 0.0
    %488 = vmatprep.subr.mxu0 0.0
    %489 = vmatpush1.xpose.msra.mxu0 0.0
    %490 = vmatprep.subr.mxu0 0.0
    %491 = vmatpush1.xpose.msra.mxu0 0.0
    %492 = vmatprep.subr.mxu0 0.0
    %493 = vmatpush1.xpose.msra.mxu0 0.0
    %494 = vmatprep.subr.mxu0 0.0
    %495 = vmatpush1.xpose.msra.mxu0 0.0
    %496 = vmatprep.subr.mxu0 0.0
    %497 = vmatpush1.xpose.msra.mxu0 0.0
    %498 = vmatprep.subr.mxu0 0.0
    %499 = vmatpush1.xpose.msra.mxu0 0.0
    %500 = vmatprep.subr.mxu0 0.0
    %501 = vmatpush1.xpose.msra.mxu0 0.0
    %502 = vmatprep.subr.mxu0 0.0
    %503 = vmatpush1.xpose.msra.mxu0 0.0
    %504 = vmatprep.subr.mxu0 0.0
    %505 = vmatpush1.xpose.msra.mxu0 0.0
    %506 = vmatprep.subr.mxu0 0.0
    %507 = vmatpush1.xpose.msra.mxu0 0.0
    %508 = vmatprep.subr.mxu0 0.0
    %509 = vmatpush1.xpose.msra.mxu0 0.0
    %510 = vmatprep.subr.mxu0 0.0
    %511 = vmatpush1.xpose.msra.mxu0 0.0
    %512 = vmatprep.subr.mxu0 0.0
    %513 = vmatpush1.xpose.msra.mxu0 0.0
    %514 = vmatprep.mubr.f32.mxu0 0.0
    %515 = vmatmul.mubr.f32.gmra.mrb[0].mxu0 %v418
    %v516 = vpop.f32.mrb[0].mxu0
    %v517 = vadd.f32 %v379, %v516
    %v518 = vpop.f32.mrb[0].mxu0
    %519 = vmatprep.mubr.f32.mxu0 0.0
    %520 = vmatmul.mubr.f32.gmra.mrb[0].mxu0 %v420
    %v521 = vpop.f32.mrb[0].mxu0
    %v522 = vadd.f32 %v380, %v521
    %v523 = vpop.f32.mrb[0].mxu0
    %524 = vmatprep.mubr.f32.mxu0 0.0
    %525 = vmatmul.mubr.f32.gmra.mrb[0].mxu0 %v422
    %v526 = vpop.f32.mrb[0].mxu0
    %v527 = vadd.f32 %v381, %v526
    %v528 = vpop.f32.mrb[0].mxu0
    %529 = vmatprep.mubr.f32.mxu0 0.0
    %530 = vmatmul.mubr.f32.gmra.mrb[0].mxu0 %v424
    %v531 = vpop.f32.mrb[0].mxu0
    %v532 = vadd.f32 %v382, %v531
    %v533 = vpop.f32.mrb[0].mxu0
    %534 = vmatprep.mubr.f32.mxu0 0.0
    %535 = vmatmul.mubr.f32.gmra.mrb[0].mxu0 %v426
    %v536 = vpop.f32.mrb[0].mxu0
    %v537 = vadd.f32 %v383, %v536
    %v538 = vpop.f32.mrb[0].mxu0
    %539 = vmatprep.mubr.f32.mxu0 0.0
    %540 = vmatmul.mubr.f32.gmra.mrb[0].mxu0 %v428
    %v541 = vpop.f32.mrb[0].mxu0
    %v542 = vadd.f32 %v384, %v541
    %v543 = vpop.f32.mrb[0].mxu0
    %544 = vmatprep.mubr.f32.mxu0 0.0
    %545 = vmatmul.mubr.f32.gmra.mrb[0].mxu0 %v430
    %v546 = vpop.f32.mrb[0].mxu0
    %v547 = vadd.f32 %v385, %v546
    %v548 = vpop.f32.mrb[0].mxu0
    %549 = vmatprep.mubr.f32.mxu0 0.0
    %550 = vmatmul.mubr.f32.gmra.mrb[0].mxu0 %v432
    %v551 = vpop.f32.mrb[0].mxu0
    %v552 = vadd.f32 %v386, %v551
    %v553 = vpop.f32.mrb[0].mxu0
    %554 = vdwg.mxu0
    %vm555 = vcmask 523264
    %v556 = vsel %vm555, %v517, -inf
    %557 = vmax.xlane.f32.xlu0 %v556
    %v558 = vpop.xlane.xlu0 %557
    %v559 = vsel %vm555, %v522, -inf
    %560 = vmax.xlane.f32.xlu0 %v559
    %v561 = vpop.xlane.xlu0 %560
    %v562 = vsel %vm555, %v527, -inf
    %563 = vmax.xlane.f32.xlu0 %v562
    %v564 = vpop.xlane.xlu0 %563
    %v565 = vsel %vm555, %v532, -inf
    %566 = vmax.xlane.f32.xlu0 %v565
    %v567 = vpop.xlane.xlu0 %566
    %v568 = vsel %vm555, %v537, -inf
    %569 = vmax.xlane.f32.xlu0 %v568
    %v570 = vpop.xlane.xlu0 %569
    %v571 = vsel %vm555, %v542, -inf
    %572 = vmax.xlane.f32.xlu0 %v571
    %v573 = vpop.xlane.xlu0 %572
    %v574 = vsel %vm555, %v547, -inf
    %575 = vmax.xlane.f32.xlu0 %v574
    %v576 = vpop.xlane.xlu0 %575
    %v577 = vsel %vm555, %v552, -inf
    %578 = vmax.xlane.f32.xlu0 %v577
    %v579 = vpop.xlane.xlu0 %578
    %v580 = vsub.f32 %v517, %v558
    %v581 = vsub.f32 %v522, %v561
    %v582 = vsub.f32 %v527, %v564
    %v583 = vsub.f32 %v532, %v567
    %v584 = vsub.f32 %v537, %v570
    %v585 = vsub.f32 %v542, %v573
    %v586 = vsub.f32 %v547, %v576
    %v587 = vsub.f32 %v552, %v579
    %v588 = vmul.f32 %v580, 1.442695
    %v589 = vpow.pop %v588
    %v590 = vmul.f32 %v581, 1.442695
    %v591 = vpow.pop %v590
    %v592 = vmul.f32 %v582, 1.442695
    %v593 = vpow.pop %v592
    %v594 = vmul.f32 %v583, 1.442695
    %v595 = vpow.pop %v594
    %v596 = vmul.f32 %v584, 1.442695
    %v597 = vpow.pop %v596
    %v598 = vmul.f32 %v585, 1.442695
    %v599 = vpow.pop %v598
    %v600 = vmul.f32 %v586, 1.442695
    %v601 = vpow.pop %v600
    %v602 = vmul.f32 %v587, 1.442695
    %v603 = vpow.pop %v602
    %v604 = vsel %vm555, %v589, 0.0
    %605 = vadd.xlane.f32.xlu0 %v604
    %v606 = vpop.xlane.xlu0 %605
    %v607 = vsel %vm555, %v591, 0.0
    %608 = vadd.xlane.f32.xlu0 %v607
    %v609 = vpop.xlane.xlu0 %608
    %v610 = vsel %vm555, %v593, 0.0
    %611 = vadd.xlane.f32.xlu0 %v610
    %v612 = vpop.xlane.xlu0 %611
    %v613 = vsel %vm555, %v595, 0.0
    %614 = vadd.xlane.f32.xlu0 %v613
    %v615 = vpop.xlane.xlu0 %614
    %v616 = vsel %vm555, %v597, 0.0
    %617 = vadd.xlane.f32.xlu0 %v616
    %v618 = vpop.xlane.xlu0 %617
    %v619 = vsel %vm555, %v599, 0.0
    %620 = vadd.xlane.f32.xlu0 %v619
    %v621 = vpop.xlane.xlu0 %620
    %v622 = vsel %vm555, %v601, 0.0
    %623 = vadd.xlane.f32.xlu0 %v622
    %v624 = vpop.xlane.xlu0 %623
    %v625 = vsel %vm555, %v603, 0.0
    %626 = vadd.xlane.f32.xlu0 %v625
    %v627 = vpop.xlane.xlu0 %626
    %v628 = vrcp.pop %v606
    %v629 = vrcp.pop %v609
    %v630 = vrcp.pop %v612
    %v631 = vrcp.pop %v615
    %v632 = vrcp.pop %v618
    %v633 = vrcp.pop %v621
    %v634 = vrcp.pop %v624
    %v635 = vrcp.pop %v627
    %v636 = vmul.f32 %v589, %v628
    %v637 = vmul.f32 %v591, %v629
    %v638 = vmul.f32 %v593, %v630
    %v639 = vmul.f32 %v595, %v631
    %v640 = vmul.f32 %v597, %v632
    %v641 = vmul.f32 %v599, %v633
    %v642 = vmul.f32 %v601, %v634
    %v643 = vmul.f32 %v603, %v635
    %644 = vrot.lane.b32.xlu0 %v371, 64
    %v645 = vpop.permute.xlu0 %644
    %646 = vrot.lane.b32.xlu0 %v376, 64
    %v647 = vpop.permute.xlu0 %646
    %648 = vrot.lane.b32.xlu0 %v390, 64
    %v649 = vpop.permute.xlu0 %648
    %650 = vrot.lane.b32.xlu0 %v392, 64
    %v651 = vpop.permute.xlu0 %650
    %652 = vrot.lane.b32.xlu0 %v394, 64
    %v653 = vpop.permute.xlu0 %652
    %654 = vrot.lane.b32.xlu0 %v396, 64
    %v655 = vpop.permute.xlu0 %654
    %656 = vrot.lane.b32.xlu0 %v398, 64
    %v657 = vpop.permute.xlu0 %656
    %658 = vrot.lane.b32.xlu0 %v400, 64
    %v659 = vpop.permute.xlu0 %658
    %v669 = vsel %vm555, %v636, 0
    %v672 = vsel %vm555, %v637, 0
    %v675 = vsel %vm555, %v638, 0
    %v678 = vsel %vm555, %v639, 0
    %v681 = vsel %vm555, %v640, 0
    %v684 = vsel %vm555, %v641, 0
    %v687 = vsel %vm555, %v642, 0
    %v690 = vsel %vm555, %v643, 0
    %692 = vmatprep.subr.mxu0 0.0
    %693 = vmatpush1.msra.mxu0 %v645
    %694 = vmatprep.subr.mxu0 0.0
    %695 = vmatpush1.msra.mxu0 %v647
    %696 = vmatprep.subr.mxu0 0.0
    %697 = vmatpush1.msra.mxu0 %v649
    %698 = vmatprep.subr.mxu0 0.0
    %699 = vmatpush1.msra.mxu0 %v651
    %700 = vmatprep.subr.mxu0 0.0
    %701 = vmatpush1.msra.mxu0 %v653
    %702 = vmatprep.subr.mxu0 0.0
    %703 = vmatpush1.msra.mxu0 %v655
    %704 = vmatprep.subr.mxu0 0.0
    %705 = vmatpush1.msra.mxu0 %v657
    %706 = vmatprep.subr.mxu0 0.0
    %707 = vmatpush1.msra.mxu0 %v659
    %708 = vmatprep.subr.mxu0 0.0
    %709 = vmatpush1.msra.mxu0 0.0
    %710 = vmatprep.subr.mxu0 0.0
    %711 = vmatpush1.msra.mxu0 0.0
    %712 = vmatprep.subr.mxu0 0.0
    %713 = vmatpush1.msra.mxu0 0.0
    %714 = vmatprep.subr.mxu0 0.0
    %715 = vmatpush1.msra.mxu0 0.0
    %716 = vmatprep.subr.mxu0 0.0
    %717 = vmatpush1.msra.mxu0 0.0
    %718 = vmatprep.subr.mxu0 0.0
    %719 = vmatpush1.msra.mxu0 0.0
    %720 = vmatprep.subr.mxu0 0.0
    %721 = vmatpush1.msra.mxu0 0.0
    %722 = vmatprep.subr.mxu0 0.0
    %723 = vmatpush1.msra.mxu0 0.0
    %724 = vmatprep.subr.mxu0 0.0
    %725 = vmatpush1.msra.mxu0 0.0
    %726 = vmatprep.subr.mxu0 0.0
    %727 = vmatpush1.msra.mxu0 0.0
    %728 = vmatprep.subr.mxu0 0.0
    %729 = vmatpush1.msra.mxu0 0.0
    %730 = vmatprep.subr.mxu0 0.0
    %731 = vmatpush1.msra.mxu0 0.0
    %732 = vmatprep.subr.mxu0 0.0
    %733 = vmatpush1.msra.mxu0 0.0
    %734 = vmatprep.subr.mxu0 0.0
    %735 = vmatpush1.msra.mxu0 0.0
    %736 = vmatprep.subr.mxu0 0.0
    %737 = vmatpush1.msra.mxu0 0.0
    %738 = vmatprep.subr.mxu0 0.0
    %739 = vmatpush1.msra.mxu0 0.0
    %740 = vmatprep.subr.mxu0 0.0
    %741 = vmatpush1.msra.mxu0 0.0
    %742 = vmatprep.subr.mxu0 0.0
    %743 = vmatpush1.msra.mxu0 0.0
    %744 = vmatprep.subr.mxu0 0.0
    %745 = vmatpush1.msra.mxu0 0.0
    %746 = vmatprep.subr.mxu0 0.0
    %747 = vmatpush1.msra.mxu0 0.0
    %748 = vmatprep.subr.mxu0 0.0
    %749 = vmatpush1.msra.mxu0 0.0
    %750 = vmatprep.subr.mxu0 0.0
    %751 = vmatpush1.msra.mxu0 0.0
    %752 = vmatprep.subr.mxu0 0.0
    %753 = vmatpush1.msra.mxu0 0.0
    %754 = vmatprep.subr.mxu0 0.0
    %755 = vmatpush1.msra.mxu0 0.0
    %756 = vmatprep.mubr.f32.mxu0 0.0
    %757 = vmatmul.mubr.f32.gmra.mrb[0].mxu0 %v669
    %v758 = vpop.f32.mrb[0].mxu0
    %v759 = vadd.f32 0.0, %v758
    %v760 = vpop.f32.mrb[0].mxu0
    %761 = vmatprep.mubr.f32.mxu0 0.0
    %762 = vmatmul.mubr.f32.gmra.mrb[0].mxu0 %v672
    %v763 = vpop.f32.mrb[0].mxu0
    %v764 = vadd.f32 0.0, %v763
    %v765 = vpop.f32.mrb[0].mxu0
    %766 = vmatprep.mubr.f32.mxu0 0.0
    %767 = vmatmul.mubr.f32.gmra.mrb[0].mxu0 %v675
    %v768 = vpop.f32.mrb[0].mxu0
    %v769 = vadd.f32 0.0, %v768
    %v770 = vpop.f32.mrb[0].mxu0
    %771 = vmatprep.mubr.f32.mxu0 0.0
    %772 = vmatmul.mubr.f32.gmra.mrb[0].mxu0 %v678
    %v773 = vpop.f32.mrb[0].mxu0
    %v774 = vadd.f32 0.0, %v773
    %v775 = vpop.f32.mrb[0].mxu0
    %776 = vmatprep.mubr.f32.mxu0 0.0
    %777 = vmatmul.mubr.f32.gmra.mrb[0].mxu0 %v681
    %v778 = vpop.f32.mrb[0].mxu0
    %v779 = vadd.f32 0.0, %v778
    %v780 = vpop.f32.mrb[0].mxu0
    %781 = vmatprep.mubr.f32.mxu0 0.0
    %782 = vmatmul.mubr.f32.gmra.mrb[0].mxu0 %v684
    %v783 = vpop.f32.mrb[0].mxu0
    %v784 = vadd.f32 0.0, %v783
    %v785 = vpop.f32.mrb[0].mxu0
    %786 = vmatprep.mubr.f32.mxu0 0.0
    %787 = vmatmul.mubr.f32.gmra.mrb[0].mxu0 %v687
    %v788 = vpop.f32.mrb[0].mxu0
    %v789 = vadd.f32 0.0, %v788
    %v790 = vpop.f32.mrb[0].mxu0
    %791 = vmatprep.mubr.f32.mxu0 0.0
    %792 = vmatmul.mubr.f32.gmra.mrb[0].mxu0 %v690
    %v793 = vpop.f32.mrb[0].mxu0
    %v794 = vadd.f32 0.0, %v793
    %v795 = vpop.f32.mrb[0].mxu0
    %796 = vdwg.mxu0
    %v797 = vld [vmem:[#allocation13] sm:$0xff]
    %v798 = vld [vmem:[#allocation13 + $0x8] sm:$0xff]
    %v800 = vsel %vm417, %v769, 0
    %v803 = vsel %vm417, %v774, 0
    %805 = vmatprep.subr.mxu0 0.0
    %806 = vmatpush1.msra.mxu0 %v798
    %807 = vmatprep.subr.mxu0 0.0
    %808 = vmatpush1.msra.mxu0 0.0
    %809 = vmatprep.subr.mxu0 0.0
    %810 = vmatpush1.msra.mxu0 0.0
    %811 = vmatprep.subr.mxu0 0.0
    %812 = vmatpush1.msra.mxu0 0.0
    %813 = vmatprep.subr.mxu0 0.0
    %814 = vmatpush1.msra.mxu0 0.0
    %815 = vmatprep.subr.mxu0 0.0
    %816 = vmatpush1.msra.mxu0 0.0
    %817 = vmatprep.subr.mxu0 0.0
    %818 = vmatpush1.msra.mxu0 0.0
    %819 = vmatprep.subr.mxu0 0.0
    %820 = vmatpush1.msra.mxu0 0.0
    %821 = vmatprep.subr.mxu0 0.0
    %822 = vmatpush1.msra.mxu0 0.0
    %823 = vmatprep.subr.mxu0 0.0
    %824 = vmatpush1.msra.mxu0 0.0
    %825 = vmatprep.subr.mxu0 0.0
    %826 = vmatpush1.msra.mxu0 0.0
    %827 = vmatprep.subr.mxu0 0.0
    %828 = vmatpush1.msra.mxu0 0.0
    %829 = vmatprep.subr.mxu0 0.0
    %830 = vmatpush1.msra.mxu0 0.0
    %831 = vmatprep.subr.mxu0 0.0
    %832 = vmatpush1.msra.mxu0 0.0
    %833 = vmatprep.subr.mxu0 0.0
    %834 = vmatpush1.msra.mxu0 0.0
    %835 = vmatprep.subr.mxu0 0.0
    %836 = vmatpush1.msra.mxu0 0.0
    %837 = vmatprep.subr.mxu0 0.0
    %838 = vmatpush1.msra.mxu0 0.0
    %839 = vmatprep.subr.mxu0 0.0
    %840 = vmatpush1.msra.mxu0 0.0
    %841 = vmatprep.subr.mxu0 0.0
    %842 = vmatpush1.msra.mxu0 0.0
    %843 = vmatprep.subr.mxu0 0.0
    %844 = vmatpush1.msra.mxu0 0.0
    %845 = vmatprep.subr.mxu0 0.0
    %846 = vmatpush1.msra.mxu0 0.0
    %847 = vmatprep.subr.mxu0 0.0
    %848 = vmatpush1.msra.mxu0 0.0
    %849 = vmatprep.subr.mxu0 0.0
    %850 = vmatpush1.msra.mxu0 0.0
    %851 = vmatprep.subr.mxu0 0.0
    %852 = vmatpush1.msra.mxu0 0.0
    %853 = vmatprep.subr.mxu0 0.0
    %854 = vmatpush1.msra.mxu0 0.0
    %855 = vmatprep.subr.mxu0 0.0
    %856 = vmatpush1.msra.mxu0 0.0
    %857 = vmatprep.subr.mxu0 0.0
    %858 = vmatpush1.msra.mxu0 0.0
    %859 = vmatprep.subr.mxu0 0.0
    %860 = vmatpush1.msra.mxu0 0.0
    %861 = vmatprep.subr.mxu0 0.0
    %862 = vmatpush1.msra.mxu0 0.0
    %863 = vmatprep.subr.mxu0 0.0
    %864 = vmatpush1.msra.mxu0 0.0
    %865 = vmatprep.subr.mxu0 0.0
    %866 = vmatpush1.msra.mxu0 0.0
    %867 = vmatprep.subr.mxu0 0.0
    %868 = vmatpush1.msra.mxu0 0.0
    %869 = vmatprep.mubr.f32.mxu0 0.0
    %870 = vmatmul.mubr.f32.gmra.mrb[0].mxu0 %v800
    %v871 = vpop.f32.mrb[0].mxu0
    %v872 = vadd.f32 0.0, %v871
    %v873 = vpop.f32.mrb[0].mxu0
    %874 = vmatprep.mubr.f32.mxu0 0.0
    %875 = vmatmul.mubr.f32.gmra.mrb[0].mxu0 %v803
    %v876 = vpop.f32.mrb[0].mxu0
    %v877 = vadd.f32 0.0, %v876
    %v878 = vpop.f32.mrb[0].mxu0
    %879 = vdwg.mxu0
    %v881 = vsel %vm417, %v759, 0
    %v884 = vsel %vm417, %v764, 0
    %886 = vmatprep.subr.mxu0 0.0
    %887 = vmatpush1.msra.mxu0 %v797
    %888 = vmatprep.subr.mxu0 0.0
    %889 = vmatpush1.msra.mxu0 0.0
    %890 = vmatprep.subr.mxu0 0.0
    %891 = vmatpush1.msra.mxu0 0.0
    %892 = vmatprep.subr.mxu0 0.0
    %893 = vmatpush1.msra.mxu0 0.0
    %894 = vmatprep.subr.mxu0 0.0
    %895 = vmatpush1.msra.mxu0 0.0
    %896 = vmatprep.subr.mxu0 0.0
    %897 = vmatpush1.msra.mxu0 0.0
    %898 = vmatprep.subr.mxu0 0.0
    %899 = vmatpush1.msra.mxu0 0.0
    %900 = vmatprep.subr.mxu0 0.0
    %901 = vmatpush1.msra.mxu0 0.0
    %902 = vmatprep.subr.mxu0 0.0
    %903 = vmatpush1.msra.mxu0 0.0
    %904 = vmatprep.subr.mxu0 0.0
    %905 = vmatpush1.msra.mxu0 0.0
    %906 = vmatprep.subr.mxu0 0.0
    %907 = vmatpush1.msra.mxu0 0.0
    %908 = vmatprep.subr.mxu0 0.0
    %909 = vmatpush1.msra.mxu0 0.0
    %910 = vmatprep.subr.mxu0 0.0
    %911 = vmatpush1.msra.mxu0 0.0
    %912 = vmatprep.subr.mxu0 0.0
    %913 = vmatpush1.msra.mxu0 0.0
    %914 = vmatprep.subr.mxu0 0.0
    %915 = vmatpush1.msra.mxu0 0.0
    %916 = vmatprep.subr.mxu0 0.0
    %917 = vmatpush1.msra.mxu0 0.0
    %918 = vmatprep.subr.mxu0 0.0
    %919 = vmatpush1.msra.mxu0 0.0
    %920 = vmatprep.subr.mxu0 0.0
    %921 = vmatpush1.msra.mxu0 0.0
    %922 = vmatprep.subr.mxu0 0.0
    %923 = vmatpush1.msra.mxu0 0.0
    %924 = vmatprep.subr.mxu0 0.0
    %925 = vmatpush1.msra.mxu0 0.0
    %926 = vmatprep.subr.mxu0 0.0
    %927 = vmatpush1.msra.mxu0 0.0
    %928 = vmatprep.subr.mxu0 0.0
    %929 = vmatpush1.msra.mxu0 0.0
    %930 = vmatprep.subr.mxu0 0.0
    %931 = vmatpush1.msra.mxu0 0.0
    %932 = vmatprep.subr.mxu0 0.0
    %933 = vmatpush1.msra.mxu0 0.0
    %934 = vmatprep.subr.mxu0 0.0
    %935 = vmatpush1.msra.mxu0 0.0
    %936 = vmatprep.subr.mxu0 0.0
    %937 = vmatpush1.msra.mxu0 0.0
    %938 = vmatprep.subr.mxu0 0.0
    %939 = vmatpush1.msra.mxu0 0.0
    %940 = vmatprep.subr.mxu0 0.0
    %941 = vmatpush1.msra.mxu0 0.0
    %942 = vmatprep.subr.mxu0 0.0
    %943 = vmatpush1.msra.mxu0 0.0
    %944 = vmatprep.subr.mxu0 0.0
    %945 = vmatpush1.msra.mxu0 0.0
    %946 = vmatprep.subr.mxu0 0.0
    %947 = vmatpush1.msra.mxu0 0.0
    %948 = vmatprep.subr.mxu0 0.0
    %949 = vmatpush1.msra.mxu0 0.0
    %950 = vmatprep.mubr.f32.mxu0 0.0
    %951 = vmatmul.mubr.f32.gmra.mrb[0].mxu0 %v881
    %v952 = vpop.f32.mrb[0].mxu0
    %v953 = vadd.f32 %v872, %v952
    %v954 = vpop.f32.mrb[0].mxu0
    %955 = vmatprep.mubr.f32.mxu0 0.0
    %956 = vmatmul.mubr.f32.gmra.mrb[0].mxu0 %v884
    %v957 = vpop.f32.mrb[0].mxu0
    %v958 = vadd.f32 %v877, %v957
    %v959 = vpop.f32.mrb[0].mxu0
    %960 = vdwg.mxu0
    %v961 = vld [vmem:[#allocation13 + $0x10] sm:$0xff]
    %v963 = vsel %vm417, %v779, 0
    %v966 = vsel %vm417, %v784, 0
    %968 = vmatprep.subr.mxu0 0.0
    %969 = vmatpush1.msra.mxu0 %v961
    %970 = vmatprep.subr.mxu0 0.0
    %971 = vmatpush1.msra.mxu0 0.0
    %972 = vmatprep.subr.mxu0 0.0
    %973 = vmatpush1.msra.mxu0 0.0
    %974 = vmatprep.subr.mxu0 0.0
    %975 = vmatpush1.msra.mxu0 0.0
    %976 = vmatprep.subr.mxu0 0.0
    %977 = vmatpush1.msra.mxu0 0.0
    %978 = vmatprep.subr.mxu0 0.0
    %979 = vmatpush1.msra.mxu0 0.0
    %980 = vmatprep.subr.mxu0 0.0
    %981 = vmatpush1.msra.mxu0 0.0
    %982 = vmatprep.subr.mxu0 0.0
    %983 = vmatpush1.msra.mxu0 0.0
    %984 = vmatprep.subr.mxu0 0.0
    %985 = vmatpush1.msra.mxu0 0.0
    %986 = vmatprep.subr.mxu0 0.0
    %987 = vmatpush1.msra.mxu0 0.0
    %988 = vmatprep.subr.mxu0 0.0
    %989 = vmatpush1.msra.mxu0 0.0
    %990 = vmatprep.subr.mxu0 0.0
    %991 = vmatpush1.msra.mxu0 0.0
    %992 = vmatprep.subr.mxu0 0.0
    %993 = vmatpush1.msra.mxu0 0.0
    %994 = vmatprep.subr.mxu0 0.0
    %995 = vmatpush1.msra.mxu0 0.0
    %996 = vmatprep.subr.mxu0 0.0
    %997 = vmatpush1.msra.mxu0 0.0
    %998 = vmatprep.subr.mxu0 0.0
    %999 = vmatpush1.msra.mxu0 0.0
    %1000 = vmatprep.subr.mxu0 0.0
    %1001 = vmatpush1.msra.mxu0 0.0
    %1002 = vmatprep.subr.mxu0 0.0
    %1003 = vmatpush1.msra.mxu0 0.0
    %1004 = vmatprep.subr.mxu0 0.0
    %1005 = vmatpush1.msra.mxu0 0.0
    %1006 = vmatprep.subr.mxu0 0.0
    %1007 = vmatpush1.msra.mxu0 0.0
    %1008 = vmatprep.subr.mxu0 0.0
    %1009 = vmatpush1.msra.mxu0 0.0
    %1010 = vmatprep.subr.mxu0 0.0
    %1011 = vmatpush1.msra.mxu0 0.0
    %1012 = vmatprep.subr.mxu0 0.0
    %1013 = vmatpush1.msra.mxu0 0.0
    %1014 = vmatprep.subr.mxu0 0.0
    %1015 = vmatpush1.msra.mxu0 0.0
    %1016 = vmatprep.subr.mxu0 0.0
    %1017 = vmatpush1.msra.mxu0 0.0
    %1018 = vmatprep.subr.mxu0 0.0
    %1019 = vmatpush1.msra.mxu0 0.0
    %1020 = vmatprep.subr.mxu0 0.0
    %1021 = vmatpush1.msra.mxu0 0.0
    %1022 = vmatprep.subr.mxu0 0.0
    %1023 = vmatpush1.msra.mxu0 0.0
    %1024 = vmatprep.subr.mxu0 0.0
    %1025 = vmatpush1.msra.mxu0 0.0
    %1026 = vmatprep.subr.mxu0 0.0
    %1027 = vmatpush1.msra.mxu0 0.0
    %1028 = vmatprep.subr.mxu0 0.0
    %1029 = vmatpush1.msra.mxu0 0.0
    %1030 = vmatprep.subr.mxu0 0.0
    %1031 = vmatpush1.msra.mxu0 0.0
    %1032 = vmatprep.mubr.f32.mxu0 0.0
    %1033 = vmatmul.mubr.f32.gmra.mrb[0].mxu0 %v963
    %v1034 = vpop.f32.mrb[0].mxu0
    %v1035 = vadd.f32 0.0, %v1034
    %v1036 = vpop.f32.mrb[0].mxu0
    %1037 = vmatprep.mubr.f32.mxu0 0.0
    %1038 = vmatmul.mubr.f32.gmra.mrb[0].mxu0 %v966
    %v1039 = vpop.f32.mrb[0].mxu0
    %v1040 = vadd.f32 0.0, %v1039
    %v1041 = vpop.f32.mrb[0].mxu0
    %1042 = vdwg.mxu0
    %v1043 = vadd.f32 %v953, %v1035
    %v1044 = vadd.f32 %v958, %v1040
    %v1045 = vld [vmem:[#allocation13 + $0x18] sm:$0xff]
    %v1047 = vsel %vm417, %v789, 0
    %v1050 = vsel %vm417, %v794, 0
    %1052 = vmatprep.subr.mxu0 0.0
    %1053 = vmatpush1.msra.mxu0 %v1045
    %1054 = vmatprep.subr.mxu0 0.0
    %1055 = vmatpush1.msra.mxu0 0.0
    %1056 = vmatprep.subr.mxu0 0.0
    %1057 = vmatpush1.msra.mxu0 0.0
    %1058 = vmatprep.subr.mxu0 0.0
    %1059 = vmatpush1.msra.mxu0 0.0
    %1060 = vmatprep.subr.mxu0 0.0
    %1061 = vmatpush1.msra.mxu0 0.0
    %1062 = vmatprep.subr.mxu0 0.0
    %1063 = vmatpush1.msra.mxu0 0.0
    %1064 = vmatprep.subr.mxu0 0.0
    %1065 = vmatpush1.msra.mxu0 0.0
    %1066 = vmatprep.subr.mxu0 0.0
    %1067 = vmatpush1.msra.mxu0 0.0
    %1068 = vmatprep.subr.mxu0 0.0
    %1069 = vmatpush1.msra.mxu0 0.0
    %1070 = vmatprep.subr.mxu0 0.0
    %1071 = vmatpush1.msra.mxu0 0.0
    %1072 = vmatprep.subr.mxu0 0.0
    %1073 = vmatpush1.msra.mxu0 0.0
    %1074 = vmatprep.subr.mxu0 0.0
    %1075 = vmatpush1.msra.mxu0 0.0
    %1076 = vmatprep.subr.mxu0 0.0
    %1077 = vmatpush1.msra.mxu0 0.0
    %1078 = vmatprep.subr.mxu0 0.0
    %1079 = vmatpush1.msra.mxu0 0.0
    %1080 = vmatprep.subr.mxu0 0.0
    %1081 = vmatpush1.msra.mxu0 0.0
    %1082 = vmatprep.subr.mxu0 0.0
    %1083 = vmatpush1.msra.mxu0 0.0
    %1084 = vmatprep.subr.mxu0 0.0
    %1085 = vmatpush1.msra.mxu0 0.0
    %1086 = vmatprep.subr.mxu0 0.0
    %1087 = vmatpush1.msra.mxu0 0.0
    %1088 = vmatprep.subr.mxu0 0.0
    %1089 = vmatpush1.msra.mxu0 0.0
    %1090 = vmatprep.subr.mxu0 0.0
    %1091 = vmatpush1.msra.mxu0 0.0
    %1092 = vmatprep.subr.mxu0 0.0
    %1093 = vmatpush1.msra.mxu0 0.0
    %1094 = vmatprep.subr.mxu0 0.0
    %1095 = vmatpush1.msra.mxu0 0.0
    %1096 = vmatprep.subr.mxu0 0.0
    %1097 = vmatpush1.msra.mxu0 0.0
    %1098 = vmatprep.subr.mxu0 0.0
    %1099 = vmatpush1.msra.mxu0 0.0
    %1100 = vmatprep.subr.mxu0 0.0
    %1101 = vmatpush1.msra.mxu0 0.0
    %1102 = vmatprep.subr.mxu0 0.0
    %1103 = vmatpush1.msra.mxu0 0.0
    %1104 = vmatprep.subr.mxu0 0.0
    %1105 = vmatpush1.msra.mxu0 0.0
    %1106 = vmatprep.subr.mxu0 0.0
    %1107 = vmatpush1.msra.mxu0 0.0
    %1108 = vmatprep.subr.mxu0 0.0
    %1109 = vmatpush1.msra.mxu0 0.0
    %1110 = vmatprep.subr.mxu0 0.0
    %1111 = vmatpush1.msra.mxu0 0.0
    %1112 = vmatprep.subr.mxu0 0.0
    %1113 = vmatpush1.msra.mxu0 0.0
    %1114 = vmatprep.subr.mxu0 0.0
    %1115 = vmatpush1.msra.mxu0 0.0
    %1116 = vmatprep.mubr.f32.mxu0 0.0
    %1117 = vmatmul.mubr.f32.gmra.mrb[0].mxu0 %v1047
    %v1118 = vpop.f32.mrb[0].mxu0
    %v1119 = vadd.f32 0.0, %v1118
    %v1120 = vpop.f32.mrb[0].mxu0
    %1121 = vmatprep.mubr.f32.mxu0 0.0
    %1122 = vmatmul.mubr.f32.gmra.mrb[0].mxu0 %v1050
    %v1123 = vpop.f32.mrb[0].mxu0
    %v1124 = vadd.f32 0.0, %v1123
    %v1125 = vpop.f32.mrb[0].mxu0
    %1126 = vdwg.mxu0
    %v1127 = vadd.f32 %v1043, %v1119
    %v1128 = vadd.f32 %v1044, %v1124
    %v1129 = vld [vmem:[#allocation14] sm:$0x1]
    %v1131 = vlaneseq
    %v1132 = vshrl.u32 %v1131, 7
    %v1133 = vsub.s32 0, %v1132
    %v1134 = vrot.slane %v1129, %v1133
    %v1136 = vadd.f32 %v1127, %v1134
    %v1137 = vadd.f32 %v1128, %v1134
    %v1138 = vld [vmem:[#allocation16] sm:$0x1]
    %v1139 = vld [vmem:[#allocation16 + $0x1] sm:$0x1]
    %v1140 = vadd.f32 %v1136, %v280
    %v1141 = vadd.f32 %v1137, %v281
    %v1142 = vsel %vm297, %v1140, 0.0
    %1143 = vadd.xlane.f32.xlu0 %v1142
    %v1144 = vpop.xlane.xlu0 %1143
    %v1145 = vsel %vm297, %v1141, 0.0
    %1146 = vadd.xlane.f32.xlu0 %v1145
    %v1147 = vpop.xlane.xlu0 %1146
    %v1148 = vrcp.pop 32.0
    %v1149 = vmul.f32 %v1144, %v1148
    %v1150 = vmul.f32 %v1147, %v1148
    %v1151 = vmul.f32 %v1140, %v1140
    %v1152 = vmul.f32 %v1141, %v1141
    %v1153 = vsel %vm297, %v1151, 0.0
    %1154 = vadd.xlane.f32.xlu0 %v1153
    %v1155 = vpop.xlane.xlu0 %1154
    %v1156 = vsel %vm297, %v1152, 0.0
    %1157 = vadd.xlane.f32.xlu0 %v1156
    %v1158 = vpop.xlane.xlu0 %1157
    %v1159 = vmul.f32 %v1155, %v1148
    %v1160 = vmul.f32 %v1158, %v1148
    %v1161 = vmul.f32 %v1149, %v1149
    %v1162 = vmul.f32 %v1150, %v1150
    %v1163 = vsub.f32 %v1159, %v1161
    %v1164 = vsub.f32 %v1160, %v1162
    %v1165 = vsub.f32 %v1140, %v1149
    %v1166 = vsub.f32 %v1141, %v1150
    %v1167 = vadd.f32 %v1163, 1e-05
    %v1168 = vadd.f32 %v1164, 1e-05
    %v1169 = vrsqrt.pop %v1167
    %v1170 = vrsqrt.pop %v1168
    %v1171 = vmul.f32 %v1165, %v1169
    %v1172 = vmul.f32 %v1166, %v1170
    %v1173 = vlaneseq
    %v1174 = vshrl.u32 %v1173, 7
    %v1175 = vsub.s32 0, %v1174
    %v1176 = vrot.slane %v1138, %v1175
    %v1177 = vmul.f32 %v1171, %v1176
    %v1178 = vmul.f32 %v1172, %v1176
    %v1179 = vlaneseq
    %v1180 = vshrl.u32 %v1179, 7
    %v1181 = vsub.s32 0, %v1180
    %v1182 = vrot.slane %v1139, %v1181
    %v1183 = vadd.f32 %v1177, %v1182
    %v1184 = vadd.f32 %v1178, %v1182
    %v1185 = vld [vmem:[%s9] sm:$0xff]
    %v1186 = vld [vmem:[%s9 + $0x8] sm:$0xff]
    %v1187 = vld [vmem:[%s9 + $0x10] sm:$0xff]
    %v1188 = vld [vmem:[%s9 + $0x18] sm:$0xff]
    %v1189 = vld [vmem:[#allocation17] sm:$0x1]
    %v1191 = vlaneseq
    %v1192 = vshrl.u32 %v1191, 7
    %v1193 = vsub.s32 0, %v1192
    %v1194 = vrot.slane %v1189, %v1193
    %v1197 = vsel %vm297, %v1183, 0
    %v1200 = vsel %vm297, %v1184, 0
    %1202 = vmatprep.subr.mxu0 0.0
    %1203 = vmatpush1.msra.mxu0 %v1185
    %1204 = vmatprep.subr.mxu0 0.0
    %1205 = vmatpush1.msra.mxu0 %v1186
    %1206 = vmatprep.subr.mxu0 0.0
    %1207 = vmatpush1.msra.mxu0 %v1187
    %1208 = vmatprep.subr.mxu0 0.0
    %1209 = vmatpush1.msra.mxu0 %v1188
    %1210 = vmatprep.subr.mxu0 0.0
    %1211 = vmatpush1.msra.mxu0 0.0
    %1212 = vmatprep.subr.mxu0 0.0
    %1213 = vmatpush1.msra.mxu0 0.0
    %1214 = vmatprep.subr.mxu0 0.0
    %1215 = vmatpush1.msra.mxu0 0.0
    %1216 = vmatprep.subr.mxu0 0.0
    %1217 = vmatpush1.msra.mxu0 0.0
    %1218 = vmatprep.subr.mxu0 0.0
    %1219 = vmatpush1.msra.mxu0 0.0
    %1220 = vmatprep.subr.mxu0 0.0
    %1221 = vmatpush1.msra.mxu0 0.0
    %1222 = vmatprep.subr.mxu0 0.0
    %1223 = vmatpush1.msra.mxu0 0.0
    %1224 = vmatprep.subr.mxu0 0.0
    %1225 = vmatpush1.msra.mxu0 0.0
    %1226 = vmatprep.subr.mxu0 0.0
    %1227 = vmatpush1.msra.mxu0 0.0
    %1228 = vmatprep.subr.mxu0 0.0
    %1229 = vmatpush1.msra.mxu0 0.0
    %1230 = vmatprep.subr.mxu0 0.0
    %1231 = vmatpush1.msra.mxu0 0.0
    %1232 = vmatprep.subr.mxu0 0.0
    %1233 = vmatpush1.msra.mxu0 0.0
    %1234 = vmatprep.subr.mxu0 0.0
    %1235 = vmatpush1.msra.mxu0 0.0
    %1236 = vmatprep.subr.mxu0 0.0
    %1237 = vmatpush1.msra.mxu0 0.0
    %1238 = vmatprep.subr.mxu0 0.0
    %1239 = vmatpush1.msra.mxu0 0.0
    %1240 = vmatprep.subr.mxu0 0.0
    %1241 = vmatpush1.msra.mxu0 0.0
    %1242 = vmatprep.subr.mxu0 0.0
    %1243 = vmatpush1.msra.mxu0 0.0
    %1244 = vmatprep.subr.mxu0 0.0
    %1245 = vmatpush1.msra.mxu0 0.0
    %1246 = vmatprep.subr.mxu0 0.0
    %1247 = vmatpush1.msra.mxu0 0.0
    %1248 = vmatprep.subr.mxu0 0.0
    %1249 = vmatpush1.msra.mxu0 0.0
    %1250 = vmatprep.subr.mxu0 0.0
    %1251 = vmatpush1.msra.mxu0 0.0
    %1252 = vmatprep.subr.mxu0 0.0
    %1253 = vmatpush1.msra.mxu0 0.0
    %1254 = vmatprep.subr.mxu0 0.0
    %1255 = vmatpush1.msra.mxu0 0.0
    %1256 = vmatprep.subr.mxu0 0.0
    %1257 = vmatpush1.msra.mxu0 0.0
    %1258 = vmatprep.subr.mxu0 0.0
    %1259 = vmatpush1.msra.mxu0 0.0
    %1260 = vmatprep.subr.mxu0 0.0
    %1261 = vmatpush1.msra.mxu0 0.0
    %1262 = vmatprep.subr.mxu0 0.0
    %1263 = vmatpush1.msra.mxu0 0.0
    %1264 = vmatprep.subr.mxu0 0.0
    %1265 = vmatpush1.msra.mxu0 0.0
    %1266 = vmatprep.mubr.f32.mxu0 0.0
    %1267 = vmatmul.mubr.f32.gmra.mrb[0].mxu0 %v1197
    %v1268 = vpop.f32.mrb[0].mxu0
    %v1269 = vadd.f32 %v1194, %v1268
    %v1270 = vpop.f32.mrb[0].mxu0
    %1271 = vmatprep.mubr.f32.mxu0 0.0
    %1272 = vmatmul.mubr.f32.gmra.mrb[0].mxu0 %v1200
    %v1273 = vpop.f32.mrb[0].mxu0
    %v1274 = vadd.f32 %v1194, %v1273
    %v1275 = vpop.f32.mrb[0].mxu0
    %1276 = vdwg.mxu0
    %v1277 = vld [vmem:[#allocation19] sm:$0xff]
    %v1278 = vld [vmem:[#allocation19 + $0x8] sm:$0xff]
    %v1279 = vld [vmem:[#allocation19 + $0x10] sm:$0xff]
    %v1280 = vld [vmem:[#allocation19 + $0x18] sm:$0xff]
    %v1281 = vld [vmem:[#allocation20] sm:$0x1]
    %v1283 = vlaneseq
    %v1284 = vshrl.u32 %v1283, 7
    %v1285 = vsub.s32 0, %v1284
    %v1286 = vrot.slane %v1281, %v1285
    %v1289 = vsel %vm297, %v282, 0
    %v1292 = vsel %vm297, %v283, 0
    %v1295 = vsel %vm297, %v284, 0
    %v1298 = vsel %vm297, %v285, 0
    %1300 = vmatprep.subr.mxu0 0.0
    %1301 = vmatpush1.msra.mxu0 %v1277
    %1302 = vmatprep.subr.mxu0 0.0
    %1303 = vmatpush1.msra.mxu0 %v1278
    %1304 = vmatprep.subr.mxu0 0.0
    %1305 = vmatpush1.msra.mxu0 %v1279
    %1306 = vmatprep.subr.mxu0 0.0
    %1307 = vmatpush1.msra.mxu0 %v1280
    %1308 = vmatprep.subr.mxu0 0.0
    %1309 = vmatpush1.msra.mxu0 0.0
    %1310 = vmatprep.subr.mxu0 0.0
    %1311 = vmatpush1.msra.mxu0 0.0
    %1312 = vmatprep.subr.mxu0 0.0
    %1313 = vmatpush1.msra.mxu0 0.0
    %1314 = vmatprep.subr.mxu0 0.0
    %1315 = vmatpush1.msra.mxu0 0.0
    %1316 = vmatprep.subr.mxu0 0.0
    %1317 = vmatpush1.msra.mxu0 0.0
    %1318 = vmatprep.subr.mxu0 0.0
    %1319 = vmatpush1.msra.mxu0 0.0
    %1320 = vmatprep.subr.mxu0 0.0
    %1321 = vmatpush1.msra.mxu0 0.0
    %1322 = vmatprep.subr.mxu0 0.0
    %1323 = vmatpush1.msra.mxu0 0.0
    %1324 = vmatprep.subr.mxu0 0.0
    %1325 = vmatpush1.msra.mxu0 0.0
    %1326 = vmatprep.subr.mxu0 0.0
    %1327 = vmatpush1.msra.mxu0 0.0
    %1328 = vmatprep.subr.mxu0 0.0
    %1329 = vmatpush1.msra.mxu0 0.0
    %1330 = vmatprep.subr.mxu0 0.0
    %1331 = vmatpush1.msra.mxu0 0.0
    %1332 = vmatprep.subr.mxu0 0.0
    %1333 = vmatpush1.msra.mxu0 0.0
    %1334 = vmatprep.subr.mxu0 0.0
    %1335 = vmatpush1.msra.mxu0 0.0
    %1336 = vmatprep.subr.mxu0 0.0
    %1337 = vmatpush1.msra.mxu0 0.0
    %1338 = vmatprep.subr.mxu0 0.0
    %1339 = vmatpush1.msra.mxu0 0.0
    %1340 = vmatprep.subr.mxu0 0.0
    %1341 = vmatpush1.msra.mxu0 0.0
    %1342 = vmatprep.subr.mxu0 0.0
    %1343 = vmatpush1.msra.mxu0 0.0
    %1344 = vmatprep.subr.mxu0 0.0
    %1345 = vmatpush1.msra.mxu0 0.0
    %1346 = vmatprep.subr.mxu0 0.0
    %1347 = vmatpush1.msra.mxu0 0.0
    %1348 = vmatprep.subr.mxu0 0.0
    %1349 = vmatpush1.msra.mxu0 0.0
    %1350 = vmatprep.subr.mxu0 0.0
    %1351 = vmatpush1.msra.mxu0 0.0
    %1352 = vmatprep.subr.mxu0 0.0
    %1353 = vmatpush1.msra.mxu0 0.0
    %1354 = vmatprep.subr.mxu0 0.0
    %1355 = vmatpush1.msra.mxu0 0.0
    %1356 = vmatprep.subr.mxu0 0.0
    %1357 = vmatpush1.msra.mxu0 0.0
    %1358 = vmatprep.subr.mxu0 0.0
    %1359 = vmatpush1.msra.mxu0 0.0
    %1360 = vmatprep.subr.mxu0 0.0
    %1361 = vmatpush1.msra.mxu0 0.0
    %1362 = vmatprep.subr.mxu0 0.0
    %1363 = vmatpush1.msra.mxu0 0.0
    %1364 = vmatprep.mubr.f32.mxu0 0.0
    %1365 = vmatmul.mubr.f32.gmra.mrb[0].mxu0 %v1289
    %v1366 = vpop.f32.mrb[0].mxu0
    %v1367 = vadd.f32 %v1286, %v1366
    %v1368 = vpop.f32.mrb[0].mxu0
    %1369 = vmatprep.mubr.f32.mxu0 0.0
    %1370 = vmatmul.mubr.f32.gmra.mrb[0].mxu0 %v1292
    %v1371 = vpop.f32.mrb[0].mxu0
    %v1372 = vadd.f32 %v1286, %v1371
    %v1373 = vpop.f32.mrb[0].mxu0
    %1374 = vmatprep.mubr.f32.mxu0 0.0
    %1375 = vmatmul.mubr.f32.gmra.mrb[0].mxu0 %v1295
    %v1376 = vpop.f32.mrb[0].mxu0
    %v1377 = vadd.f32 %v1286, %v1376
    %v1378 = vpop.f32.mrb[0].mxu0
    %1379 = vmatprep.mubr.f32.mxu0 0.0
    %1380 = vmatmul.mubr.f32.gmra.mrb[0].mxu0 %v1298
    %v1381 = vpop.f32.mrb[0].mxu0
    %v1382 = vadd.f32 %v1286, %v1381
    %v1383 = vpop.f32.mrb[0].mxu0
    %1384 = vdwg.mxu0
    %v1385 = vld [vmem:[#allocation8] sm:$0xff]
    %v1386 = vld [vmem:[#allocation8 + $0x8] sm:$0xff]
    %v1387 = vld [vmem:[#allocation8 + $0x10] sm:$0xff]
    %v1388 = vld [vmem:[#allocation8 + $0x18] sm:$0xff]
    %v1389 = vld [vmem:[#allocation8 + $0x20] sm:$0xff]
    %v1390 = vld [vmem:[#allocation8 + $0x28] sm:$0xff]
    %v1391 = vld [vmem:[#allocation8 + $0x30] sm:$0xff]
    %v1392 = vld [vmem:[#allocation8 + $0x38] sm:$0xff]
    %1395 = vrot.lane.b32.xlu0 %v1269, 120
    %v1396 = vpop.permute.xlu0 %1395
    %1397 = vrot.lane.b32.xlu0 %v1274, 120
    %v1398 = vpop.permute.xlu0 %1397
    %1399 = vrot.lane.b32.xlu0 %v1269, 112
    %v1400 = vpop.permute.xlu0 %1399
    %1401 = vrot.lane.b32.xlu0 %v1274, 112
    %v1402 = vpop.permute.xlu0 %1401
    %1403 = vrot.lane.b32.xlu0 %v1269, 104
    %v1404 = vpop.permute.xlu0 %1403
    %1405 = vrot.lane.b32.xlu0 %v1274, 104
    %v1406 = vpop.permute.xlu0 %1405
    %1411 = vrot.lane.b32.xlu0 %v1367, 120
    %v1412 = vpop.permute.xlu0 %1411
    %1413 = vrot.lane.b32.xlu0 %v1372, 120
    %v1414 = vpop.permute.xlu0 %1413
    %1415 = vrot.lane.b32.xlu0 %v1377, 120
    %v1416 = vpop.permute.xlu0 %1415
    %1417 = vrot.lane.b32.xlu0 %v1382, 120
    %v1418 = vpop.permute.xlu0 %1417
    %1419 = vrot.lane.b32.xlu0 %v1367, 112
    %v1420 = vpop.permute.xlu0 %1419
    %1421 = vrot.lane.b32.xlu0 %v1372, 112
    %v1422 = vpop.permute.xlu0 %1421
    %1423 = vrot.lane.b32.xlu0 %v1377, 112
    %v1424 = vpop.permute.xlu0 %1423
    %1425 = vrot.lane.b32.xlu0 %v1382, 112
    %v1426 = vpop.permute.xlu0 %1425
    %1427 = vrot.lane.b32.xlu0 %v1367, 104
    %v1428 = vpop.permute.xlu0 %1427
    %1429 = vrot.lane.b32.xlu0 %v1372, 104
    %v1430 = vpop.permute.xlu0 %1429
    %1431 = vrot.lane.b32.xlu0 %v1377, 104
    %v1432 = vpop.permute.xlu0 %1431
    %1433 = vrot.lane.b32.xlu0 %v1382, 104
    %v1434 = vpop.permute.xlu0 %1433
    %v1435 = vsel %vm417, %v1269, 0
    %v1437 = vsel %vm417, %v1274, 0
    %v1439 = vsel %vm417, %v1396, 0
    %v1441 = vsel %vm417, %v1398, 0
    %v1443 = vsel %vm417, %v1400, 0
    %v1445 = vsel %vm417, %v1402, 0
    %v1447 = vsel %vm417, %v1404, 0
    %v1449 = vsel %vm417, %v1406, 0
    %v1451 = vsel %vm417, %v1367, 0
    %v1453 = vsel %vm417, %v1372, 0
    %v1455 = vsel %vm417, %v1377, 0
    %v1457 = vsel %vm417, %v1382, 0
    %v1459 = vsel %vm417, %v1412, 0
    %v1461 = vsel %vm417, %v1414, 0
    %v1463 = vsel %vm417, %v1416, 0
    %v1465 = vsel %vm417, %v1418, 0
    %v1467 = vsel %vm417, %v1420, 0
    %v1469 = vsel %vm417, %v1422, 0
    %v1471 = vsel %vm417, %v1424, 0
    %v1473 = vsel %vm417, %v1426, 0
    %v1475 = vsel %vm417, %v1428, 0
    %v1477 = vsel %vm417, %v1430, 0
    %v1479 = vsel %vm417, %v1432, 0
    %v1481 = vsel %vm417, %v1434, 0
    %1483 = vmatprep.subr.mxu0 0.0
    %1484 = vmatpush1.xpose.msra.mxu0 %v1451
    %1485 = vmatprep.subr.mxu0 0.0
    %1486 = vmatpush1.xpose.msra.mxu0 %v1453
    %1487 = vmatprep.subr.mxu0 0.0
    %1488 = vmatpush1.xpose.msra.mxu0 %v1455
    %1489 = vmatprep.subr.mxu0 0.0
    %1490 = vmatpush1.xpose.msra.mxu0 %v1457
    %1491 = vmatprep.subr.mxu0 0.0
    %1492 = vmatpush1.xpose.msra.mxu0 %v1459
    %1493 = vmatprep.subr.mxu0 0.0
    %1494 = vmatpush1.xpose.msra.mxu0 %v1461
    %1495 = vmatprep.subr.mxu0 0.0
    %1496 = vmatpush1.xpose.msra.mxu0 %v1463
    %1497 = vmatprep.subr.mxu0 0.0
    %1498 = vmatpush1.xpose.msra.mxu0 %v1465
    %1499 = vmatprep.subr.mxu0 0.0
    %1500 = vmatpush1.xpose.msra.mxu0 %v1467
    %1501 = vmatprep.subr.mxu0 0.0
    %1502 = vmatpush1.xpose.msra.mxu0 %v1469
    %1503 = vmatprep.subr.mxu0 0.0
    %1504 = vmatpush1.xpose.msra.mxu0 %v1471
    %1505 = vmatprep.subr.mxu0 0.0
    %1506 = vmatpush1.xpose.msra.mxu0 %v1473
    %1507 = vmatprep.subr.mxu0 0.0
    %1508 = vmatpush1.xpose.msra.mxu0 %v1475
    %1509 = vmatprep.subr.mxu0 0.0
    %1510 = vmatpush1.xpose.msra.mxu0 %v1477
    %1511 = vmatprep.subr.mxu0 0.0
    %1512 = vmatpush1.xpose.msra.mxu0 %v1479
    %1513 = vmatprep.subr.mxu0 0.0
    %1514 = vmatpush1.xpose.msra.mxu0 %v1481
    %1515 = vmatprep.subr.mxu0 0.0
    %1516 = vmatpush1.xpose.msra.mxu0 0.0
    %1517 = vmatprep.subr.mxu0 0.0
    %1518 = vmatpush1.xpose.msra.mxu0 0.0
    %1519 = vmatprep.subr.mxu0 0.0
    %1520 = vmatpush1.xpose.msra.mxu0 0.0
    %1521 = vmatprep.subr.mxu0 0.0
    %1522 = vmatpush1.xpose.msra.mxu0 0.0
    %1523 = vmatprep.subr.mxu0 0.0
    %1524 = vmatpush1.xpose.msra.mxu0 0.0
    %1525 = vmatprep.subr.mxu0 0.0
    %1526 = vmatpush1.xpose.msra.mxu0 0.0
    %1527 = vmatprep.subr.mxu0 0.0
    %1528 = vmatpush1.xpose.msra.mxu0 0.0
    %1529 = vmatprep.subr.mxu0 0.0
    %1530 = vmatpush1.xpose.msra.mxu0 0.0
    %1531 = vmatprep.subr.mxu0 0.0
    %1532 = vmatpush1.xpose.msra.mxu0 0.0
    %1533 = vmatprep.subr.mxu0 0.0
    %1534 = vmatpush1.xpose.msra.mxu0 0.0
    %1535 = vmatprep.subr.mxu0 0.0
    %1536 = vmatpush1.xpose.msra.mxu0 0.0
    %1537 = vmatprep.subr.mxu0 0.0
    %1538 = vmatpush1.xpose.msra.mxu0 0.0
    %1539 = vmatprep.subr.mxu0 0.0
    %1540 = vmatpush1.xpose.msra.mxu0 0.0
    %1541 = vmatprep.subr.mxu0 0.0
    %1542 = vmatpush1.xpose.msra.mxu0 0.0
    %1543 = vmatprep.subr.mxu0 0.0
    %1544 = vmatpush1.xpose.msra.mxu0 0.0
    %1545 = vmatprep.subr.mxu0 0.0
    %1546 = vmatpush1.xpose.msra.mxu0 0.0
    %1547 = vmatprep.mubr.f32.mxu0 0.0
    %1548 = vmatmul.mubr.f32.gmra.mrb[0].mxu0 %v1435
    %v1549 = vpop.f32.mrb[0].mxu0
    %v1550 = vadd.f32 %v1385, %v1549
    %v1551 = vpop.f32.mrb[0].mxu0
    %1552 = vmatprep.mubr.f32.mxu0 0.0
    %1553 = vmatmul.mubr.f32.gmra.mrb[0].mxu0 %v1437
    %v1554 = vpop.f32.mrb[0].mxu0
    %v1555 = vadd.f32 %v1386, %v1554
    %v1556 = vpop.f32.mrb[0].mxu0
    %1557 = vmatprep.mubr.f32.mxu0 0.0
    %1558 = vmatmul.mubr.f32.gmra.mrb[0].mxu0 %v1439
    %v1559 = vpop.f32.mrb[0].mxu0
    %v1560 = vadd.f32 %v1387, %v1559
    %v1561 = vpop.f32.mrb[0].mxu0
    %1562 = vmatprep.mubr.f32.mxu0 0.0
    %1563 = vmatmul.mubr.f32.gmra.mrb[0].mxu0 %v1441
    %v1564 = vpop.f32.mrb[0].mxu0
    %v1565 = vadd.f32 %v1388, %v1564
    %v1566 = vpop.f32.mrb[0].mxu0
    %1567 = vmatprep.mubr.f32.mxu0 0.0
    %1568 = vmatmul.mubr.f32.gmra.mrb[0].mxu0 %v1443
    %v1569 = vpop.f32.mrb[0].mxu0
    %v1570 = vadd.f32 %v1389, %v1569
    %v1571 = vpop.f32.mrb[0].mxu0
    %1572 = vmatprep.mubr.f32.mxu0 0.0
    %1573 = vmatmul.mubr.f32.gmra.mrb[0].mxu0 %v1445
    %v1574 = vpop.f32.mrb[0].mxu0
    %v1575 = vadd.f32 %v1390, %v1574
    %v1576 = vpop.f32.mrb[0].mxu0
    %1577 = vmatprep.mubr.f32.mxu0 0.0
    %1578 = vmatmul.mubr.f32.gmra.mrb[0].mxu0 %v1447
    %v1579 = vpop.f32.mrb[0].mxu0
    %v1580 = vadd.f32 %v1391, %v1579
    %v1581 = vpop.f32.mrb[0].mxu0
    %1582 = vmatprep.mubr.f32.mxu0 0.0
    %1583 = vmatmul.mubr.f32.gmra.mrb[0].mxu0 %v1449
    %v1584 = vpop.f32.mrb[0].mxu0
    %v1585 = vadd.f32 %v1392, %v1584
    %v1586 = vpop.f32.mrb[0].mxu0
    %1587 = vdwg.mxu0
    %1588 = vmax.xlane.f32.xlu0 %v1550
    %v1589 = vpop.xlane.xlu0 %1588
    %1590 = vmax.xlane.f32.xlu0 %v1555
    %v1591 = vpop.xlane.xlu0 %1590
    %1592 = vmax.xlane.f32.xlu0 %v1560
    %v1593 = vpop.xlane.xlu0 %1592
    %1594 = vmax.xlane.f32.xlu0 %v1565
    %v1595 = vpop.xlane.xlu0 %1594
    %1596 = vmax.xlane.f32.xlu0 %v1570
    %v1597 = vpop.xlane.xlu0 %1596
    %1598 = vmax.xlane.f32.xlu0 %v1575
    %v1599 = vpop.xlane.xlu0 %1598
    %1600 = vmax.xlane.f32.xlu0 %v1580
    %v1601 = vpop.xlane.xlu0 %1600
    %1602 = vmax.xlane.f32.xlu0 %v1585
    %v1603 = vpop.xlane.xlu0 %1602
    %v1604 = vsub.f32 %v1550, %v1589
    %v1605 = vsub.f32 %v1555, %v1591
    %v1606 = vsub.f32 %v1560, %v1593
    %v1607 = vsub.f32 %v1565, %v1595
    %v1608 = vsub.f32 %v1570, %v1597
    %v1609 = vsub.f32 %v1575, %v1599
    %v1610 = vsub.f32 %v1580, %v1601
    %v1611 = vsub.f32 %v1585, %v1603
    %v1612 = vmul.f32 %v1604, 1.442695
    %v1613 = vpow.pop %v1612
    %v1614 = vmul.f32 %v1605, 1.442695
    %v1615 = vpow.pop %v1614
    %v1616 = vmul.f32 %v1606, 1.442695
    %v1617 = vpow.pop %v1616
    %v1618 = vmul.f32 %v1607, 1.442695
    %v1619 = vpow.pop %v1618
    %v1620 = vmul.f32 %v1608, 1.442695
    %v1621 = vpow.pop %v1620
    %v1622 = vmul.f32 %v1609, 1.442695
    %v1623 = vpow.pop %v1622
    %v1624 = vmul.f32 %v1610, 1.442695
    %v1625 = vpow.pop %v1624
    %v1626 = vmul.f32 %v1611, 1.442695
    %v1627 = vpow.pop %v1626
    %1628 = vadd.xlane.f32.xlu0 %v1613
    %v1629 = vpop.xlane.xlu0 %1628
    %1630 = vadd.xlane.f32.xlu0 %v1615
    %v1631 = vpop.xlane.xlu0 %1630
    %1632 = vadd.xlane.f32.xlu0 %v1617
    %v1633 = vpop.xlane.xlu0 %1632
    %1634 = vadd.xlane.f32.xlu0 %v1619
    %v1635 = vpop.xlane.xlu0 %1634
    %1636 = vadd.xlane.f32.xlu0 %v1621
    %v1637 = vpop.xlane.xlu0 %1636
    %1638 = vadd.xlane.f32.xlu0 %v1623
    %v1639 = vpop.xlane.xlu0 %1638
    %1640 = vadd.xlane.f32.xlu0 %v1625
    %v1641 = vpop.xlane.xlu0 %1640
    %1642 = vadd.xlane.f32.xlu0 %v1627
    %v1643 = vpop.xlane.xlu0 %1642
    %v1644 = vrcp.pop %v1629
    %v1645 = vrcp.pop %v1631
    %v1646 = vrcp.pop %v1633
    %v1647 = vrcp.pop %v1635
    %v1648 = vrcp.pop %v1637
    %v1649 = vrcp.pop %v1639
    %v1650 = vrcp.pop %v1641
    %v1651 = vrcp.pop %v1643
    %v1652 = vmul.f32 %v1613, %v1644
    %v1653 = vmul.f32 %v1615, %v1645
    %v1654 = vmul.f32 %v1617, %v1646
    %v1655 = vmul.f32 %v1619, %v1647
    %v1656 = vmul.f32 %v1621, %v1648
    %v1657 = vmul.f32 %v1623, %v1649
    %v1658 = vmul.f32 %v1625, %v1650
    %v1659 = vmul.f32 %v1627, %v1651
    %1660 = vrot.lane.b32.xlu0 %v1367, 96
    %v1661 = vpop.permute.xlu0 %1660
    %1662 = vrot.lane.b32.xlu0 %v1372, 96
    %v1663 = vpop.permute.xlu0 %1662
    %1664 = vrot.lane.b32.xlu0 %v1377, 96
    %v1665 = vpop.permute.xlu0 %1664
    %1666 = vrot.lane.b32.xlu0 %v1382, 96
    %v1667 = vpop.permute.xlu0 %1666
    %1668 = vrot.lane.b32.xlu0 %v1412, 96
    %v1669 = vpop.permute.xlu0 %1668
    %1670 = vrot.lane.b32.xlu0 %v1414, 96
    %v1671 = vpop.permute.xlu0 %1670
    %1672 = vrot.lane.b32.xlu0 %v1416, 96
    %v1673 = vpop.permute.xlu0 %1672
    %1674 = vrot.lane.b32.xlu0 %v1418, 96
    %v1675 = vpop.permute.xlu0 %1674
    %1676 = vrot.lane.b32.xlu0 %v1420, 96
    %v1677 = vpop.permute.xlu0 %1676
    %1678 = vrot.lane.b32.xlu0 %v1422, 96
    %v1679 = vpop.permute.xlu0 %1678
    %1680 = vrot.lane.b32.xlu0 %v1424, 96
    %v1681 = vpop.permute.xlu0 %1680
    %1682 = vrot.lane.b32.xlu0 %v1426, 96
    %v1683 = vpop.permute.xlu0 %1682
    %1684 = vrot.lane.b32.xlu0 %v1428, 96
    %v1685 = vpop.permute.xlu0 %1684
    %1686 = vrot.lane.b32.xlu0 %v1430, 96
    %v1687 = vpop.permute.xlu0 %1686
    %1688 = vrot.lane.b32.xlu0 %v1432, 96
    %v1689 = vpop.permute.xlu0 %1688
    %1690 = vrot.lane.b32.xlu0 %v1434, 96
    %v1691 = vpop.permute.xlu0 %1690
    %1708 = vmatprep.subr.mxu0 0.0
    %1709 = vmatpush1.msra.mxu0 %v1661
    %1710 = vmatprep.subr.mxu0 0.0
    %1711 = vmatpush1.msra.mxu0 %v1663
    %1712 = vmatprep.subr.mxu0 0.0
    %1713 = vmatpush1.msra.mxu0 %v1665
    %1714 = vmatprep.subr.mxu0 0.0
    %1715 = vmatpush1.msra.mxu0 %v1667
    %1716 = vmatprep.subr.mxu0 0.0
    %1717 = vmatpush1.msra.mxu0 %v1669
    %1718 = vmatprep.subr.mxu0 0.0
    %1719 = vmatpush1.msra.mxu0 %v1671
    %1720 = vmatprep.subr.mxu0 0.0
    %1721 = vmatpush1.msra.mxu0 %v1673
    %1722 = vmatprep.subr.mxu0 0.0
    %1723 = vmatpush1.msra.mxu0 %v1675
    %1724 = vmatprep.subr.mxu0 0.0
    %1725 = vmatpush1.msra.mxu0 %v1677
    %1726 = vmatprep.subr.mxu0 0.0
    %1727 = vmatpush1.msra.mxu0 %v1679
    %1728 = vmatprep.subr.mxu0 0.0
    %1729 = vmatpush1.msra.mxu0 %v1681
    %1730 = vmatprep.subr.mxu0 0.0
    %1731 = vmatpush1.msra.mxu0 %v1683
    %1732 = vmatprep.subr.mxu0 0.0
    %1733 = vmatpush1.msra.mxu0 %v1685
    %1734 = vmatprep.subr.mxu0 0.0
    %1735 = vmatpush1.msra.mxu0 %v1687
    %1736 = vmatprep.subr.mxu0 0.0
    %1737 = vmatpush1.msra.mxu0 %v1689
    %1738 = vmatprep.subr.mxu0 0.0
    %1739 = vmatpush1.msra.mxu0 %v1691
    %1740 = vmatprep.subr.mxu0 0.0
    %1741 = vmatpush1.msra.mxu0 0.0
    %1742 = vmatprep.subr.mxu0 0.0
    %1743 = vmatpush1.msra.mxu0 0.0
    %1744 = vmatprep.subr.mxu0 0.0
    %1745 = vmatpush1.msra.mxu0 0.0
    %1746 = vmatprep.subr.mxu0 0.0
    %1747 = vmatpush1.msra.mxu0 0.0
    %1748 = vmatprep.subr.mxu0 0.0
    %1749 = vmatpush1.msra.mxu0 0.0
    %1750 = vmatprep.subr.mxu0 0.0
    %1751 = vmatpush1.msra.mxu0 0.0
    %1752 = vmatprep.subr.mxu0 0.0
    %1753 = vmatpush1.msra.mxu0 0.0
    %1754 = vmatprep.subr.mxu0 0.0
    %1755 = vmatpush1.msra.mxu0 0.0
    %1756 = vmatprep.subr.mxu0 0.0
    %1757 = vmatpush1.msra.mxu0 0.0
    %1758 = vmatprep.subr.mxu0 0.0
    %1759 = vmatpush1.msra.mxu0 0.0
    %1760 = vmatprep.subr.mxu0 0.0
    %1761 = vmatpush1.msra.mxu0 0.0
    %1762 = vmatprep.subr.mxu0 0.0
    %1763 = vmatpush1.msra.mxu0 0.0
    %1764 = vmatprep.subr.mxu0 0.0
    %1765 = vmatpush1.msra.mxu0 0.0
    %1766 = vmatprep.subr.mxu0 0.0
    %1767 = vmatpush1.msra.mxu0 0.0
    %1768 = vmatprep.subr.mxu0 0.0
    %1769 = vmatpush1.msra.mxu0 0.0
    %1770 = vmatprep.subr.mxu0 0.0
    %1771 = vmatpush1.msra.mxu0 0.0
    %1772 = vmatprep.mubr.f32.mxu0 0.0
    %1773 = vmatmul.mubr.f32.gmra.mrb[0].mxu0 %v1652
    %v1774 = vpop.f32.mrb[0].mxu0
    %v1775 = vadd.f32 0.0, %v1774
    %v1776 = vpop.f32.mrb[0].mxu0
    %1777 = vmatprep.mubr.f32.mxu0 0.0
    %1778 = vmatmul.mubr.f32.gmra.mrb[0].mxu0 %v1653
    %v1779 = vpop.f32.mrb[0].mxu0
    %v1780 = vadd.f32 0.0, %v1779
    %v1781 = vpop.f32.mrb[0].mxu0
    %1782 = vmatprep.mubr.f32.mxu0 0.0
    %1783 = vmatmul.mubr.f32.gmra.mrb[0].mxu0 %v1654
    %v1784 = vpop.f32.mrb[0].mxu0
    %v1785 = vadd.f32 0.0, %v1784
    %v1786 = vpop.f32.mrb[0].mxu0
    %1787 = vmatprep.mubr.f32.mxu0 0.0
    %1788 = vmatmul.mubr.f32.gmra.mrb[0].mxu0 %v1655
    %v1789 = vpop.f32.mrb[0].mxu0
    %v1790 = vadd.f32 0.0, %v1789
    %v1791 = vpop.f32.mrb[0].mxu0
    %1792 = vmatprep.mubr.f32.mxu0 0.0
    %1793 = vmatmul.mubr.f32.gmra.mrb[0].mxu0 %v1656
    %v1794 = vpop.f32.mrb[0].mxu0
    %v1795 = vadd.f32 0.0, %v1794
    %v1796 = vpop.f32.mrb[0].mxu0
    %1797 = vmatprep.mubr.f32.mxu0 0.0
    %1798 = vmatmul.mubr.f32.gmra.mrb[0].mxu0 %v1657
    %v1799 = vpop.f32.mrb[0].mxu0
    %v1800 = vadd.f32 0.0, %v1799
    %v1801 = vpop.f32.mrb[0].mxu0
    %1802 = vmatprep.mubr.f32.mxu0 0.0
    %1803 = vmatmul.mubr.f32.gmra.mrb[0].mxu0 %v1658
    %v1804 = vpop.f32.mrb[0].mxu0
    %v1805 = vadd.f32 0.0, %v1804
    %v1806 = vpop.f32.mrb[0].mxu0
    %1807 = vmatprep.mubr.f32.mxu0 0.0
    %1808 = vmatmul.mubr.f32.gmra.mrb[0].mxu0 %v1659
    %v1809 = vpop.f32.mrb[0].mxu0
    %v1810 = vadd.f32 0.0, %v1809
    %v1811 = vpop.f32.mrb[0].mxu0
    %1812 = vdwg.mxu0
    %v1813 = vld [vmem:[#allocation22] sm:$0xff]
    %v1814 = vld [vmem:[#allocation22 + $0x8] sm:$0xff]
    %v1816 = vsel %vm417, %v1785, 0
    %v1819 = vsel %vm417, %v1790, 0
    %1821 = vmatprep.subr.mxu0 0.0
    %1822 = vmatpush1.msra.mxu0 %v1814
    %1823 = vmatprep.subr.mxu0 0.0
    %1824 = vmatpush1.msra.mxu0 0.0
    %1825 = vmatprep.subr.mxu0 0.0
    %1826 = vmatpush1.msra.mxu0 0.0
    %1827 = vmatprep.subr.mxu0 0.0
    %1828 = vmatpush1.msra.mxu0 0.0
    %1829 = vmatprep.subr.mxu0 0.0
    %1830 = vmatpush1.msra.mxu0 0.0
    %1831 = vmatprep.subr.mxu0 0.0
    %1832 = vmatpush1.msra.mxu0 0.0
    %1833 = vmatprep.subr.mxu0 0.0
    %1834 = vmatpush1.msra.mxu0 0.0
    %1835 = vmatprep.subr.mxu0 0.0
    %1836 = vmatpush1.msra.mxu0 0.0
    %1837 = vmatprep.subr.mxu0 0.0
    %1838 = vmatpush1.msra.mxu0 0.0
    %1839 = vmatprep.subr.mxu0 0.0
    %1840 = vmatpush1.msra.mxu0 0.0
    %1841 = vmatprep.subr.mxu0 0.0
    %1842 = vmatpush1.msra.mxu0 0.0
    %1843 = vmatprep.subr.mxu0 0.0
    %1844 = vmatpush1.msra.mxu0 0.0
    %1845 = vmatprep.subr.mxu0 0.0
    %1846 = vmatpush1.msra.mxu0 0.0
    %1847 = vmatprep.subr.mxu0 0.0
    %1848 = vmatpush1.msra.mxu0 0.0
    %1849 = vmatprep.subr.mxu0 0.0
    %1850 = vmatpush1.msra.mxu0 0.0
    %1851 = vmatprep.subr.mxu0 0.0
    %1852 = vmatpush1.msra.mxu0 0.0
    %1853 = vmatprep.subr.mxu0 0.0
    %1854 = vmatpush1.msra.mxu0 0.0
    %1855 = vmatprep.subr.mxu0 0.0
    %1856 = vmatpush1.msra.mxu0 0.0
    %1857 = vmatprep.subr.mxu0 0.0
    %1858 = vmatpush1.msra.mxu0 0.0
    %1859 = vmatprep.subr.mxu0 0.0
    %1860 = vmatpush1.msra.mxu0 0.0
    %1861 = vmatprep.subr.mxu0 0.0
    %1862 = vmatpush1.msra.mxu0 0.0
    %1863 = vmatprep.subr.mxu0 0.0
    %1864 = vmatpush1.msra.mxu0 0.0
    %1865 = vmatprep.subr.mxu0 0.0
    %1866 = vmatpush1.msra.mxu0 0.0
    %1867 = vmatprep.subr.mxu0 0.0
    %1868 = vmatpush1.msra.mxu0 0.0
    %1869 = vmatprep.subr.mxu0 0.0
    %1870 = vmatpush1.msra.mxu0 0.0
    %1871 = vmatprep.subr.mxu0 0.0
    %1872 = vmatpush1.msra.mxu0 0.0
    %1873 = vmatprep.subr.mxu0 0.0
    %1874 = vmatpush1.msra.mxu0 0.0
    %1875 = vmatprep.subr.mxu0 0.0
    %1876 = vmatpush1.msra.mxu0 0.0
    %1877 = vmatprep.subr.mxu0 0.0
    %1878 = vmatpush1.msra.mxu0 0.0
    %1879 = vmatprep.subr.mxu0 0.0
    %1880 = vmatpush1.msra.mxu0 0.0
    %1881 = vmatprep.subr.mxu0 0.0
    %1882 = vmatpush1.msra.mxu0 0.0
    %1883 = vmatprep.subr.mxu0 0.0
    %1884 = vmatpush1.msra.mxu0 0.0
    %1885 = vmatprep.mubr.f32.mxu0 0.0
    %1886 = vmatmul.mubr.f32.gmra.mrb[0].mxu0 %v1816
    %v1887 = vpop.f32.mrb[0].mxu0
    %v1888 = vadd.f32 0.0, %v1887
    %v1889 = vpop.f32.mrb[0].mxu0
    %1890 = vmatprep.mubr.f32.mxu0 0.0
    %1891 = vmatmul.mubr.f32.gmra.mrb[0].mxu0 %v1819
    %v1892 = vpop.f32.mrb[0].mxu0
    %v1893 = vadd.f32 0.0, %v1892
    %v1894 = vpop.f32.mrb[0].mxu0
    %1895 = vdwg.mxu0
    %v1897 = vsel %vm417, %v1775, 0
    %v1900 = vsel %vm417, %v1780, 0
    %1902 = vmatprep.subr.mxu0 0.0
    %1903 = vmatpush1.msra.mxu0 %v1813
    %1904 = vmatprep.subr.mxu0 0.0
    %1905 = vmatpush1.msra.mxu0 0.0
    %1906 = vmatprep.subr.mxu0 0.0
    %1907 = vmatpush1.msra.mxu0 0.0
    %1908 = vmatprep.subr.mxu0 0.0
    %1909 = vmatpush1.msra.mxu0 0.0
    %1910 = vmatprep.subr.mxu0 0.0
    %1911 = vmatpush1.msra.mxu0 0.0
    %1912 = vmatprep.subr.mxu0 0.0
    %1913 = vmatpush1.msra.mxu0 0.0
    %1914 = vmatprep.subr.mxu0 0.0
    %1915 = vmatpush1.msra.mxu0 0.0
    %1916 = vmatprep.subr.mxu0 0.0
    %1917 = vmatpush1.msra.mxu0 0.0
    %1918 = vmatprep.subr.mxu0 0.0
    %1919 = vmatpush1.msra.mxu0 0.0
    %1920 = vmatprep.subr.mxu0 0.0
    %1921 = vmatpush1.msra.mxu0 0.0
    %1922 = vmatprep.subr.mxu0 0.0
    %1923 = vmatpush1.msra.mxu0 0.0
    %1924 = vmatprep.subr.mxu0 0.0
    %1925 = vmatpush1.msra.mxu0 0.0
    %1926 = vmatprep.subr.mxu0 0.0
    %1927 = vmatpush1.msra.mxu0 0.0
    %1928 = vmatprep.subr.mxu0 0.0
    %1929 = vmatpush1.msra.mxu0 0.0
    %1930 = vmatprep.subr.mxu0 0.0
    %1931 = vmatpush1.msra.mxu0 0.0
    %1932 = vmatprep.subr.mxu0 0.0
    %1933 = vmatpush1.msra.mxu0 0.0
    %1934 = vmatprep.subr.mxu0 0.0
    %1935 = vmatpush1.msra.mxu0 0.0
    %1936 = vmatprep.subr.mxu0 0.0
    %1937 = vmatpush1.msra.mxu0 0.0
    %1938 = vmatprep.subr.mxu0 0.0
    %1939 = vmatpush1.msra.mxu0 0.0
    %1940 = vmatprep.subr.mxu0 0.0
    %1941 = vmatpush1.msra.mxu0 0.0
    %1942 = vmatprep.subr.mxu0 0.0
    %1943 = vmatpush1.msra.mxu0 0.0
    %1944 = vmatprep.subr.mxu0 0.0
    %1945 = vmatpush1.msra.mxu0 0.0
    %1946 = vmatprep.subr.mxu0 0.0
    %1947 = vmatpush1.msra.mxu0 0.0
    %1948 = vmatprep.subr.mxu0 0.0
    %1949 = vmatpush1.msra.mxu0 0.0
    %1950 = vmatprep.subr.mxu0 0.0
    %1951 = vmatpush1.msra.mxu0 0.0
    %1952 = vmatprep.subr.mxu0 0.0
    %1953 = vmatpush1.msra.mxu0 0.0
    %1954 = vmatprep.subr.mxu0 0.0
    %1955 = vmatpush1.msra.mxu0 0.0
    %1956 = vmatprep.subr.mxu0 0.0
    %1957 = vmatpush1.msra.mxu0 0.0
    %1958 = vmatprep.subr.mxu0 0.0
    %1959 = vmatpush1.msra.mxu0 0.0
    %1960 = vmatprep.subr.mxu0 0.0
    %1961 = vmatpush1.msra.mxu0 0.0
    %1962 = vmatprep.subr.mxu0 0.0
    %1963 = vmatpush1.msra.mxu0 0.0
    %1964 = vmatprep.subr.mxu0 0.0
    %1965 = vmatpush1.msra.mxu0 0.0
    %1966 = vmatprep.mubr.f32.mxu0 0.0
    %1967 = vmatmul.mubr.f32.gmra.mrb[0].mxu0 %v1897
    %v1968 = vpop.f32.mrb[0].mxu0
    %v1969 = vadd.f32 %v1888, %v1968
    %v1970 = vpop.f32.mrb[0].mxu0
    %1971 = vmatprep.mubr.f32.mxu0 0.0
    %1972 = vmatmul.mubr.f32.gmra.mrb[0].mxu0 %v1900
    %v1973 = vpop.f32.mrb[0].mxu0
    %v1974 = vadd.f32 %v1893, %v1973
    %v1975 = vpop.f32.mrb[0].mxu0
    %1976 = vdwg.mxu0
    %v1977 = vld [vmem:[#allocation22 + $0x10] sm:$0xff]
    %v1979 = vsel %vm417, %v1795, 0
    %v1982 = vsel %vm417, %v1800, 0
    %1984 = vmatprep.subr.mxu0 0.0
    %1985 = vmatpush1.msra.mxu0 %v1977
    %1986 = vmatprep.subr.mxu0 0.0
    %1987 = vmatpush1.msra.mxu0 0.0
    %1988 = vmatprep.subr.mxu0 0.0
    %1989 = vmatpush1.msra.mxu0 0.0
    %1990 = vmatprep.subr.mxu0 0.0
    %1991 = vmatpush1.msra.mxu0 0.0
    %1992 = vmatprep.subr.mxu0 0.0
    %1993 = vmatpush1.msra.mxu0 0.0
    %1994 = vmatprep.subr.mxu0 0.0
    %1995 = vmatpush1.msra.mxu0 0.0
    %1996 = vmatprep.subr.mxu0 0.0
    %1997 = vmatpush1.msra.mxu0 0.0
    %1998 = vmatprep.subr.mxu0 0.0
    %1999 = vmatpush1.msra.mxu0 0.0
    %2000 = vmatprep.subr.mxu0 0.0
    %2001 = vmatpush1.msra.mxu0 0.0
    %2002 = vmatprep.subr.mxu0 0.0
    %2003 = vmatpush1.msra.mxu0 0.0
    %2004 = vmatprep.subr.mxu0 0.0
    %2005 = vmatpush1.msra.mxu0 0.0
    %2006 = vmatprep.subr.mxu0 0.0
    %2007 = vmatpush1.msra.mxu0 0.0
    %2008 = vmatprep.subr.mxu0 0.0
    %2009 = vmatpush1.msra.mxu0 0.0
    %2010 = vmatprep.subr.mxu0 0.0
    %2011 = vmatpush1.msra.mxu0 0.0
    %2012 = vmatprep.subr.mxu0 0.0
    %2013 = vmatpush1.msra.mxu0 0.0
    %2014 = vmatprep.subr.mxu0 0.0
    %2015 = vmatpush1.msra.mxu0 0.0
    %2016 = vmatprep.subr.mxu0 0.0
    %2017 = vmatpush1.msra.mxu0 0.0
    %2018 = vmatprep.subr.mxu0 0.0
    %2019 = vmatpush1.msra.mxu0 0.0
    %2020 = vmatprep.subr.mxu0 0.0
    %2021 = vmatpush1.msra.mxu0 0.0
    %2022 = vmatprep.subr.mxu0 0.0
    %2023 = vmatpush1.msra.mxu0 0.0
    %2024 = vmatprep.subr.mxu0 0.0
    %2025 = vmatpush1.msra.mxu0 0.0
    %2026 = vmatprep.subr.mxu0 0.0
    %2027 = vmatpush1.msra.mxu0 0.0
    %2028 = vmatprep.subr.mxu0 0.0
    %2029 = vmatpush1.msra.mxu0 0.0
    %2030 = vmatprep.subr.mxu0 0.0
    %2031 = vmatpush1.msra.mxu0 0.0
    %2032 = vmatprep.subr.mxu0 0.0
    %2033 = vmatpush1.msra.mxu0 0.0
    %2034 = vmatprep.subr.mxu0 0.0
    %2035 = vmatpush1.msra.mxu0 0.0
    %2036 = vmatprep.subr.mxu0 0.0
    %2037 = vmatpush1.msra.mxu0 0.0
    %2038 = vmatprep.subr.mxu0 0.0
    %2039 = vmatpush1.msra.mxu0 0.0
    %2040 = vmatprep.subr.mxu0 0.0
    %2041 = vmatpush1.msra.mxu0 0.0
    %2042 = vmatprep.subr.mxu0 0.0
    %2043 = vmatpush1.msra.mxu0 0.0
    %2044 = vmatprep.subr.mxu0 0.0
    %2045 = vmatpush1.msra.mxu0 0.0
    %2046 = vmatprep.subr.mxu0 0.0
    %2047 = vmatpush1.msra.mxu0 0.0
    %2048 = vmatprep.mubr.f32.mxu0 0.0
    %2049 = vmatmul.mubr.f32.gmra.mrb[0].mxu0 %v1979
    %v2050 = vpop.f32.mrb[0].mxu0
    %v2051 = vadd.f32 0.0, %v2050
    %v2052 = vpop.f32.mrb[0].mxu0
    %2053 = vmatprep.mubr.f32.mxu0 0.0
    %2054 = vmatmul.mubr.f32.gmra.mrb[0].mxu0 %v1982
    %v2055 = vpop.f32.mrb[0].mxu0
    %v2056 = vadd.f32 0.0, %v2055
    %v2057 = vpop.f32.mrb[0].mxu0
    %2058 = vdwg.mxu0
    %v2059 = vadd.f32 %v1969, %v2051
    %v2060 = vadd.f32 %v1974, %v2056
    %v2061 = vld [vmem:[#allocation22 + $0x18] sm:$0xff]
    %v2063 = vsel %vm417, %v1805, 0
    %v2066 = vsel %vm417, %v1810, 0
    %2068 = vmatprep.subr.mxu0 0.0
    %2069 = vmatpush1.msra.mxu0 %v2061
    %2070 = vmatprep.subr.mxu0 0.0
    %2071 = vmatpush1.msra.mxu0 0.0
    %2072 = vmatprep.subr.mxu0 0.0
    %2073 = vmatpush1.msra.mxu0 0.0
    %2074 = vmatprep.subr.mxu0 0.0
    %2075 = vmatpush1.msra.mxu0 0.0
    %2076 = vmatprep.subr.mxu0 0.0
    %2077 = vmatpush1.msra.mxu0 0.0
    %2078 = vmatprep.subr.mxu0 0.0
    %2079 = vmatpush1.msra.mxu0 0.0
    %2080 = vmatprep.subr.mxu0 0.0
    %2081 = vmatpush1.msra.mxu0 0.0
    %2082 = vmatprep.subr.mxu0 0.0
    %2083 = vmatpush1.msra.mxu0 0.0
    %2084 = vmatprep.subr.mxu0 0.0
    %2085 = vmatpush1.msra.mxu0 0.0
    %2086 = vmatprep.subr.mxu0 0.0
    %2087 = vmatpush1.msra.mxu0 0.0
    %2088 = vmatprep.subr.mxu0 0.0
    %2089 = vmatpush1.msra.mxu0 0.0
    %2090 = vmatprep.subr.mxu0 0.0
    %2091 = vmatpush1.msra.mxu0 0.0
    %2092 = vmatprep.subr.mxu0 0.0
    %2093 = vmatpush1.msra.mxu0 0.0
    %2094 = vmatprep.subr.mxu0 0.0
    %2095 = vmatpush1.msra.mxu0 0.0
    %2096 = vmatprep.subr.mxu0 0.0
    %2097 = vmatpush1.msra.mxu0 0.0
    %2098 = vmatprep.subr.mxu0 0.0
    %2099 = vmatpush1.msra.mxu0 0.0
    %2100 = vmatprep.subr.mxu0 0.0
    %2101 = vmatpush1.msra.mxu0 0.0
    %2102 = vmatprep.subr.mxu0 0.0
    %2103 = vmatpush1.msra.mxu0 0.0
    %2104 = vmatprep.subr.mxu0 0.0
    %2105 = vmatpush1.msra.mxu0 0.0
    %2106 = vmatprep.subr.mxu0 0.0
    %2107 = vmatpush1.msra.mxu0 0.0
    %2108 = vmatprep.subr.mxu0 0.0
    %2109 = vmatpush1.msra.mxu0 0.0
    %2110 = vmatprep.subr.mxu0 0.0
    %2111 = vmatpush1.msra.mxu0 0.0
    %2112 = vmatprep.subr.mxu0 0.0
    %2113 = vmatpush1.msra.mxu0 0.0
    %2114 = vmatprep.subr.mxu0 0.0
    %2115 = vmatpush1.msra.mxu0 0.0
    %2116 = vmatprep.subr.mxu0 0.0
    %2117 = vmatpush1.msra.mxu0 0.0
    %2118 = vmatprep.subr.mxu0 0.0
    %2119 = vmatpush1.msra.mxu0 0.0
    %2120 = vmatprep.subr.mxu0 0.0
    %2121 = vmatpush1.msra.mxu0 0.0
    %2122 = vmatprep.subr.mxu0 0.0
    %2123 = vmatpush1.msra.mxu0 0.0
    %2124 = vmatprep.subr.mxu0 0.0
    %2125 = vmatpush1.msra.mxu0 0.0
    %2126 = vmatprep.subr.mxu0 0.0
    %2127 = vmatpush1.msra.mxu0 0.0
    %2128 = vmatprep.subr.mxu0 0.0
    %2129 = vmatpush1.msra.mxu0 0.0
    %2130 = vmatprep.subr.mxu0 0.0
    %2131 = vmatpush1.msra.mxu0 0.0
    %2132 = vmatprep.mubr.f32.mxu0 0.0
    %2133 = vmatmul.mubr.f32.gmra.mrb[0].mxu0 %v2063
    %v2134 = vpop.f32.mrb[0].mxu0
    %v2135 = vadd.f32 0.0, %v2134
    %v2136 = vpop.f32.mrb[0].mxu0
    %2137 = vmatprep.mubr.f32.mxu0 0.0
    %2138 = vmatmul.mubr.f32.gmra.mrb[0].mxu0 %v2066
    %v2139 = vpop.f32.mrb[0].mxu0
    %v2140 = vadd.f32 0.0, %v2139
    %v2141 = vpop.f32.mrb[0].mxu0
    %2142 = vdwg.mxu0
    %v2143 = vadd.f32 %v2059, %v2135
    %v2144 = vadd.f32 %v2060, %v2140
    %v2145 = vld [vmem:[#allocation23] sm:$0x1]
    %v2147 = vlaneseq
    %v2148 = vshrl.u32 %v2147, 7
    %v2149 = vsub.s32 0, %v2148
    %v2150 = vrot.slane %v2145, %v2149
    %v2152 = vadd.f32 %v2143, %v2150
    %v2153 = vadd.f32 %v2144, %v2150
    %v2154 = vld [vmem:[#allocation25] sm:$0x1]
    %v2155 = vld [vmem:[#allocation25 + $0x1] sm:$0x1]
    %v2156 = vadd.f32 %v2152, %v1183
    %v2157 = vadd.f32 %v2153, %v1184
    %v2158 = vsel %vm297, %v2156, 0.0
    %2159 = vadd.xlane.f32.xlu0 %v2158
    %v2160 = vpop.xlane.xlu0 %2159
    %v2161 = vsel %vm297, %v2157, 0.0
    %2162 = vadd.xlane.f32.xlu0 %v2161
    %v2163 = vpop.xlane.xlu0 %2162
    %v2164 = vmul.f32 %v2160, %v1148
    %v2165 = vmul.f32 %v2163, %v1148
    %v2166 = vmul.f32 %v2156, %v2156
    %v2167 = vmul.f32 %v2157, %v2157
    %v2168 = vsel %vm297, %v2166, 0.0
    %2169 = vadd.xlane.f32.xlu0 %v2168
    %v2170 = vpop.xlane.xlu0 %2169
    %v2171 = vsel %vm297, %v2167, 0.0
    %2172 = vadd.xlane.f32.xlu0 %v2171
    %v2173 = vpop.xlane.xlu0 %2172
    %v2174 = vmul.f32 %v2170, %v1148
    %v2175 = vmul.f32 %v2173, %v1148
    %v2176 = vmul.f32 %v2164, %v2164
    %v2177 = vmul.f32 %v2165, %v2165
    %v2178 = vsub.f32 %v2174, %v2176
    %v2179 = vsub.f32 %v2175, %v2177
    %v2180 = vsub.f32 %v2156, %v2164
    %v2181 = vsub.f32 %v2157, %v2165
    %v2182 = vadd.f32 %v2178, 1e-05
    %v2183 = vadd.f32 %v2179, 1e-05
    %v2184 = vrsqrt.pop %v2182
    %v2185 = vrsqrt.pop %v2183
    %v2186 = vmul.f32 %v2180, %v2184
    %v2187 = vmul.f32 %v2181, %v2185
    %v2188 = vlaneseq
    %v2189 = vshrl.u32 %v2188, 7
    %v2190 = vsub.s32 0, %v2189
    %v2191 = vrot.slane %v2154, %v2190
    %v2192 = vmul.f32 %v2186, %v2191
    %v2193 = vmul.f32 %v2187, %v2191
    %v2194 = vlaneseq
    %v2195 = vshrl.u32 %v2194, 7
    %v2196 = vsub.s32 0, %v2195
    %v2197 = vrot.slane %v2155, %v2196
    %v2198 = vadd.f32 %v2192, %v2197
    %v2199 = vadd.f32 %v2193, %v2197
    %v2200 = vld [vmem:[#allocation26] sm:$0xff]
    %v2201 = vld [vmem:[#allocation26 + $0x8] sm:$0xff]
    %v2202 = vld [vmem:[#allocation26 + $0x10] sm:$0xff]
    %v2203 = vld [vmem:[#allocation26 + $0x18] sm:$0xff]
    %v2204 = vld [vmem:[#allocation28] sm:$0x1]
    %v2206 = vlaneseq
    %v2207 = vshrl.u32 %v2206, 7
    %v2208 = vsub.s32 0, %v2207
    %v2209 = vrot.slane %v2204, %v2208
    %v2212 = vsel %vm297, %v2198, 0
    %v2215 = vsel %vm297, %v2199, 0
    %2217 = vmatprep.subr.mxu0 0.0
    %2218 = vmatpush1.msra.mxu0 %v2200
    %2219 = vmatprep.subr.mxu0 0.0
    %2220 = vmatpush1.msra.mxu0 %v2201
    %2221 = vmatprep.subr.mxu0 0.0
    %2222 = vmatpush1.msra.mxu0 %v2202
    %2223 = vmatprep.subr.mxu0 0.0
    %2224 = vmatpush1.msra.mxu0 %v2203
    %2225 = vmatprep.subr.mxu0 0.0
    %2226 = vmatpush1.msra.mxu0 0.0
    %2227 = vmatprep.subr.mxu0 0.0
    %2228 = vmatpush1.msra.mxu0 0.0
    %2229 = vmatprep.subr.mxu0 0.0
    %2230 = vmatpush1.msra.mxu0 0.0
    %2231 = vmatprep.subr.mxu0 0.0
    %2232 = vmatpush1.msra.mxu0 0.0
    %2233 = vmatprep.subr.mxu0 0.0
    %2234 = vmatpush1.msra.mxu0 0.0
    %2235 = vmatprep.subr.mxu0 0.0
    %2236 = vmatpush1.msra.mxu0 0.0
    %2237 = vmatprep.subr.mxu0 0.0
    %2238 = vmatpush1.msra.mxu0 0.0
    %2239 = vmatprep.subr.mxu0 0.0
    %2240 = vmatpush1.msra.mxu0 0.0
    %2241 = vmatprep.subr.mxu0 0.0
    %2242 = vmatpush1.msra.mxu0 0.0
    %2243 = vmatprep.subr.mxu0 0.0
    %2244 = vmatpush1.msra.mxu0 0.0
    %2245 = vmatprep.subr.mxu0 0.0
    %2246 = vmatpush1.msra.mxu0 0.0
    %2247 = vmatprep.subr.mxu0 0.0
    %2248 = vmatpush1.msra.mxu0 0.0
    %2249 = vmatprep.subr.mxu0 0.0
    %2250 = vmatpush1.msra.mxu0 0.0
    %2251 = vmatprep.subr.mxu0 0.0
    %2252 = vmatpush1.msra.mxu0 0.0
    %2253 = vmatprep.subr.mxu0 0.0
    %2254 = vmatpush1.msra.mxu0 0.0
    %2255 = vmatprep.subr.mxu0 0.0
    %2256 = vmatpush1.msra.mxu0 0.0
    %2257 = vmatprep.subr.mxu0 0.0
    %2258 = vmatpush1.msra.mxu0 0.0
    %2259 = vmatprep.subr.mxu0 0.0
    %2260 = vmatpush1.msra.mxu0 0.0
    %2261 = vmatprep.subr.mxu0 0.0
    %2262 = vmatpush1.msra.mxu0 0.0
    %2263 = vmatprep.subr.mxu0 0.0
    %2264 = vmatpush1.msra.mxu0 0.0
    %2265 = vmatprep.subr.mxu0 0.0
    %2266 = vmatpush1.msra.mxu0 0.0
    %2267 = vmatprep.subr.mxu0 0.0
    %2268 = vmatpush1.msra.mxu0 0.0
    %2269 = vmatprep.subr.mxu0 0.0
    %2270 = vmatpush1.msra.mxu0 0.0
    %2271 = vmatprep.subr.mxu0 0.0
    %2272 = vmatpush1.msra.mxu0 0.0
    %2273 = vmatprep.subr.mxu0 0.0
    %2274 = vmatpush1.msra.mxu0 0.0
    %2275 = vmatprep.subr.mxu0 0.0
    %2276 = vmatpush1.msra.mxu0 0.0
    %2277 = vmatprep.subr.mxu0 0.0
    %2278 = vmatpush1.msra.mxu0 0.0
    %2279 = vmatprep.subr.mxu0 0.0
    %2280 = vmatpush1.msra.mxu0 0.0
    %2281 = vmatprep.mubr.f32.mxu0 0.0
    %2282 = vmatmul.mubr.f32.gmra.mrb[0].mxu0 %v2212
    %v2283 = vpop.f32.mrb[0].mxu0
    %v2284 = vadd.f32 %v2209, %v2283
    %v2285 = vpop.f32.mrb[0].mxu0
    %2286 = vmatprep.mubr.f32.mxu0 0.0
    %2287 = vmatmul.mubr.f32.gmra.mrb[0].mxu0 %v2215
    %v2288 = vpop.f32.mrb[0].mxu0
    %v2289 = vadd.f32 %v2209, %v2288
    %v2290 = vpop.f32.mrb[0].mxu0
    %2291 = vdwg.mxu0
    %v2292 = vmax.f32 %v2284, 0.0
    %v2293 = vmax.f32 %v2289, 0.0
    %v2294 = vld [vmem:[%s18] sm:$0xff]
    %v2295 = vld [vmem:[%s18 + $0x8] sm:$0xff]
    %v2296 = vld [vmem:[%s18 + $0x10] sm:$0xff]
    %v2297 = vld [vmem:[%s18 + $0x18] sm:$0xff]
    %v2298 = vld [vmem:[%s19] sm:$0x1]
    %v2300 = vlaneseq
    %v2301 = vshrl.u32 %v2300, 7
    %v2302 = vsub.s32 0, %v2301
    %v2303 = vrot.slane %v2298, %v2302
    %v2306 = vsel %vm297, %v2292, 0
    %v2309 = vsel %vm297, %v2293, 0
    %2311 = vmatprep.subr.mxu0 0.0
    %2312 = vmatpush1.msra.mxu0 %v2294
    %2313 = vmatprep.subr.mxu0 0.0
    %2314 = vmatpush1.msra.mxu0 %v2295
    %2315 = vmatprep.subr.mxu0 0.0
    %2316 = vmatpush1.msra.mxu0 %v2296
    %2317 = vmatprep.subr.mxu0 0.0
    %2318 = vmatpush1.msra.mxu0 %v2297
    %2319 = vmatprep.subr.mxu0 0.0
    %2320 = vmatpush1.msra.mxu0 0.0
    %2321 = vmatprep.subr.mxu0 0.0
    %2322 = vmatpush1.msra.mxu0 0.0
    %2323 = vmatprep.subr.mxu0 0.0
    %2324 = vmatpush1.msra.mxu0 0.0
    %2325 = vmatprep.subr.mxu0 0.0
    %2326 = vmatpush1.msra.mxu0 0.0
    %2327 = vmatprep.subr.mxu0 0.0
    %2328 = vmatpush1.msra.mxu0 0.0
    %2329 = vmatprep.subr.mxu0 0.0
    %2330 = vmatpush1.msra.mxu0 0.0
    %2331 = vmatprep.subr.mxu0 0.0
    %2332 = vmatpush1.msra.mxu0 0.0
    %2333 = vmatprep.subr.mxu0 0.0
    %2334 = vmatpush1.msra.mxu0 0.0
    %2335 = vmatprep.subr.mxu0 0.0
    %2336 = vmatpush1.msra.mxu0 0.0
    %2337 = vmatprep.subr.mxu0 0.0
    %2338 = vmatpush1.msra.mxu0 0.0
    %2339 = vmatprep.subr.mxu0 0.0
    %2340 = vmatpush1.msra.mxu0 0.0
    %2341 = vmatprep.subr.mxu0 0.0
    %2342 = vmatpush1.msra.mxu0 0.0
    %2343 = vmatprep.subr.mxu0 0.0
    %2344 = vmatpush1.msra.mxu0 0.0
    %2345 = vmatprep.subr.mxu0 0.0
    %2346 = vmatpush1.msra.mxu0 0.0
    %2347 = vmatprep.subr.mxu0 0.0
    %2348 = vmatpush1.msra.mxu0 0.0
    %2349 = vmatprep.subr.mxu0 0.0
    %2350 = vmatpush1.msra.mxu0 0.0
    %2351 = vmatprep.subr.mxu0 0.0
    %2352 = vmatpush1.msra.mxu0 0.0
    %2353 = vmatprep.subr.mxu0 0.0
    %2354 = vmatpush1.msra.mxu0 0.0
    %2355 = vmatprep.subr.mxu0 0.0
    %2356 = vmatpush1.msra.mxu0 0.0
    %2357 = vmatprep.subr.mxu0 0.0
    %2358 = vmatpush1.msra.mxu0 0.0
    %2359 = vmatprep.subr.mxu0 0.0
    %2360 = vmatpush1.msra.mxu0 0.0
    %2361 = vmatprep.subr.mxu0 0.0
    %2362 = vmatpush1.msra.mxu0 0.0
    %2363 = vmatprep.subr.mxu0 0.0
    %2364 = vmatpush1.msra.mxu0 0.0
    %2365 = vmatprep.subr.mxu0 0.0
    %2366 = vmatpush1.msra.mxu0 0.0
    %2367 = vmatprep.subr.mxu0 0.0
    %2368 = vmatpush1.msra.mxu0 0.0
    %2369 = vmatprep.subr.mxu0 0.0
    %2370 = vmatpush1.msra.mxu0 0.0
    %2371 = vmatprep.subr.mxu0 0.0
    %2372 = vmatpush1.msra.mxu0 0.0
    %2373 = vmatprep.subr.mxu0 0.0
    %2374 = vmatpush1.msra.mxu0 0.0
    %2375 = vmatprep.mubr.f32.mxu0 0.0
    %2376 = vmatmul.mubr.f32.gmra.mrb[0].mxu0 %v2306
    %v2377 = vpop.f32.mrb[0].mxu0
    %v2378 = vadd.f32 %v2303, %v2377
    %v2379 = vpop.f32.mrb[0].mxu0
    %2380 = vmatprep.mubr.f32.mxu0 0.0
    %2381 = vmatmul.mubr.f32.gmra.mrb[0].mxu0 %v2309
    %v2382 = vpop.f32.mrb[0].mxu0
    %v2383 = vadd.f32 %v2303, %v2382
    %v2384 = vpop.f32.mrb[0].mxu0
    %2385 = vdwg.mxu0
    %v2386 = vadd.f32 %v2378, %v2198
    %v2387 = vadd.f32 %v2383, %v2199
    %v2388 = vsel %vm297, %v2386, 0.0
    %2389 = vadd.xlane.f32.xlu0 %v2388
    %v2390 = vpop.xlane.xlu0 %2389
    %v2391 = vsel %vm297, %v2387, 0.0
    %2392 = vadd.xlane.f32.xlu0 %v2391
    %v2393 = vpop.xlane.xlu0 %2392
    %v2394 = vmul.f32 %v2390, %v1148
    %v2395 = vmul.f32 %v2393, %v1148
    %v2396 = vmul.f32 %v2386, %v2386
    %v2397 = vmul.f32 %v2387, %v2387
    %v2398 = vsel %vm297, %v2396, 0.0
    %2399 = vadd.xlane.f32.xlu0 %v2398
    %v2400 = vpop.xlane.xlu0 %2399
    %v2401 = vsel %vm297, %v2397, 0.0
    %2402 = vadd.xlane.f32.xlu0 %v2401
    %v2403 = vpop.xlane.xlu0 %2402
    %v2404 = vmul.f32 %v2400, %v1148
    %v2405 = vmul.f32 %v2403, %v1148
    %v2406 = vmul.f32 %v2394, %v2394
    %v2407 = vmul.f32 %v2395, %v2395
    %v2408 = vsub.f32 %v2404, %v2406
    %v2409 = vsub.f32 %v2405, %v2407
    %v2410 = vsub.f32 %v2386, %v2394
    %v2411 = vsub.f32 %v2387, %v2395
    %v2412 = vadd.f32 %v2408, 1e-05
    %v2413 = vadd.f32 %v2409, 1e-05
    %v2414 = vrsqrt.pop %v2412
    %v2415 = vrsqrt.pop %v2413
    %v2416 = vmul.f32 %v2410, %v2414
    %v2417 = vmul.f32 %v2411, %v2415
    %v2418 = vmul.f32 %v2416, %v2191
    %v2419 = vmul.f32 %v2417, %v2191
    %v2420 = vadd.f32 %v2418, %v2197
    %v2421 = vadd.f32 %v2419, %v2197
    %2422 = vst.msk [vmem:[#allocation29] sm:$0xff] %vm297, %v2420
    %2423 = vst.msk [vmem:[#allocation29 + $0x8] sm:$0xff] %vm297, %v2421
    // Predicated region
    $region150: #{tpu_custom_call.1} parent=1 // pred_check
      _
    $region151: #{tpu_custom_call.1} parent=1 // pred_check_branch
      %2425 = sbr.rel (0) target = $region153
    $region152: #{tpu_custom_call.1} parent=1 // pred_region
      %s2427 = ssub.s32 256, 256
      %2428 = vsyncadd [#allocation4], %s2427
      %s2429 = sshll.u32 [#allocation29], 4
      %s2430 = int_to_ptr.vmem [resolvable:$true] %s2429
      %2435 = dma.vmem_to_hbm [thread:$0]  %s2430, 256, %s20, [#allocation4], 128, 128, 8
    $region153: #{tpu_custom_call.1} parent=1 // pred_fallthru
      _
    // Predicated region
    $region154: #{tpu_custom_call.1} parent=1 // pred_check
      _
    $region155: #{tpu_custom_call.1} parent=1 // pred_check_branch
      %2437 = sbr.rel (0) target = $region157
    $region156: #{tpu_custom_call.1} parent=1 // pred_region
      %2438 = dma.done [#allocation4], 256
    $region157: #{tpu_custom_call.1} parent=1 // pred_fallthru
      _
    %2439 = vsyncpa [#allocation3], 1
    %2440 = vsyncpa [#allocation6], 1
    %2441 = vsyncpa [#allocation9], 1
    %2442 = vsyncpa [#allocation12], 1
    %2443 = vsyncpa [#allocation15], 1
    %2444 = vsyncpa [#allocation18], 1
    %2445 = vsyncpa [#allocation21], 1
    %2446 = vsyncpa [#allocation24], 1
    %2447 = vsyncpa [#allocation27], 1
    %2448 = vsyncpa [#allocation4], 1

</llo_original>
